<compile_context>
chip_gen: v5e
topology: v5e:2x2
jax: 0.10.0
libtpu: 0.0.40
codegen_flags: <defaults>
</compile_context>

<pallas_src>
import jax
import jax.numpy as jnp
from jax.experimental import pallas as pl
from jax.experimental.pallas import tpu as pltpu

HIDDEN = 100          # original hidden size
PADH = 128            # lane-aligned hidden size used inside the kernel
GATE = 4 * PADH       # 512, lane-aligned gate dim
IN_DIM = 20
IN_PAD = 128          # input feature dim padded for an aligned prologue matmul
OUT_DIM = 8
OUT_PAD = 128         # lane-dense output width (real outputs in cols 0..7)


# ---------------------------------------------------------------------------
# Kernel: the full recurrence in one invocation
# ---------------------------------------------------------------------------
def net_kernel(x_ref, w_in_ref, b_in_ref, whh1_ref,
               wih2_ref, whh2_ref, b2_ref,
               wih3_ref, whh3_ref, b3_ref,
               wo_ref, bo_ref, out_ref, xp_all, h3_all):
    T, Bp, _ = x_ref.shape

    def sig(v):
        # sigmoid(x) == 0.5*tanh(0.5*x) + 0.5 : single EUP op (no exp+divide).
        return 0.5 * jnp.tanh(0.5 * v) + 0.5

    # Prologue: folded linear1 + lstm1 input projection (incl. all biases) for
    # every timestep as one bulk, fully tile-aligned matmul.
    x_flat = x_ref[...].reshape(T * Bp, IN_PAD)
    xp_all[...] = (jnp.dot(x_flat, w_in_ref[...],
                           preferred_element_type=jnp.float32)
                   + b_in_ref[...]).reshape(T, Bp, GATE)

    # Hoist bias broadcasts and weight loads out of the unrolled time loop
    # (JAX doesn't CSE broadcasts).
    b2 = jnp.broadcast_to(b2_ref[...], (Bp, GATE))
    b3 = jnp.broadcast_to(b3_ref[...], (Bp, GATE))
    w_hh1 = whh1_ref[...]
    w_ih2 = wih2_ref[...]
    w_hh2 = whh2_ref[...]
    w_ih3 = wih3_ref[...]
    w_hh3 = whh3_ref[...]

    zeros = jnp.zeros((Bp, PADH), jnp.float32)
    h1 = c1 = h2 = c2 = h3 = zeros

    # Fully unrolled recurrence (T is a small static shape).  Gate order is
    # PyTorch's [i, f, g, o], each block 128-lane aligned.
    for t in range(T):
        # ---- lstm1 ----
        g1 = xp_all[t] + jnp.dot(h1, w_hh1, preferred_element_type=jnp.float32)
        i1 = sig(g1[:, 0 * PADH:1 * PADH])
        f1 = sig(g1[:, 1 * PADH:2 * PADH])
        gg1 = jnp.tanh(g1[:, 2 * PADH:3 * PADH])
        o1 = sig(g1[:, 3 * PADH:4 * PADH])
        c1 = f1 * c1 + i1 * gg1
        h1 = o1 * jnp.tanh(c1)

        # ---- lstm2 (two-dot form, no concat).  Its new cell state is only
        #      used for h2 within this step and then discarded, exactly as in
        #      the original PyTorch wiring. ----
        g2 = (jnp.dot(h1, w_ih2, preferred_element_type=jnp.float32)
              + jnp.dot(h2, w_hh2, preferred_element_type=jnp.float32) + b2)
        i2 = sig(g2[:, 0 * PADH:1 * PADH])
        f2 = sig(g2[:, 1 * PADH:2 * PADH])
        gg2 = jnp.tanh(g2[:, 2 * PADH:3 * PADH])
        o2 = sig(g2[:, 3 * PADH:4 * PADH])
        c2tmp = f2 * c2 + i2 * gg2
        h2 = o2 * jnp.tanh(c2tmp)

        # ---- lstm3.  Original bug preserved: its old cell state is c_t3,
        #      which is never updated and stays 0, so forget-gate * 0 == 0 and
        #      the new cell is exactly i3*g3; that new cell overwrites c_t2
        #      (the carry used by lstm2 at the next step). ----
        g3 = (jnp.dot(h2, w_ih3, preferred_element_type=jnp.float32)
              + jnp.dot(h3, w_hh3, preferred_element_type=jnp.float32) + b3)
        i3 = sig(g3[:, 0 * PADH:1 * PADH])
        gg3 = jnp.tanh(g3[:, 2 * PADH:3 * PADH])
        o3 = sig(g3[:, 3 * PADH:4 * PADH])
        c2 = i3 * gg3                      # c_t2 <- lstm3 cell output
        h3 = o3 * jnp.tanh(c2)

        h3_all[t] = h3

    # linear2 over all timesteps: one lane-dense matmul + single unmasked store.
    h3_flat = h3_all[...].reshape(T * Bp, PADH)
    out_ref[...] = (jnp.dot(h3_flat, wo_ref[...],
                            preferred_element_type=jnp.float32) + bo_ref[...])


# ---------------------------------------------------------------------------
# Weight preparation (exact algebraic folds + zero lane padding)
# ---------------------------------------------------------------------------
def _pad_gate_cols(w):
    """(in, 4*HIDDEN) -> (in, 4*PADH): zero-pad each gate block to PADH cols."""
    parts = [jnp.pad(w[:, k * HIDDEN:(k + 1) * HIDDEN],
                     ((0, 0), (0, PADH - HIDDEN))) for k in range(4)]
    return jnp.concatenate(parts, axis=1)


def _pad_rows(w, rows):
    return jnp.pad(w, ((0, rows - w.shape[0]), (0, 0)))


def _prepare_weights(p):
    # Fold linear1 into lstm1's input path:
    #   gates1 = x @ (w1 @ wih1) + (b1 @ wih1 + bih1 + bhh1) + h1 @ whh1
    w_in = _pad_rows(_pad_gate_cols(p["w1"] @ p["wih1"]), IN_PAD)        # (128, 512)
    b_in = _pad_gate_cols(p["b1"] @ p["wih1"] + p["bih1"] + p["bhh1"])   # (1, 512)
    whh1 = _pad_rows(_pad_gate_cols(p["whh1"]), PADH)                    # (128, 512)

    wih2 = _pad_rows(_pad_gate_cols(p["wih2"]), PADH)                    # (128, 512)
    whh2 = _pad_rows(_pad_gate_cols(p["whh2"]), PADH)
    b2 = _pad_gate_cols(p["bih2"] + p["bhh2"])                           # (1, 512)
    wih3 = _pad_rows(_pad_gate_cols(p["wih3"]), PADH)
    whh3 = _pad_rows(_pad_gate_cols(p["whh3"]), PADH)
    b3 = _pad_gate_cols(p["bih3"] + p["bhh3"])                           # (1, 512)

    wo = jnp.pad(p["w2"], ((0, PADH - HIDDEN), (0, OUT_PAD - OUT_DIM)))  # (128, 128)
    bo = jnp.pad(p["b2"], ((0, 0), (0, OUT_PAD - OUT_DIM)))              # (1, 128)
    return w_in, b_in, whh1, wih2, whh2, b2, wih3, whh3, b3, wo, bo


def _full_spec(shape):
    nd = len(shape)
    return pl.BlockSpec(shape, lambda i, nd=nd: (0,) * nd)


@jax.jit
def net_forward(x, p):
    B, T, _ = x.shape
    Bp = max(8, ((B + 7) // 8) * 8)          # pad batch to f32 sublane multiple

    w_in, b_in, whh1, wih2, whh2, b2, wih3, whh3, b3, wo, bo = _prepare_weights(p)

    # Time-major, batch padded to Bp, feature dim zero-padded to IN_PAD.
    x_tm = jnp.transpose(
        jnp.pad(x, ((0, Bp - B), (0, 0), (0, IN_PAD - IN_DIM))), (1, 0, 2))

    operands = (x_tm, w_in, b_in, whh1, wih2, whh2, b2, wih3, whh3, b3, wo, bo)

    out_flat = pl.pallas_call(
        net_kernel,
        out_shape=jax.ShapeDtypeStruct((T * Bp, OUT_PAD), jnp.float32),
        grid_spec=pltpu.PrefetchScalarGridSpec(
            num_scalar_prefetch=0,
            grid=(1,),                       # single invocation; T loop is in-kernel
            in_specs=[_full_spec(a.shape) for a in operands],
            out_specs=_full_spec((T * Bp, OUT_PAD)),
            scratch_shapes=[pltpu.VMEM((T, Bp, GATE), jnp.float32),   # xp_all
                            pltpu.VMEM((T, Bp, PADH), jnp.float32)],  # h3_all
        ),
        compiler_params=pltpu.CompilerParams(
            dimension_semantics=("arbitrary",)),
    )(*operands)

    out = out_flat[:, :OUT_DIM].reshape(T, Bp, OUT_DIM)
    return jnp.transpose(out, (1, 0, 2))[:B]                             # (B, T, 8)


# ---------------------------------------------------------------------------
# Params + pure-JAX reference (mirrors the PyTorch forward, bug included)
# ---------------------------------------------------------------------------
def init_params(key):
    """Deterministic PyTorch-style U(-1/sqrt(fan_in), 1/sqrt(fan_in)) init.
    Weights stored pre-transposed (in_dim, out_dim); biases as (1, out_dim)."""
    def u(k, shape, bound):
        return jax.random.uniform(k, shape, jnp.float32, -bound, bound)

    ks = jax.random.split(key, 18)
    b_lin1 = 1.0 / (IN_DIM ** 0.5)
    b_lstm = 1.0 / (HIDDEN ** 0.5)
    b_lin2 = 1.0 / (HIDDEN ** 0.5)

    p = {
        "w1": u(ks[0], (IN_DIM, HIDDEN), b_lin1),
        "b1": u(ks[1], (1, HIDDEN), b_lin1),
        "w2": u(ks[2], (HIDDEN, OUT_DIM), b_lin2),
        "b2": u(ks[3], (1, OUT_DIM), b_lin2),
    }
    ki = 4
    for n in (1, 2, 3):
        p[f"wih{n}"] = u(ks[ki + 0], (HIDDEN, 4 * HIDDEN), b_lstm)
        p[f"whh{n}"] = u(ks[ki + 1], (HIDDEN, 4 * HIDDEN), b_lstm)
        p[f"bih{n}"] = u(ks[ki + 2], (1, 4 * HIDDEN), b_lstm)
        p[f"bhh{n}"] = u(ks[ki + 3], (1, 4 * HIDDEN), b_lstm)
        ki += 4
    return p


def net_reference(x, p):
    B, T, _ = x.shape
    z = jnp.zeros((B, HIDDEN), jnp.float32)
    h1 = c1 = h2 = c2 = h3 = c3 = z

    def cell(x_in, h, c, wih, whh, bih, bhh):
        gates = x_in @ wih + bih + h @ whh + bhh
        i, f, g, o = jnp.split(gates, 4, axis=1)
        c_new = jax.nn.sigmoid(f) * c + jax.nn.sigmoid(i) * jnp.tanh(g)
        h_new = jax.nn.sigmoid(o) * jnp.tanh(c_new)
        return h_new, c_new

    outs = []
    for t in range(T):
        hidden = x[:, t, :] @ p["w1"] + p["b1"]
        h1, c1 = cell(hidden, h1, c1, p["wih1"], p["whh1"], p["bih1"], p["bhh1"])
        h2, c2 = cell(h1, h2, c2, p["wih2"], p["whh2"], p["bih2"], p["bhh2"])
        h3, c2 = cell(h2, h3, c3, p["wih3"], p["whh3"], p["bih3"], p["bhh3"])
        outs.append(h3 @ p["w2"] + p["b2"])
    return jnp.stack(outs, axis=1)


if __name__ == "__main__":
    key = jax.random.PRNGKey(0)
    key, xk, pk = jax.random.split(key, 3)

    B, T = 2, 8
    x = jax.random.normal(xk, (B, T, IN_DIM), dtype=jnp.float32)
    params = init_params(pk)

    out = net_forward(x, params)
    out = jax.block_until_ready(out)

    ref = net_reference(x, params)
    assert out.shape == (B, T, OUT_DIM), out.shape
    assert jnp.allclose(out, ref, rtol=1e-3, atol=1e-3), \
        float(jnp.max(jnp.abs(out - ref)))

    print("KERNEL_OK")
</pallas_src>

<mosaic_0001>
module attributes {stable_mosaic.version = 11 : i64} {
  func.func @net_kernel(%arg0: i32, %arg1: memref<8x8x128xf32, #tpu.memory_space<vmem>>, %arg2: memref<128x512xf32, #tpu.memory_space<vmem>>, %arg3: memref<1x512xf32, #tpu.memory_space<vmem>>, %arg4: memref<128x512xf32, #tpu.memory_space<vmem>>, %arg5: memref<128x512xf32, #tpu.memory_space<vmem>>, %arg6: memref<128x512xf32, #tpu.memory_space<vmem>>, %arg7: memref<1x512xf32, #tpu.memory_space<vmem>>, %arg8: memref<128x512xf32, #tpu.memory_space<vmem>>, %arg9: memref<128x512xf32, #tpu.memory_space<vmem>>, %arg10: memref<1x512xf32, #tpu.memory_space<vmem>>, %arg11: memref<128x128xf32, #tpu.memory_space<vmem>>, %arg12: memref<1x128xf32, #tpu.memory_space<vmem>>, %arg13: memref<64x128xf32, #tpu.memory_space<vmem>>, %arg14: memref<8x8x512xf32, #tpu.memory_space<vmem>>, %arg15: memref<8x8x128xf32, #tpu.memory_space<vmem>>) attributes {dimension_semantics = [#tpu.dimension_semantics<arbitrary>], iteration_bounds = array<i64: 1>, scalar_prefetch = 0 : i64, scratch_operands = 2 : i64, tpu.core_type = #tpu.core_type<tc>, window_params = [{pipeline_mode = #tpu.pipeline_mode<synchronous>, transform_indices = @transform_0, window_bounds = array<i64: 8, 8, 128>}, {pipeline_mode = #tpu.pipeline_mode<synchronous>, transform_indices = @transform_1, window_bounds = array<i64: 128, 512>}, {pipeline_mode = #tpu.pipeline_mode<synchronous>, transform_indices = @transform_2, window_bounds = array<i64: 1, 512>}, {pipeline_mode = #tpu.pipeline_mode<synchronous>, transform_indices = @transform_3, window_bounds = array<i64: 128, 512>}, {pipeline_mode = #tpu.pipeline_mode<synchronous>, transform_indices = @transform_4, window_bounds = array<i64: 128, 512>}, {pipeline_mode = #tpu.pipeline_mode<synchronous>, transform_indices = @transform_5, window_bounds = array<i64: 128, 512>}, {pipeline_mode = #tpu.pipeline_mode<synchronous>, transform_indices = @transform_6, window_bounds = array<i64: 1, 512>}, {pipeline_mode = #tpu.pipeline_mode<synchronous>, transform_indices = @transform_7, window_bounds = array<i64: 128, 512>}, {pipeline_mode = #tpu.pipeline_mode<synchronous>, transform_indices = @transform_8, window_bounds = array<i64: 128, 512>}, {pipeline_mode = #tpu.pipeline_mode<synchronous>, transform_indices = @transform_9, window_bounds = array<i64: 1, 512>}, {pipeline_mode = #tpu.pipeline_mode<synchronous>, transform_indices = @transform_10, window_bounds = array<i64: 128, 128>}, {pipeline_mode = #tpu.pipeline_mode<synchronous>, transform_indices = @transform_11, window_bounds = array<i64: 1, 128>}, {pipeline_mode = #tpu.pipeline_mode<synchronous>, transform_indices = @transform_12, window_bounds = array<i64: 64, 128>}]} {
    %c0 = arith.constant 0 : index
    %c0_0 = arith.constant 0 : index
    %c0_1 = arith.constant 0 : index
    %0 = vector.load %arg1[%c0, %c0_0, %c0_1] : memref<8x8x128xf32, #tpu.memory_space<vmem>>, vector<8x8x128xf32>
    %1 = vector.shape_cast %0 : vector<8x8x128xf32> to vector<64x128xf32>
    %c0_2 = arith.constant 0 : index
    %c0_3 = arith.constant 0 : index
    %2 = vector.load %arg2[%c0_2, %c0_3] : memref<128x512xf32, #tpu.memory_space<vmem>>, vector<128x512xf32>
    %cst = arith.constant dense<0.000000e+00> : vector<64x512xf32>
    %3 = tpu.matmul %1, %2, %cst {dimension_numbers = #tpu.dot_dimension_numbers<[1], [0], [0], [1], [0, 0, 1, 1], [], []>} : vector<64x128xf32>, vector<128x512xf32>, vector<64x512xf32> -> vector<64x512xf32>
    %c0_4 = arith.constant 0 : index
    %c0_5 = arith.constant 0 : index
    %4 = vector.load %arg3[%c0_4, %c0_5] : memref<1x512xf32, #tpu.memory_space<vmem>>, vector<1x512xf32>
    %5 = vector.broadcast %4 : vector<1x512xf32> to vector<64x512xf32>
    %6 = arith.addf %3, %5 : vector<64x512xf32>
    %7 = vector.shape_cast %6 : vector<64x512xf32> to vector<8x8x512xf32>
    %c0_6 = arith.constant 0 : index
    %c0_7 = arith.constant 0 : index
    %c0_8 = arith.constant 0 : index
    %8 = vector.load %arg14[%c0_6, %c0_7, %c0_8] : memref<8x8x512xf32, #tpu.memory_space<vmem>>, vector<8x8x512xf32>
    tpu.vector_store %arg14[%c0_6, %c0_7, %c0_8], %7 {strides = array<i32>} : memref<8x8x512xf32, #tpu.memory_space<vmem>>, vector<8x8x512xf32>,
    %c0_9 = arith.constant 0 : index
    %c0_10 = arith.constant 0 : index
    %9 = vector.load %arg7[%c0_9, %c0_10] : memref<1x512xf32, #tpu.memory_space<vmem>>, vector<1x512xf32>
    %10 = vector.shape_cast %9 : vector<1x512xf32> to vector<1x512xf32>
    %11 = vector.broadcast %10 : vector<1x512xf32> to vector<8x512xf32>
    %c0_11 = arith.constant 0 : index
    %c0_12 = arith.constant 0 : index
    %12 = vector.load %arg10[%c0_11, %c0_12] : memref<1x512xf32, #tpu.memory_space<vmem>>, vector<1x512xf32>
    %13 = vector.shape_cast %12 : vector<1x512xf32> to vector<1x512xf32>
    %14 = vector.broadcast %13 : vector<1x512xf32> to vector<8x512xf32>
    %c0_13 = arith.constant 0 : index
    %c0_14 = arith.constant 0 : index
    %15 = vector.load %arg4[%c0_13, %c0_14] : memref<128x512xf32, #tpu.memory_space<vmem>>, vector<128x512xf32>
    %c0_15 = arith.constant 0 : index
    %c0_16 = arith.constant 0 : index
    %16 = vector.load %arg5[%c0_15, %c0_16] : memref<128x512xf32, #tpu.memory_space<vmem>>, vector<128x512xf32>
    %c0_17 = arith.constant 0 : index
    %c0_18 = arith.constant 0 : index
    %17 = vector.load %arg6[%c0_17, %c0_18] : memref<128x512xf32, #tpu.memory_space<vmem>>, vector<128x512xf32>
    %c0_19 = arith.constant 0 : index
    %c0_20 = arith.constant 0 : index
    %18 = vector.load %arg8[%c0_19, %c0_20] : memref<128x512xf32, #tpu.memory_space<vmem>>, vector<128x512xf32>
    %c0_21 = arith.constant 0 : index
    %c0_22 = arith.constant 0 : index
    %19 = vector.load %arg9[%c0_21, %c0_22] : memref<128x512xf32, #tpu.memory_space<vmem>>, vector<128x512xf32>
    %cst_23 = arith.constant 0.000000e+00 : f32
    %20 = vector.broadcast %cst_23 : f32 to vector<8x128xf32>
    %c0_24 = arith.constant 0 : index
    %c0_25 = arith.constant 0 : index
    %c0_26 = arith.constant 0 : index
    %21 = vector.load %arg14[%c0_24, %c0_25, %c0_26] : memref<8x8x512xf32, #tpu.memory_space<vmem>>, vector<1x8x512xf32>
    %22 = vector.shape_cast %21 : vector<1x8x512xf32> to vector<8x512xf32>
    %cst_27 = arith.constant dense<0.000000e+00> : vector<8x512xf32>
    %23 = tpu.matmul %20, %15, %cst_27 {dimension_numbers = #tpu.dot_dimension_numbers<[1], [0], [0], [1], [0, 0, 1, 1], [], []>} : vector<8x128xf32>, vector<128x512xf32>, vector<8x512xf32> -> vector<8x512xf32>
    %24 = arith.addf %22, %23 : vector<8x512xf32>
    %25 = vector.extract_strided_slice %24 {offsets = [0, 0], sizes = [8, 128], strides = [1, 1]} : vector<8x512xf32> to vector<8x128xf32>
    %cst_28 = arith.constant 5.000000e-01 : f32
    %26 = vector.broadcast %cst_28 : f32 to vector<8x128xf32>
    %27 = arith.mulf %26, %25 : vector<8x128xf32>
    %28 = math.tanh %27 : vector<8x128xf32>
    %cst_29 = arith.constant 5.000000e-01 : f32
    %29 = vector.broadcast %cst_29 : f32 to vector<8x128xf32>
    %30 = arith.mulf %29, %28 : vector<8x128xf32>
    %cst_30 = arith.constant 5.000000e-01 : f32
    %31 = vector.broadcast %cst_30 : f32 to vector<8x128xf32>
    %32 = arith.addf %30, %31 : vector<8x128xf32>
    %33 = vector.extract_strided_slice %24 {offsets = [0, 128], sizes = [8, 128], strides = [1, 1]} : vector<8x512xf32> to vector<8x128xf32>
    %cst_31 = arith.constant 5.000000e-01 : f32
    %34 = vector.broadcast %cst_31 : f32 to vector<8x128xf32>
    %35 = arith.mulf %34, %33 : vector<8x128xf32>
    %36 = math.tanh %35 : vector<8x128xf32>
    %cst_32 = arith.constant 5.000000e-01 : f32
    %37 = vector.broadcast %cst_32 : f32 to vector<8x128xf32>
    %38 = arith.mulf %37, %36 : vector<8x128xf32>
    %cst_33 = arith.constant 5.000000e-01 : f32
    %39 = vector.broadcast %cst_33 : f32 to vector<8x128xf32>
    %40 = arith.addf %38, %39 : vector<8x128xf32>
    %41 = vector.extract_strided_slice %24 {offsets = [0, 256], sizes = [8, 128], strides = [1, 1]} : vector<8x512xf32> to vector<8x128xf32>
    %42 = math.tanh %41 : vector<8x128xf32>
    %43 = vector.extract_strided_slice %24 {offsets = [0, 384], sizes = [8, 128], strides = [1, 1]} : vector<8x512xf32> to vector<8x128xf32>
    %cst_34 = arith.constant 5.000000e-01 : f32
    %44 = vector.broadcast %cst_34 : f32 to vector<8x128xf32>
    %45 = arith.mulf %44, %43 : vector<8x128xf32>
    %46 = math.tanh %45 : vector<8x128xf32>
    %cst_35 = arith.constant 5.000000e-01 : f32
    %47 = vector.broadcast %cst_35 : f32 to vector<8x128xf32>
    %48 = arith.mulf %47, %46 : vector<8x128xf32>
    %cst_36 = arith.constant 5.000000e-01 : f32
    %49 = vector.broadcast %cst_36 : f32 to vector<8x128xf32>
    %50 = arith.addf %48, %49 : vector<8x128xf32>
    %51 = arith.mulf %40, %20 : vector<8x128xf32>
    %52 = arith.mulf %32, %42 : vector<8x128xf32>
    %53 = arith.addf %51, %52 : vector<8x128xf32>
    %54 = math.tanh %53 : vector<8x128xf32>
    %55 = arith.mulf %50, %54 : vector<8x128xf32>
    %cst_37 = arith.constant dense<0.000000e+00> : vector<8x512xf32>
    %56 = tpu.matmul %55, %16, %cst_37 {dimension_numbers = #tpu.dot_dimension_numbers<[1], [0], [0], [1], [0, 0, 1, 1], [], []>} : vector<8x128xf32>, vector<128x512xf32>, vector<8x512xf32> -> vector<8x512xf32>
    %cst_38 = arith.constant dense<0.000000e+00> : vector<8x512xf32>
    %57 = tpu.matmul %20, %17, %cst_38 {dimension_numbers = #tpu.dot_dimension_numbers<[1], [0], [0], [1], [0, 0, 1, 1], [], []>} : vector<8x128xf32>, vector<128x512xf32>, vector<8x512xf32> -> vector<8x512xf32>
    %58 = arith.addf %56, %57 : vector<8x512xf32>
    %59 = arith.addf %58, %11 : vector<8x512xf32>
    %60 = vector.extract_strided_slice %59 {offsets = [0, 0], sizes = [8, 128], strides = [1, 1]} : vector<8x512xf32> to vector<8x128xf32>
    %cst_39 = arith.constant 5.000000e-01 : f32
    %61 = vector.broadcast %cst_39 : f32 to vector<8x128xf32>
    %62 = arith.mulf %61, %60 : vector<8x128xf32>
    %63 = math.tanh %62 : vector<8x128xf32>
    %cst_40 = arith.constant 5.000000e-01 : f32
    %64 = vector.broadcast %cst_40 : f32 to vector<8x128xf32>
    %65 = arith.mulf %64, %63 : vector<8x128xf32>
    %cst_41 = arith.constant 5.000000e-01 : f32
    %66 = vector.broadcast %cst_41 : f32 to vector<8x128xf32>
    %67 = arith.addf %65, %66 : vector<8x128xf32>
    %68 = vector.extract_strided_slice %59 {offsets = [0, 128], sizes = [8, 128], strides = [1, 1]} : vector<8x512xf32> to vector<8x128xf32>
    %cst_42 = arith.constant 5.000000e-01 : f32
    %69 = vector.broadcast %cst_42 : f32 to vector<8x128xf32>
    %70 = arith.mulf %69, %68 : vector<8x128xf32>
    %71 = math.tanh %70 : vector<8x128xf32>
    %cst_43 = arith.constant 5.000000e-01 : f32
    %72 = vector.broadcast %cst_43 : f32 to vector<8x128xf32>
    %73 = arith.mulf %72, %71 : vector<8x128xf32>
    %cst_44 = arith.constant 5.000000e-01 : f32
    %74 = vector.broadcast %cst_44 : f32 to vector<8x128xf32>
    %75 = arith.addf %73, %74 : vector<8x128xf32>
    %76 = vector.extract_strided_slice %59 {offsets = [0, 256], sizes = [8, 128], strides = [1, 1]} : vector<8x512xf32> to vector<8x128xf32>
    %77 = math.tanh %76 : vector<8x128xf32>
    %78 = vector.extract_strided_slice %59 {offsets = [0, 384], sizes = [8, 128], strides = [1, 1]} : vector<8x512xf32> to vector<8x128xf32>
    %cst_45 = arith.constant 5.000000e-01 : f32
    %79 = vector.broadcast %cst_45 : f32 to vector<8x128xf32>
    %80 = arith.mulf %79, %78 : vector<8x128xf32>
    %81 = math.tanh %80 : vector<8x128xf32>
    %cst_46 = arith.constant 5.000000e-01 : f32
    %82 = vector.broadcast %cst_46 : f32 to vector<8x128xf32>
    %83 = arith.mulf %82, %81 : vector<8x128xf32>
    %cst_47 = arith.constant 5.000000e-01 : f32
    %84 = vector.broadcast %cst_47 : f32 to vector<8x128xf32>
    %85 = arith.addf %83, %84 : vector<8x128xf32>
    %86 = arith.mulf %75, %20 : vector<8x128xf32>
    %87 = arith.mulf %67, %77 : vector<8x128xf32>
    %88 = arith.addf %86, %87 : vector<8x128xf32>
    %89 = math.tanh %88 : vector<8x128xf32>
    %90 = arith.mulf %85, %89 : vector<8x128xf32>
    %cst_48 = arith.constant dense<0.000000e+00> : vector<8x512xf32>
    %91 = tpu.matmul %90, %18, %cst_48 {dimension_numbers = #tpu.dot_dimension_numbers<[1], [0], [0], [1], [0, 0, 1, 1], [], []>} : vector<8x128xf32>, vector<128x512xf32>, vector<8x512xf32> -> vector<8x512xf32>
    %cst_49 = arith.constant dense<0.000000e+00> : vector<8x512xf32>
    %92 = tpu.matmul %20, %19, %cst_49 {dimension_numbers = #tpu.dot_dimension_numbers<[1], [0], [0], [1], [0, 0, 1, 1], [], []>} : vector<8x128xf32>, vector<128x512xf32>, vector<8x512xf32> -> vector<8x512xf32>
    %93 = arith.addf %91, %92 : vector<8x512xf32>
    %94 = arith.addf %93, %14 : vector<8x512xf32>
    %95 = vector.extract_strided_slice %94 {offsets = [0, 0], sizes = [8, 128], strides = [1, 1]} : vector<8x512xf32> to vector<8x128xf32>
    %cst_50 = arith.constant 5.000000e-01 : f32
    %96 = vector.broadcast %cst_50 : f32 to vector<8x128xf32>
    %97 = arith.mulf %96, %95 : vector<8x128xf32>
    %98 = math.tanh %97 : vector<8x128xf32>
    %cst_51 = arith.constant 5.000000e-01 : f32
    %99 = vector.broadcast %cst_51 : f32 to vector<8x128xf32>
    %100 = arith.mulf %99, %98 : vector<8x128xf32>
    %cst_52 = arith.constant 5.000000e-01 : f32
    %101 = vector.broadcast %cst_52 : f32 to vector<8x128xf32>
    %102 = arith.addf %100, %101 : vector<8x128xf32>
    %103 = vector.extract_strided_slice %94 {offsets = [0, 256], sizes = [8, 128], strides = [1, 1]} : vector<8x512xf32> to vector<8x128xf32>
    %104 = math.tanh %103 : vector<8x128xf32>
    %105 = vector.extract_strided_slice %94 {offsets = [0, 384], sizes = [8, 128], strides = [1, 1]} : vector<8x512xf32> to vector<8x128xf32>
    %cst_53 = arith.constant 5.000000e-01 : f32
    %106 = vector.broadcast %cst_53 : f32 to vector<8x128xf32>
    %107 = arith.mulf %106, %105 : vector<8x128xf32>
    %108 = math.tanh %107 : vector<8x128xf32>
    %cst_54 = arith.constant 5.000000e-01 : f32
    %109 = vector.broadcast %cst_54 : f32 to vector<8x128xf32>
    %110 = arith.mulf %109, %108 : vector<8x128xf32>
    %cst_55 = arith.constant 5.000000e-01 : f32
    %111 = vector.broadcast %cst_55 : f32 to vector<8x128xf32>
    %112 = arith.addf %110, %111 : vector<8x128xf32>
    %113 = arith.mulf %102, %104 : vector<8x128xf32>
    %114 = math.tanh %113 : vector<8x128xf32>
    %115 = arith.mulf %112, %114 : vector<8x128xf32>
    %c0_56 = arith.constant 0 : index
    %c0_57 = arith.constant 0 : index
    %c0_58 = arith.constant 0 : index
    %116 = vector.load %arg15[%c0_56, %c0_57, %c0_58] : memref<8x8x128xf32, #tpu.memory_space<vmem>>, vector<1x8x128xf32>
    %117 = vector.shape_cast %116 : vector<1x8x128xf32> to vector<8x128xf32>
    %118 = vector.shape_cast %115 : vector<8x128xf32> to vector<1x8x128xf32>
    tpu.vector_store %arg15[%c0_56, %c0_57, %c0_58], %118 {strides = array<i32>} : memref<8x8x128xf32, #tpu.memory_space<vmem>>, vector<1x8x128xf32>,
    %c1 = arith.constant 1 : index
    %c0_59 = arith.constant 0 : index
    %c0_60 = arith.constant 0 : index
    %119 = vector.load %arg14[%c1, %c0_59, %c0_60] : memref<8x8x512xf32, #tpu.memory_space<vmem>>, vector<1x8x512xf32>
    %120 = vector.shape_cast %119 : vector<1x8x512xf32> to vector<8x512xf32>
    %cst_61 = arith.constant dense<0.000000e+00> : vector<8x512xf32>
    %121 = tpu.matmul %55, %15, %cst_61 {dimension_numbers = #tpu.dot_dimension_numbers<[1], [0], [0], [1], [0, 0, 1, 1], [], []>} : vector<8x128xf32>, vector<128x512xf32>, vector<8x512xf32> -> vector<8x512xf32>
    %122 = arith.addf %120, %121 : vector<8x512xf32>
    %123 = vector.extract_strided_slice %122 {offsets = [0, 0], sizes = [8, 128], strides = [1, 1]} : vector<8x512xf32> to vector<8x128xf32>
    %cst_62 = arith.constant 5.000000e-01 : f32
    %124 = vector.broadcast %cst_62 : f32 to vector<8x128xf32>
    %125 = arith.mulf %124, %123 : vector<8x128xf32>
    %126 = math.tanh %125 : vector<8x128xf32>
    %cst_63 = arith.constant 5.000000e-01 : f32
    %127 = vector.broadcast %cst_63 : f32 to vector<8x128xf32>
    %128 = arith.mulf %127, %126 : vector<8x128xf32>
    %cst_64 = arith.constant 5.000000e-01 : f32
    %129 = vector.broadcast %cst_64 : f32 to vector<8x128xf32>
    %130 = arith.addf %128, %129 : vector<8x128xf32>
    %131 = vector.extract_strided_slice %122 {offsets = [0, 128], sizes = [8, 128], strides = [1, 1]} : vector<8x512xf32> to vector<8x128xf32>
    %cst_65 = arith.constant 5.000000e-01 : f32
    %132 = vector.broadcast %cst_65 : f32 to vector<8x128xf32>
    %133 = arith.mulf %132, %131 : vector<8x128xf32>
    %134 = math.tanh %133 : vector<8x128xf32>
    %cst_66 = arith.constant 5.000000e-01 : f32
    %135 = vector.broadcast %cst_66 : f32 to vector<8x128xf32>
    %136 = arith.mulf %135, %134 : vector<8x128xf32>
    %cst_67 = arith.constant 5.000000e-01 : f32
    %137 = vector.broadcast %cst_67 : f32 to vector<8x128xf32>
    %138 = arith.addf %136, %137 : vector<8x128xf32>
    %139 = vector.extract_strided_slice %122 {offsets = [0, 256], sizes = [8, 128], strides = [1, 1]} : vector<8x512xf32> to vector<8x128xf32>
    %140 = math.tanh %139 : vector<8x128xf32>
    %141 = vector.extract_strided_slice %122 {offsets = [0, 384], sizes = [8, 128], strides = [1, 1]} : vector<8x512xf32> to vector<8x128xf32>
    %cst_68 = arith.constant 5.000000e-01 : f32
    %142 = vector.broadcast %cst_68 : f32 to vector<8x128xf32>
    %143 = arith.mulf %142, %141 : vector<8x128xf32>
    %144 = math.tanh %143 : vector<8x128xf32>
    %cst_69 = arith.constant 5.000000e-01 : f32
    %145 = vector.broadcast %cst_69 : f32 to vector<8x128xf32>
    %146 = arith.mulf %145, %144 : vector<8x128xf32>
    %cst_70 = arith.constant 5.000000e-01 : f32
    %147 = vector.broadcast %cst_70 : f32 to vector<8x128xf32>
    %148 = arith.addf %146, %147 : vector<8x128xf32>
    %149 = arith.mulf %138, %53 : vector<8x128xf32>
    %150 = arith.mulf %130, %140 : vector<8x128xf32>
    %151 = arith.addf %149, %150 : vector<8x128xf32>
    %152 = math.tanh %151 : vector<8x128xf32>
    %153 = arith.mulf %148, %152 : vector<8x128xf32>
    %cst_71 = arith.constant dense<0.000000e+00> : vector<8x512xf32>
    %154 = tpu.matmul %153, %16, %cst_71 {dimension_numbers = #tpu.dot_dimension_numbers<[1], [0], [0], [1], [0, 0, 1, 1], [], []>} : vector<8x128xf32>, vector<128x512xf32>, vector<8x512xf32> -> vector<8x512xf32>
    %cst_72 = arith.constant dense<0.000000e+00> : vector<8x512xf32>
    %155 = tpu.matmul %90, %17, %cst_72 {dimension_numbers = #tpu.dot_dimension_numbers<[1], [0], [0], [1], [0, 0, 1, 1], [], []>} : vector<8x128xf32>, vector<128x512xf32>, vector<8x512xf32> -> vector<8x512xf32>
    %156 = arith.addf %154, %155 : vector<8x512xf32>
    %157 = arith.addf %156, %11 : vector<8x512xf32>
    %158 = vector.extract_strided_slice %157 {offsets = [0, 0], sizes = [8, 128], strides = [1, 1]} : vector<8x512xf32> to vector<8x128xf32>
    %cst_73 = arith.constant 5.000000e-01 : f32
    %159 = vector.broadcast %cst_73 : f32 to vector<8x128xf32>
    %160 = arith.mulf %159, %158 : vector<8x128xf32>
    %161 = math.tanh %160 : vector<8x128xf32>
    %cst_74 = arith.constant 5.000000e-01 : f32
    %162 = vector.broadcast %cst_74 : f32 to vector<8x128xf32>
    %163 = arith.mulf %162, %161 : vector<8x128xf32>
    %cst_75 = arith.constant 5.000000e-01 : f32
    %164 = vector.broadcast %cst_75 : f32 to vector<8x128xf32>
    %165 = arith.addf %163, %164 : vector<8x128xf32>
    %166 = vector.extract_strided_slice %157 {offsets = [0, 128], sizes = [8, 128], strides = [1, 1]} : vector<8x512xf32> to vector<8x128xf32>
    %cst_76 = arith.constant 5.000000e-01 : f32
    %167 = vector.broadcast %cst_76 : f32 to vector<8x128xf32>
    %168 = arith.mulf %167, %166 : vector<8x128xf32>
    %169 = math.tanh %168 : vector<8x128xf32>
    %cst_77 = arith.constant 5.000000e-01 : f32
    %170 = vector.broadcast %cst_77 : f32 to vector<8x128xf32>
    %171 = arith.mulf %170, %169 : vector<8x128xf32>
    %cst_78 = arith.constant 5.000000e-01 : f32
    %172 = vector.broadcast %cst_78 : f32 to vector<8x128xf32>
    %173 = arith.addf %171, %172 : vector<8x128xf32>
    %174 = vector.extract_strided_slice %157 {offsets = [0, 256], sizes = [8, 128], strides = [1, 1]} : vector<8x512xf32> to vector<8x128xf32>
    %175 = math.tanh %174 : vector<8x128xf32>
    %176 = vector.extract_strided_slice %157 {offsets = [0, 384], sizes = [8, 128], strides = [1, 1]} : vector<8x512xf32> to vector<8x128xf32>
    %cst_79 = arith.constant 5.000000e-01 : f32
    %177 = vector.broadcast %cst_79 : f32 to vector<8x128xf32>
    %178 = arith.mulf %177, %176 : vector<8x128xf32>
    %179 = math.tanh %178 : vector<8x128xf32>
    %cst_80 = arith.constant 5.000000e-01 : f32
    %180 = vector.broadcast %cst_80 : f32 to vector<8x128xf32>
    %181 = arith.mulf %180, %179 : vector<8x128xf32>
    %cst_81 = arith.constant 5.000000e-01 : f32
    %182 = vector.broadcast %cst_81 : f32 to vector<8x128xf32>
    %183 = arith.addf %181, %182 : vector<8x128xf32>
    %184 = arith.mulf %173, %113 : vector<8x128xf32>
    %185 = arith.mulf %165, %175 : vector<8x128xf32>
    %186 = arith.addf %184, %185 : vector<8x128xf32>
    %187 = math.tanh %186 : vector<8x128xf32>
    %188 = arith.mulf %183, %187 : vector<8x128xf32>
    %cst_82 = arith.constant dense<0.000000e+00> : vector<8x512xf32>
    %189 = tpu.matmul %188, %18, %cst_82 {dimension_numbers = #tpu.dot_dimension_numbers<[1], [0], [0], [1], [0, 0, 1, 1], [], []>} : vector<8x128xf32>, vector<128x512xf32>, vector<8x512xf32> -> vector<8x512xf32>
    %cst_83 = arith.constant dense<0.000000e+00> : vector<8x512xf32>
    %190 = tpu.matmul %115, %19, %cst_83 {dimension_numbers = #tpu.dot_dimension_numbers<[1], [0], [0], [1], [0, 0, 1, 1], [], []>} : vector<8x128xf32>, vector<128x512xf32>, vector<8x512xf32> -> vector<8x512xf32>
    %191 = arith.addf %189, %190 : vector<8x512xf32>
    %192 = arith.addf %191, %14 : vector<8x512xf32>
    %193 = vector.extract_strided_slice %192 {offsets = [0, 0], sizes = [8, 128], strides = [1, 1]} : vector<8x512xf32> to vector<8x128xf32>
    %cst_84 = arith.constant 5.000000e-01 : f32
    %194 = vector.broadcast %cst_84 : f32 to vector<8x128xf32>
    %195 = arith.mulf %194, %193 : vector<8x128xf32>
    %196 = math.tanh %195 : vector<8x128xf32>
    %cst_85 = arith.constant 5.000000e-01 : f32
    %197 = vector.broadcast %cst_85 : f32 to vector<8x128xf32>
    %198 = arith.mulf %197, %196 : vector<8x128xf32>
    %cst_86 = arith.constant 5.000000e-01 : f32
    %199 = vector.broadcast %cst_86 : f32 to vector<8x128xf32>
    %200 = arith.addf %198, %199 : vector<8x128xf32>
    %201 = vector.extract_strided_slice %192 {offsets = [0, 256], sizes = [8, 128], strides = [1, 1]} : vector<8x512xf32> to vector<8x128xf32>
    %202 = math.tanh %201 : vector<8x128xf32>
    %203 = vector.extract_strided_slice %192 {offsets = [0, 384], sizes = [8, 128], strides = [1, 1]} : vector<8x512xf32> to vector<8x128xf32>
    %cst_87 = arith.constant 5.000000e-01 : f32
    %204 = vector.broadcast %cst_87 : f32 to vector<8x128xf32>
    %205 = arith.mulf %204, %203 : vector<8x128xf32>
    %206 = math.tanh %205 : vector<8x128xf32>
    %cst_88 = arith.constant 5.000000e-01 : f32
    %207 = vector.broadcast %cst_88 : f32 to vector<8x128xf32>
    %208 = arith.mulf %207, %206 : vector<8x128xf32>
    %cst_89 = arith.constant 5.000000e-01 : f32
    %209 = vector.broadcast %cst_89 : f32 to vector<8x128xf32>
    %210 = arith.addf %208, %209 : vector<8x128xf32>
    %211 = arith.mulf %200, %202 : vector<8x128xf32>
    %212 = math.tanh %211 : vector<8x128xf32>
    %213 = arith.mulf %210, %212 : vector<8x128xf32>
    %c1_90 = arith.constant 1 : index
    %c0_91 = arith.constant 0 : index
    %c0_92 = arith.constant 0 : index
    %214 = vector.load %arg15[%c1_90, %c0_91, %c0_92] : memref<8x8x128xf32, #tpu.memory_space<vmem>>, vector<1x8x128xf32>
    %215 = vector.shape_cast %214 : vector<1x8x128xf32> to vector<8x128xf32>
    %216 = vector.shape_cast %213 : vector<8x128xf32> to vector<1x8x128xf32>
    tpu.vector_store %arg15[%c1_90, %c0_91, %c0_92], %216 {strides = array<i32>} : memref<8x8x128xf32, #tpu.memory_space<vmem>>, vector<1x8x128xf32>,
    %c2 = arith.constant 2 : index
    %c0_93 = arith.constant 0 : index
    %c0_94 = arith.constant 0 : index
    %217 = vector.load %arg14[%c2, %c0_93, %c0_94] : memref<8x8x512xf32, #tpu.memory_space<vmem>>, vector<1x8x512xf32>
    %218 = vector.shape_cast %217 : vector<1x8x512xf32> to vector<8x512xf32>
    %cst_95 = arith.constant dense<0.000000e+00> : vector<8x512xf32>
    %219 = tpu.matmul %153, %15, %cst_95 {dimension_numbers = #tpu.dot_dimension_numbers<[1], [0], [0], [1], [0, 0, 1, 1], [], []>} : vector<8x128xf32>, vector<128x512xf32>, vector<8x512xf32> -> vector<8x512xf32>
    %220 = arith.addf %218, %219 : vector<8x512xf32>
    %221 = vector.extract_strided_slice %220 {offsets = [0, 0], sizes = [8, 128], strides = [1, 1]} : vector<8x512xf32> to vector<8x128xf32>
    %cst_96 = arith.constant 5.000000e-01 : f32
    %222 = vector.broadcast %cst_96 : f32 to vector<8x128xf32>
    %223 = arith.mulf %222, %221 : vector<8x128xf32>
    %224 = math.tanh %223 : vector<8x128xf32>
    %cst_97 = arith.constant 5.000000e-01 : f32
    %225 = vector.broadcast %cst_97 : f32 to vector<8x128xf32>
    %226 = arith.mulf %225, %224 : vector<8x128xf32>
    %cst_98 = arith.constant 5.000000e-01 : f32
    %227 = vector.broadcast %cst_98 : f32 to vector<8x128xf32>
    %228 = arith.addf %226, %227 : vector<8x128xf32>
    %229 = vector.extract_strided_slice %220 {offsets = [0, 128], sizes = [8, 128], strides = [1, 1]} : vector<8x512xf32> to vector<8x128xf32>
    %cst_99 = arith.constant 5.000000e-01 : f32
    %230 = vector.broadcast %cst_99 : f32 to vector<8x128xf32>
    %231 = arith.mulf %230, %229 : vector<8x128xf32>
    %232 = math.tanh %231 : vector<8x128xf32>
    %cst_100 = arith.constant 5.000000e-01 : f32
    %233 = vector.broadcast %cst_100 : f32 to vector<8x128xf32>
    %234 = arith.mulf %233, %232 : vector<8x128xf32>
    %cst_101 = arith.constant 5.000000e-01 : f32
    %235 = vector.broadcast %cst_101 : f32 to vector<8x128xf32>
    %236 = arith.addf %234, %235 : vector<8x128xf32>
    %237 = vector.extract_strided_slice %220 {offsets = [0, 256], sizes = [8, 128], strides = [1, 1]} : vector<8x512xf32> to vector<8x128xf32>
    %238 = math.tanh %237 : vector<8x128xf32>
    %239 = vector.extract_strided_slice %220 {offsets = [0, 384], sizes = [8, 128], strides = [1, 1]} : vector<8x512xf32> to vector<8x128xf32>
    %cst_102 = arith.constant 5.000000e-01 : f32
    %240 = vector.broadcast %cst_102 : f32 to vector<8x128xf32>
    %241 = arith.mulf %240, %239 : vector<8x128xf32>
    %242 = math.tanh %241 : vector<8x128xf32>
    %cst_103 = arith.constant 5.000000e-01 : f32
    %243 = vector.broadcast %cst_103 : f32 to vector<8x128xf32>
    %244 = arith.mulf %243, %242 : vector<8x128xf32>
    %cst_104 = arith.constant 5.000000e-01 : f32
    %245 = vector.broadcast %cst_104 : f32 to vector<8x128xf32>
    %246 = arith.addf %244, %245 : vector<8x128xf32>
    %247 = arith.mulf %236, %151 : vector<8x128xf32>
    %248 = arith.mulf %228, %238 : vector<8x128xf32>
    %249 = arith.addf %247, %248 : vector<8x128xf32>
    %250 = math.tanh %249 : vector<8x128xf32>
    %251 = arith.mulf %246, %250 : vector<8x128xf32>
    %cst_105 = arith.constant dense<0.000000e+00> : vector<8x512xf32>
    %252 = tpu.matmul %251, %16, %cst_105 {dimension_numbers = #tpu.dot_dimension_numbers<[1], [0], [0], [1], [0, 0, 1, 1], [], []>} : vector<8x128xf32>, vector<128x512xf32>, vector<8x512xf32> -> vector<8x512xf32>
    %cst_106 = arith.constant dense<0.000000e+00> : vector<8x512xf32>
    %253 = tpu.matmul %188, %17, %cst_106 {dimension_numbers = #tpu.dot_dimension_numbers<[1], [0], [0], [1], [0, 0, 1, 1], [], []>} : vector<8x128xf32>, vector<128x512xf32>, vector<8x512xf32> -> vector<8x512xf32>
    %254 = arith.addf %252, %253 : vector<8x512xf32>
    %255 = arith.addf %254, %11 : vector<8x512xf32>
    %256 = vector.extract_strided_slice %255 {offsets = [0, 0], sizes = [8, 128], strides = [1, 1]} : vector<8x512xf32> to vector<8x128xf32>
    %cst_107 = arith.constant 5.000000e-01 : f32
    %257 = vector.broadcast %cst_107 : f32 to vector<8x128xf32>
    %258 = arith.mulf %257, %256 : vector<8x128xf32>
    %259 = math.tanh %258 : vector<8x128xf32>
    %cst_108 = arith.constant 5.000000e-01 : f32
    %260 = vector.broadcast %cst_108 : f32 to vector<8x128xf32>
    %261 = arith.mulf %260, %259 : vector<8x128xf32>
    %cst_109 = arith.constant 5.000000e-01 : f32
    %262 = vector.broadcast %cst_109 : f32 to vector<8x128xf32>
    %263 = arith.addf %261, %262 : vector<8x128xf32>
    %264 = vector.extract_strided_slice %255 {offsets = [0, 128], sizes = [8, 128], strides = [1, 1]} : vector<8x512xf32> to vector<8x128xf32>
    %cst_110 = arith.constant 5.000000e-01 : f32
    %265 = vector.broadcast %cst_110 : f32 to vector<8x128xf32>
    %266 = arith.mulf %265, %264 : vector<8x128xf32>
    %267 = math.tanh %266 : vector<8x128xf32>
    %cst_111 = arith.constant 5.000000e-01 : f32
    %268 = vector.broadcast %cst_111 : f32 to vector<8x128xf32>
    %269 = arith.mulf %268, %267 : vector<8x128xf32>
    %cst_112 = arith.constant 5.000000e-01 : f32
    %270 = vector.broadcast %cst_112 : f32 to vector<8x128xf32>
    %271 = arith.addf %269, %270 : vector<8x128xf32>
    %272 = vector.extract_strided_slice %255 {offsets = [0, 256], sizes = [8, 128], strides = [1, 1]} : vector<8x512xf32> to vector<8x128xf32>
    %273 = math.tanh %272 : vector<8x128xf32>
    %274 = vector.extract_strided_slice %255 {offsets = [0, 384], sizes = [8, 128], strides = [1, 1]} : vector<8x512xf32> to vector<8x128xf32>
    %cst_113 = arith.constant 5.000000e-01 : f32
    %275 = vector.broadcast %cst_113 : f32 to vector<8x128xf32>
    %276 = arith.mulf %275, %274 : vector<8x128xf32>
    %277 = math.tanh %276 : vector<8x128xf32>
    %cst_114 = arith.constant 5.000000e-01 : f32
    %278 = vector.broadcast %cst_114 : f32 to vector<8x128xf32>
    %279 = arith.mulf %278, %277 : vector<8x128xf32>
    %cst_115 = arith.constant 5.000000e-01 : f32
    %280 = vector.broadcast %cst_115 : f32 to vector<8x128xf32>
    %281 = arith.addf %279, %280 : vector<8x128xf32>
    %282 = arith.mulf %271, %211 : vector<8x128xf32>
    %283 = arith.mulf %263, %273 : vector<8x128xf32>
    %284 = arith.addf %282, %283 : vector<8x128xf32>
    %285 = math.tanh %284 : vector<8x128xf32>
    %286 = arith.mulf %281, %285 : vector<8x128xf32>
    %cst_116 = arith.constant dense<0.000000e+00> : vector<8x512xf32>
    %287 = tpu.matmul %286, %18, %cst_116 {dimension_numbers = #tpu.dot_dimension_numbers<[1], [0], [0], [1], [0, 0, 1, 1], [], []>} : vector<8x128xf32>, vector<128x512xf32>, vector<8x512xf32> -> vector<8x512xf32>
    %cst_117 = arith.constant dense<0.000000e+00> : vector<8x512xf32>
    %288 = tpu.matmul %213, %19, %cst_117 {dimension_numbers = #tpu.dot_dimension_numbers<[1], [0], [0], [1], [0, 0, 1, 1], [], []>} : vector<8x128xf32>, vector<128x512xf32>, vector<8x512xf32> -> vector<8x512xf32>
    %289 = arith.addf %287, %288 : vector<8x512xf32>
    %290 = arith.addf %289, %14 : vector<8x512xf32>
    %291 = vector.extract_strided_slice %290 {offsets = [0, 0], sizes = [8, 128], strides = [1, 1]} : vector<8x512xf32> to vector<8x128xf32>
    %cst_118 = arith.constant 5.000000e-01 : f32
    %292 = vector.broadcast %cst_118 : f32 to vector<8x128xf32>
    %293 = arith.mulf %292, %291 : vector<8x128xf32>
    %294 = math.tanh %293 : vector<8x128xf32>
    %cst_119 = arith.constant 5.000000e-01 : f32
    %295 = vector.broadcast %cst_119 : f32 to vector<8x128xf32>
    %296 = arith.mulf %295, %294 : vector<8x128xf32>
    %cst_120 = arith.constant 5.000000e-01 : f32
    %297 = vector.broadcast %cst_120 : f32 to vector<8x128xf32>
    %298 = arith.addf %296, %297 : vector<8x128xf32>
    %299 = vector.extract_strided_slice %290 {offsets = [0, 256], sizes = [8, 128], strides = [1, 1]} : vector<8x512xf32> to vector<8x128xf32>
    %300 = math.tanh %299 : vector<8x128xf32>
    %301 = vector.extract_strided_slice %290 {offsets = [0, 384], sizes = [8, 128], strides = [1, 1]} : vector<8x512xf32> to vector<8x128xf32>
    %cst_121 = arith.constant 5.000000e-01 : f32
    %302 = vector.broadcast %cst_121 : f32 to vector<8x128xf32>
    %303 = arith.mulf %302, %301 : vector<8x128xf32>
    %304 = math.tanh %303 : vector<8x128xf32>
    %cst_122 = arith.constant 5.000000e-01 : f32
    %305 = vector.broadcast %cst_122 : f32 to vector<8x128xf32>
    %306 = arith.mulf %305, %304 : vector<8x128xf32>
    %cst_123 = arith.constant 5.000000e-01 : f32
    %307 = vector.broadcast %cst_123 : f32 to vector<8x128xf32>
    %308 = arith.addf %306, %307 : vector<8x128xf32>
    %309 = arith.mulf %298, %300 : vector<8x128xf32>
    %310 = math.tanh %309 : vector<8x128xf32>
    %311 = arith.mulf %308, %310 : vector<8x128xf32>
    %c2_124 = arith.constant 2 : index
    %c0_125 = arith.constant 0 : index
    %c0_126 = arith.constant 0 : index
    %312 = vector.load %arg15[%c2_124, %c0_125, %c0_126] : memref<8x8x128xf32, #tpu.memory_space<vmem>>, vector<1x8x128xf32>
    %313 = vector.shape_cast %312 : vector<1x8x128xf32> to vector<8x128xf32>
    %314 = vector.shape_cast %311 : vector<8x128xf32> to vector<1x8x128xf32>
    tpu.vector_store %arg15[%c2_124, %c0_125, %c0_126], %314 {strides = array<i32>} : memref<8x8x128xf32, #tpu.memory_space<vmem>>, vector<1x8x128xf32>,
    %c3 = arith.constant 3 : index
    %c0_127 = arith.constant 0 : index
    %c0_128 = arith.constant 0 : index
    %315 = vector.load %arg14[%c3, %c0_127, %c0_128] : memref<8x8x512xf32, #tpu.memory_space<vmem>>, vector<1x8x512xf32>
    %316 = vector.shape_cast %315 : vector<1x8x512xf32> to vector<8x512xf32>
    %cst_129 = arith.constant dense<0.000000e+00> : vector<8x512xf32>
    %317 = tpu.matmul %251, %15, %cst_129 {dimension_numbers = #tpu.dot_dimension_numbers<[1], [0], [0], [1], [0, 0, 1, 1], [], []>} : vector<8x128xf32>, vector<128x512xf32>, vector<8x512xf32> -> vector<8x512xf32>
    %318 = arith.addf %316, %317 : vector<8x512xf32>
    %319 = vector.extract_strided_slice %318 {offsets = [0, 0], sizes = [8, 128], strides = [1, 1]} : vector<8x512xf32> to vector<8x128xf32>
    %cst_130 = arith.constant 5.000000e-01 : f32
    %320 = vector.broadcast %cst_130 : f32 to vector<8x128xf32>
    %321 = arith.mulf %320, %319 : vector<8x128xf32>
    %322 = math.tanh %321 : vector<8x128xf32>
    %cst_131 = arith.constant 5.000000e-01 : f32
    %323 = vector.broadcast %cst_131 : f32 to vector<8x128xf32>
    %324 = arith.mulf %323, %322 : vector<8x128xf32>
    %cst_132 = arith.constant 5.000000e-01 : f32
    %325 = vector.broadcast %cst_132 : f32 to vector<8x128xf32>
    %326 = arith.addf %324, %325 : vector<8x128xf32>
    %327 = vector.extract_strided_slice %318 {offsets = [0, 128], sizes = [8, 128], strides = [1, 1]} : vector<8x512xf32> to vector<8x128xf32>
    %cst_133 = arith.constant 5.000000e-01 : f32
    %328 = vector.broadcast %cst_133 : f32 to vector<8x128xf32>
    %329 = arith.mulf %328, %327 : vector<8x128xf32>
    %330 = math.tanh %329 : vector<8x128xf32>
    %cst_134 = arith.constant 5.000000e-01 : f32
    %331 = vector.broadcast %cst_134 : f32 to vector<8x128xf32>
    %332 = arith.mulf %331, %330 : vector<8x128xf32>
    %cst_135 = arith.constant 5.000000e-01 : f32
    %333 = vector.broadcast %cst_135 : f32 to vector<8x128xf32>
    %334 = arith.addf %332, %333 : vector<8x128xf32>
    %335 = vector.extract_strided_slice %318 {offsets = [0, 256], sizes = [8, 128], strides = [1, 1]} : vector<8x512xf32> to vector<8x128xf32>
    %336 = math.tanh %335 : vector<8x128xf32>
    %337 = vector.extract_strided_slice %318 {offsets = [0, 384], sizes = [8, 128], strides = [1, 1]} : vector<8x512xf32> to vector<8x128xf32>
    %cst_136 = arith.constant 5.000000e-01 : f32
    %338 = vector.broadcast %cst_136 : f32 to vector<8x128xf32>
    %339 = arith.mulf %338, %337 : vector<8x128xf32>
    %340 = math.tanh %339 : vector<8x128xf32>
    %cst_137 = arith.constant 5.000000e-01 : f32
    %341 = vector.broadcast %cst_137 : f32 to vector<8x128xf32>
    %342 = arith.mulf %341, %340 : vector<8x128xf32>
    %cst_138 = arith.constant 5.000000e-01 : f32
    %343 = vector.broadcast %cst_138 : f32 to vector<8x128xf32>
    %344 = arith.addf %342, %343 : vector<8x128xf32>
    %345 = arith.mulf %334, %249 : vector<8x128xf32>
    %346 = arith.mulf %326, %336 : vector<8x128xf32>
    %347 = arith.addf %345, %346 : vector<8x128xf32>
    %348 = math.tanh %347 : vector<8x128xf32>
    %349 = arith.mulf %344, %348 : vector<8x128xf32>
    %cst_139 = arith.constant dense<0.000000e+00> : vector<8x512xf32>
    %350 = tpu.matmul %349, %16, %cst_139 {dimension_numbers = #tpu.dot_dimension_numbers<[1], [0], [0], [1], [0, 0, 1, 1], [], []>} : vector<8x128xf32>, vector<128x512xf32>, vector<8x512xf32> -> vector<8x512xf32>
    %cst_140 = arith.constant dense<0.000000e+00> : vector<8x512xf32>
    %351 = tpu.matmul %286, %17, %cst_140 {dimension_numbers = #tpu.dot_dimension_numbers<[1], [0], [0], [1], [0, 0, 1, 1], [], []>} : vector<8x128xf32>, vector<128x512xf32>, vector<8x512xf32> -> vector<8x512xf32>
    %352 = arith.addf %350, %351 : vector<8x512xf32>
    %353 = arith.addf %352, %11 : vector<8x512xf32>
    %354 = vector.extract_strided_slice %353 {offsets = [0, 0], sizes = [8, 128], strides = [1, 1]} : vector<8x512xf32> to vector<8x128xf32>
    %cst_141 = arith.constant 5.000000e-01 : f32
    %355 = vector.broadcast %cst_141 : f32 to vector<8x128xf32>
    %356 = arith.mulf %355, %354 : vector<8x128xf32>
    %357 = math.tanh %356 : vector<8x128xf32>
    %cst_142 = arith.constant 5.000000e-01 : f32
    %358 = vector.broadcast %cst_142 : f32 to vector<8x128xf32>
    %359 = arith.mulf %358, %357 : vector<8x128xf32>
    %cst_143 = arith.constant 5.000000e-01 : f32
    %360 = vector.broadcast %cst_143 : f32 to vector<8x128xf32>
    %361 = arith.addf %359, %360 : vector<8x128xf32>
    %362 = vector.extract_strided_slice %353 {offsets = [0, 128], sizes = [8, 128], strides = [1, 1]} : vector<8x512xf32> to vector<8x128xf32>
    %cst_144 = arith.constant 5.000000e-01 : f32
    %363 = vector.broadcast %cst_144 : f32 to vector<8x128xf32>
    %364 = arith.mulf %363, %362 : vector<8x128xf32>
    %365 = math.tanh %364 : vector<8x128xf32>
    %cst_145 = arith.constant 5.000000e-01 : f32
    %366 = vector.broadcast %cst_145 : f32 to vector<8x128xf32>
    %367 = arith.mulf %366, %365 : vector<8x128xf32>
    %cst_146 = arith.constant 5.000000e-01 : f32
    %368 = vector.broadcast %cst_146 : f32 to vector<8x128xf32>
    %369 = arith.addf %367, %368 : vector<8x128xf32>
    %370 = vector.extract_strided_slice %353 {offsets = [0, 256], sizes = [8, 128], strides = [1, 1]} : vector<8x512xf32> to vector<8x128xf32>
    %371 = math.tanh %370 : vector<8x128xf32>
    %372 = vector.extract_strided_slice %353 {offsets = [0, 384], sizes = [8, 128], strides = [1, 1]} : vector<8x512xf32> to vector<8x128xf32>
    %cst_147 = arith.constant 5.000000e-01 : f32
    %373 = vector.broadcast %cst_147 : f32 to vector<8x128xf32>
    %374 = arith.mulf %373, %372 : vector<8x128xf32>
    %375 = math.tanh %374 : vector<8x128xf32>
    %cst_148 = arith.constant 5.000000e-01 : f32
    %376 = vector.broadcast %cst_148 : f32 to vector<8x128xf32>
    %377 = arith.mulf %376, %375 : vector<8x128xf32>
    %cst_149 = arith.constant 5.000000e-01 : f32
    %378 = vector.broadcast %cst_149 : f32 to vector<8x128xf32>
    %379 = arith.addf %377, %378 : vector<8x128xf32>
    %380 = arith.mulf %369, %309 : vector<8x128xf32>
    %381 = arith.mulf %361, %371 : vector<8x128xf32>
    %382 = arith.addf %380, %381 : vector<8x128xf32>
    %383 = math.tanh %382 : vector<8x128xf32>
    %384 = arith.mulf %379, %383 : vector<8x128xf32>
    %cst_150 = arith.constant dense<0.000000e+00> : vector<8x512xf32>
    %385 = tpu.matmul %384, %18, %cst_150 {dimension_numbers = #tpu.dot_dimension_numbers<[1], [0], [0], [1], [0, 0, 1, 1], [], []>} : vector<8x128xf32>, vector<128x512xf32>, vector<8x512xf32> -> vector<8x512xf32>
    %cst_151 = arith.constant dense<0.000000e+00> : vector<8x512xf32>
    %386 = tpu.matmul %311, %19, %cst_151 {dimension_numbers = #tpu.dot_dimension_numbers<[1], [0], [0], [1], [0, 0, 1, 1], [], []>} : vector<8x128xf32>, vector<128x512xf32>, vector<8x512xf32> -> vector<8x512xf32>
    %387 = arith.addf %385, %386 : vector<8x512xf32>
    %388 = arith.addf %387, %14 : vector<8x512xf32>
    %389 = vector.extract_strided_slice %388 {offsets = [0, 0], sizes = [8, 128], strides = [1, 1]} : vector<8x512xf32> to vector<8x128xf32>
    %cst_152 = arith.constant 5.000000e-01 : f32
    %390 = vector.broadcast %cst_152 : f32 to vector<8x128xf32>
    %391 = arith.mulf %390, %389 : vector<8x128xf32>
    %392 = math.tanh %391 : vector<8x128xf32>
    %cst_153 = arith.constant 5.000000e-01 : f32
    %393 = vector.broadcast %cst_153 : f32 to vector<8x128xf32>
    %394 = arith.mulf %393, %392 : vector<8x128xf32>
    %cst_154 = arith.constant 5.000000e-01 : f32
    %395 = vector.broadcast %cst_154 : f32 to vector<8x128xf32>
    %396 = arith.addf %394, %395 : vector<8x128xf32>
    %397 = vector.extract_strided_slice %388 {offsets = [0, 256], sizes = [8, 128], strides = [1, 1]} : vector<8x512xf32> to vector<8x128xf32>
    %398 = math.tanh %397 : vector<8x128xf32>
    %399 = vector.extract_strided_slice %388 {offsets = [0, 384], sizes = [8, 128], strides = [1, 1]} : vector<8x512xf32> to vector<8x128xf32>
    %cst_155 = arith.constant 5.000000e-01 : f32
    %400 = vector.broadcast %cst_155 : f32 to vector<8x128xf32>
    %401 = arith.mulf %400, %399 : vector<8x128xf32>
    %402 = math.tanh %401 : vector<8x128xf32>
    %cst_156 = arith.constant 5.000000e-01 : f32
    %403 = vector.broadcast %cst_156 : f32 to vector<8x128xf32>
    %404 = arith.mulf %403, %402 : vector<8x128xf32>
    %cst_157 = arith.constant 5.000000e-01 : f32
    %405 = vector.broadcast %cst_157 : f32 to vector<8x128xf32>
    %406 = arith.addf %404, %405 : vector<8x128xf32>
    %407 = arith.mulf %396, %398 : vector<8x128xf32>
    %408 = math.tanh %407 : vector<8x128xf32>
    %409 = arith.mulf %406, %408 : vector<8x128xf32>
    %c3_158 = arith.constant 3 : index
    %c0_159 = arith.constant 0 : index
    %c0_160 = arith.constant 0 : index
    %410 = vector.load %arg15[%c3_158, %c0_159, %c0_160] : memref<8x8x128xf32, #tpu.memory_space<vmem>>, vector<1x8x128xf32>
    %411 = vector.shape_cast %410 : vector<1x8x128xf32> to vector<8x128xf32>
    %412 = vector.shape_cast %409 : vector<8x128xf32> to vector<1x8x128xf32>
    tpu.vector_store %arg15[%c3_158, %c0_159, %c0_160], %412 {strides = array<i32>} : memref<8x8x128xf32, #tpu.memory_space<vmem>>, vector<1x8x128xf32>,
    %c4 = arith.constant 4 : index
    %c0_161 = arith.constant 0 : index
    %c0_162 = arith.constant 0 : index
    %413 = vector.load %arg14[%c4, %c0_161, %c0_162] : memref<8x8x512xf32, #tpu.memory_space<vmem>>, vector<1x8x512xf32>
    %414 = vector.shape_cast %413 : vector<1x8x512xf32> to vector<8x512xf32>
    %cst_163 = arith.constant dense<0.000000e+00> : vector<8x512xf32>
    %415 = tpu.matmul %349, %15, %cst_163 {dimension_numbers = #tpu.dot_dimension_numbers<[1], [0], [0], [1], [0, 0, 1, 1], [], []>} : vector<8x128xf32>, vector<128x512xf32>, vector<8x512xf32> -> vector<8x512xf32>
    %416 = arith.addf %414, %415 : vector<8x512xf32>
    %417 = vector.extract_strided_slice %416 {offsets = [0, 0], sizes = [8, 128], strides = [1, 1]} : vector<8x512xf32> to vector<8x128xf32>
    %cst_164 = arith.constant 5.000000e-01 : f32
    %418 = vector.broadcast %cst_164 : f32 to vector<8x128xf32>
    %419 = arith.mulf %418, %417 : vector<8x128xf32>
    %420 = math.tanh %419 : vector<8x128xf32>
    %cst_165 = arith.constant 5.000000e-01 : f32
    %421 = vector.broadcast %cst_165 : f32 to vector<8x128xf32>
    %422 = arith.mulf %421, %420 : vector<8x128xf32>
    %cst_166 = arith.constant 5.000000e-01 : f32
    %423 = vector.broadcast %cst_166 : f32 to vector<8x128xf32>
    %424 = arith.addf %422, %423 : vector<8x128xf32>
    %425 = vector.extract_strided_slice %416 {offsets = [0, 128], sizes = [8, 128], strides = [1, 1]} : vector<8x512xf32> to vector<8x128xf32>
    %cst_167 = arith.constant 5.000000e-01 : f32
    %426 = vector.broadcast %cst_167 : f32 to vector<8x128xf32>
    %427 = arith.mulf %426, %425 : vector<8x128xf32>
    %428 = math.tanh %427 : vector<8x128xf32>
    %cst_168 = arith.constant 5.000000e-01 : f32
    %429 = vector.broadcast %cst_168 : f32 to vector<8x128xf32>
    %430 = arith.mulf %429, %428 : vector<8x128xf32>
    %cst_169 = arith.constant 5.000000e-01 : f32
    %431 = vector.broadcast %cst_169 : f32 to vector<8x128xf32>
    %432 = arith.addf %430, %431 : vector<8x128xf32>
    %433 = vector.extract_strided_slice %416 {offsets = [0, 256], sizes = [8, 128], strides = [1, 1]} : vector<8x512xf32> to vector<8x128xf32>
    %434 = math.tanh %433 : vector<8x128xf32>
    %435 = vector.extract_strided_slice %416 {offsets = [0, 384], sizes = [8, 128], strides = [1, 1]} : vector<8x512xf32> to vector<8x128xf32>
    %cst_170 = arith.constant 5.000000e-01 : f32
    %436 = vector.broadcast %cst_170 : f32 to vector<8x128xf32>
    %437 = arith.mulf %436, %435 : vector<8x128xf32>
    %438 = math.tanh %437 : vector<8x128xf32>
    %cst_171 = arith.constant 5.000000e-01 : f32
    %439 = vector.broadcast %cst_171 : f32 to vector<8x128xf32>
    %440 = arith.mulf %439, %438 : vector<8x128xf32>
    %cst_172 = arith.constant 5.000000e-01 : f32
    %441 = vector.broadcast %cst_172 : f32 to vector<8x128xf32>
    %442 = arith.addf %440, %441 : vector<8x128xf32>
    %443 = arith.mulf %432, %347 : vector<8x128xf32>
    %444 = arith.mulf %424, %434 : vector<8x128xf32>
    %445 = arith.addf %443, %444 : vector<8x128xf32>
    %446 = math.tanh %445 : vector<8x128xf32>
    %447 = arith.mulf %442, %446 : vector<8x128xf32>
    %cst_173 = arith.constant dense<0.000000e+00> : vector<8x512xf32>
    %448 = tpu.matmul %447, %16, %cst_173 {dimension_numbers = #tpu.dot_dimension_numbers<[1], [0], [0], [1], [0, 0, 1, 1], [], []>} : vector<8x128xf32>, vector<128x512xf32>, vector<8x512xf32> -> vector<8x512xf32>
    %cst_174 = arith.constant dense<0.000000e+00> : vector<8x512xf32>
    %449 = tpu.matmul %384, %17, %cst_174 {dimension_numbers = #tpu.dot_dimension_numbers<[1], [0], [0], [1], [0, 0, 1, 1], [], []>} : vector<8x128xf32>, vector<128x512xf32>, vector<8x512xf32> -> vector<8x512xf32>
    %450 = arith.addf %448, %449 : vector<8x512xf32>
    %451 = arith.addf %450, %11 : vector<8x512xf32>
    %452 = vector.extract_strided_slice %451 {offsets = [0, 0], sizes = [8, 128], strides = [1, 1]} : vector<8x512xf32> to vector<8x128xf32>
    %cst_175 = arith.constant 5.000000e-01 : f32
    %453 = vector.broadcast %cst_175 : f32 to vector<8x128xf32>
    %454 = arith.mulf %453, %452 : vector<8x128xf32>
    %455 = math.tanh %454 : vector<8x128xf32>
    %cst_176 = arith.constant 5.000000e-01 : f32
    %456 = vector.broadcast %cst_176 : f32 to vector<8x128xf32>
    %457 = arith.mulf %456, %455 : vector<8x128xf32>
    %cst_177 = arith.constant 5.000000e-01 : f32
    %458 = vector.broadcast %cst_177 : f32 to vector<8x128xf32>
    %459 = arith.addf %457, %458 : vector<8x128xf32>
    %460 = vector.extract_strided_slice %451 {offsets = [0, 128], sizes = [8, 128], strides = [1, 1]} : vector<8x512xf32> to vector<8x128xf32>
    %cst_178 = arith.constant 5.000000e-01 : f32
    %461 = vector.broadcast %cst_178 : f32 to vector<8x128xf32>
    %462 = arith.mulf %461, %460 : vector<8x128xf32>
    %463 = math.tanh %462 : vector<8x128xf32>
    %cst_179 = arith.constant 5.000000e-01 : f32
    %464 = vector.broadcast %cst_179 : f32 to vector<8x128xf32>
    %465 = arith.mulf %464, %463 : vector<8x128xf32>
    %cst_180 = arith.constant 5.000000e-01 : f32
    %466 = vector.broadcast %cst_180 : f32 to vector<8x128xf32>
    %467 = arith.addf %465, %466 : vector<8x128xf32>
    %468 = vector.extract_strided_slice %451 {offsets = [0, 256], sizes = [8, 128], strides = [1, 1]} : vector<8x512xf32> to vector<8x128xf32>
    %469 = math.tanh %468 : vector<8x128xf32>
    %470 = vector.extract_strided_slice %451 {offsets = [0, 384], sizes = [8, 128], strides = [1, 1]} : vector<8x512xf32> to vector<8x128xf32>
    %cst_181 = arith.constant 5.000000e-01 : f32
    %471 = vector.broadcast %cst_181 : f32 to vector<8x128xf32>
    %472 = arith.mulf %471, %470 : vector<8x128xf32>
    %473 = math.tanh %472 : vector<8x128xf32>
    %cst_182 = arith.constant 5.000000e-01 : f32
    %474 = vector.broadcast %cst_182 : f32 to vector<8x128xf32>
    %475 = arith.mulf %474, %473 : vector<8x128xf32>
    %cst_183 = arith.constant 5.000000e-01 : f32
    %476 = vector.broadcast %cst_183 : f32 to vector<8x128xf32>
    %477 = arith.addf %475, %476 : vector<8x128xf32>
    %478 = arith.mulf %467, %407 : vector<8x128xf32>
    %479 = arith.mulf %459, %469 : vector<8x128xf32>
    %480 = arith.addf %478, %479 : vector<8x128xf32>
    %481 = math.tanh %480 : vector<8x128xf32>
    %482 = arith.mulf %477, %481 : vector<8x128xf32>
    %cst_184 = arith.constant dense<0.000000e+00> : vector<8x512xf32>
    %483 = tpu.matmul %482, %18, %cst_184 {dimension_numbers = #tpu.dot_dimension_numbers<[1], [0], [0], [1], [0, 0, 1, 1], [], []>} : vector<8x128xf32>, vector<128x512xf32>, vector<8x512xf32> -> vector<8x512xf32>
    %cst_185 = arith.constant dense<0.000000e+00> : vector<8x512xf32>
    %484 = tpu.matmul %409, %19, %cst_185 {dimension_numbers = #tpu.dot_dimension_numbers<[1], [0], [0], [1], [0, 0, 1, 1], [], []>} : vector<8x128xf32>, vector<128x512xf32>, vector<8x512xf32> -> vector<8x512xf32>
    %485 = arith.addf %483, %484 : vector<8x512xf32>
    %486 = arith.addf %485, %14 : vector<8x512xf32>
    %487 = vector.extract_strided_slice %486 {offsets = [0, 0], sizes = [8, 128], strides = [1, 1]} : vector<8x512xf32> to vector<8x128xf32>
    %cst_186 = arith.constant 5.000000e-01 : f32
    %488 = vector.broadcast %cst_186 : f32 to vector<8x128xf32>
    %489 = arith.mulf %488, %487 : vector<8x128xf32>
    %490 = math.tanh %489 : vector<8x128xf32>
    %cst_187 = arith.constant 5.000000e-01 : f32
    %491 = vector.broadcast %cst_187 : f32 to vector<8x128xf32>
    %492 = arith.mulf %491, %490 : vector<8x128xf32>
    %cst_188 = arith.constant 5.000000e-01 : f32
    %493 = vector.broadcast %cst_188 : f32 to vector<8x128xf32>
    %494 = arith.addf %492, %493 : vector<8x128xf32>
    %495 = vector.extract_strided_slice %486 {offsets = [0, 256], sizes = [8, 128], strides = [1, 1]} : vector<8x512xf32> to vector<8x128xf32>
    %496 = math.tanh %495 : vector<8x128xf32>
    %497 = vector.extract_strided_slice %486 {offsets = [0, 384], sizes = [8, 128], strides = [1, 1]} : vector<8x512xf32> to vector<8x128xf32>
    %cst_189 = arith.constant 5.000000e-01 : f32
    %498 = vector.broadcast %cst_189 : f32 to vector<8x128xf32>
    %499 = arith.mulf %498, %497 : vector<8x128xf32>
    %500 = math.tanh %499 : vector<8x128xf32>
    %cst_190 = arith.constant 5.000000e-01 : f32
    %501 = vector.broadcast %cst_190 : f32 to vector<8x128xf32>
    %502 = arith.mulf %501, %500 : vector<8x128xf32>
    %cst_191 = arith.constant 5.000000e-01 : f32
    %503 = vector.broadcast %cst_191 : f32 to vector<8x128xf32>
    %504 = arith.addf %502, %503 : vector<8x128xf32>
    %505 = arith.mulf %494, %496 : vector<8x128xf32>
    %506 = math.tanh %505 : vector<8x128xf32>
    %507 = arith.mulf %504, %506 : vector<8x128xf32>
    %c4_192 = arith.constant 4 : index
    %c0_193 = arith.constant 0 : index
    %c0_194 = arith.constant 0 : index
    %508 = vector.load %arg15[%c4_192, %c0_193, %c0_194] : memref<8x8x128xf32, #tpu.memory_space<vmem>>, vector<1x8x128xf32>
    %509 = vector.shape_cast %508 : vector<1x8x128xf32> to vector<8x128xf32>
    %510 = vector.shape_cast %507 : vector<8x128xf32> to vector<1x8x128xf32>
    tpu.vector_store %arg15[%c4_192, %c0_193, %c0_194], %510 {strides = array<i32>} : memref<8x8x128xf32, #tpu.memory_space<vmem>>, vector<1x8x128xf32>,
    %c5 = arith.constant 5 : index
    %c0_195 = arith.constant 0 : index
    %c0_196 = arith.constant 0 : index
    %511 = vector.load %arg14[%c5, %c0_195, %c0_196] : memref<8x8x512xf32, #tpu.memory_space<vmem>>, vector<1x8x512xf32>
    %512 = vector.shape_cast %511 : vector<1x8x512xf32> to vector<8x512xf32>
    %cst_197 = arith.constant dense<0.000000e+00> : vector<8x512xf32>
    %513 = tpu.matmul %447, %15, %cst_197 {dimension_numbers = #tpu.dot_dimension_numbers<[1], [0], [0], [1], [0, 0, 1, 1], [], []>} : vector<8x128xf32>, vector<128x512xf32>, vector<8x512xf32> -> vector<8x512xf32>
    %514 = arith.addf %512, %513 : vector<8x512xf32>
    %515 = vector.extract_strided_slice %514 {offsets = [0, 0], sizes = [8, 128], strides = [1, 1]} : vector<8x512xf32> to vector<8x128xf32>
    %cst_198 = arith.constant 5.000000e-01 : f32
    %516 = vector.broadcast %cst_198 : f32 to vector<8x128xf32>
    %517 = arith.mulf %516, %515 : vector<8x128xf32>
    %518 = math.tanh %517 : vector<8x128xf32>
    %cst_199 = arith.constant 5.000000e-01 : f32
    %519 = vector.broadcast %cst_199 : f32 to vector<8x128xf32>
    %520 = arith.mulf %519, %518 : vector<8x128xf32>
    %cst_200 = arith.constant 5.000000e-01 : f32
    %521 = vector.broadcast %cst_200 : f32 to vector<8x128xf32>
    %522 = arith.addf %520, %521 : vector<8x128xf32>
    %523 = vector.extract_strided_slice %514 {offsets = [0, 128], sizes = [8, 128], strides = [1, 1]} : vector<8x512xf32> to vector<8x128xf32>
    %cst_201 = arith.constant 5.000000e-01 : f32
    %524 = vector.broadcast %cst_201 : f32 to vector<8x128xf32>
    %525 = arith.mulf %524, %523 : vector<8x128xf32>
    %526 = math.tanh %525 : vector<8x128xf32>
    %cst_202 = arith.constant 5.000000e-01 : f32
    %527 = vector.broadcast %cst_202 : f32 to vector<8x128xf32>
    %528 = arith.mulf %527, %526 : vector<8x128xf32>
    %cst_203 = arith.constant 5.000000e-01 : f32
    %529 = vector.broadcast %cst_203 : f32 to vector<8x128xf32>
    %530 = arith.addf %528, %529 : vector<8x128xf32>
    %531 = vector.extract_strided_slice %514 {offsets = [0, 256], sizes = [8, 128], strides = [1, 1]} : vector<8x512xf32> to vector<8x128xf32>
    %532 = math.tanh %531 : vector<8x128xf32>
    %533 = vector.extract_strided_slice %514 {offsets = [0, 384], sizes = [8, 128], strides = [1, 1]} : vector<8x512xf32> to vector<8x128xf32>
    %cst_204 = arith.constant 5.000000e-01 : f32
    %534 = vector.broadcast %cst_204 : f32 to vector<8x128xf32>
    %535 = arith.mulf %534, %533 : vector<8x128xf32>
    %536 = math.tanh %535 : vector<8x128xf32>
    %cst_205 = arith.constant 5.000000e-01 : f32
    %537 = vector.broadcast %cst_205 : f32 to vector<8x128xf32>
    %538 = arith.mulf %537, %536 : vector<8x128xf32>
    %cst_206 = arith.constant 5.000000e-01 : f32
    %539 = vector.broadcast %cst_206 : f32 to vector<8x128xf32>
    %540 = arith.addf %538, %539 : vector<8x128xf32>
    %541 = arith.mulf %530, %445 : vector<8x128xf32>
    %542 = arith.mulf %522, %532 : vector<8x128xf32>
    %543 = arith.addf %541, %542 : vector<8x128xf32>
    %544 = math.tanh %543 : vector<8x128xf32>
    %545 = arith.mulf %540, %544 : vector<8x128xf32>
    %cst_207 = arith.constant dense<0.000000e+00> : vector<8x512xf32>
    %546 = tpu.matmul %545, %16, %cst_207 {dimension_numbers = #tpu.dot_dimension_numbers<[1], [0], [0], [1], [0, 0, 1, 1], [], []>} : vector<8x128xf32>, vector<128x512xf32>, vector<8x512xf32> -> vector<8x512xf32>
    %cst_208 = arith.constant dense<0.000000e+00> : vector<8x512xf32>
    %547 = tpu.matmul %482, %17, %cst_208 {dimension_numbers = #tpu.dot_dimension_numbers<[1], [0], [0], [1], [0, 0, 1, 1], [], []>} : vector<8x128xf32>, vector<128x512xf32>, vector<8x512xf32> -> vector<8x512xf32>
    %548 = arith.addf %546, %547 : vector<8x512xf32>
    %549 = arith.addf %548, %11 : vector<8x512xf32>
    %550 = vector.extract_strided_slice %549 {offsets = [0, 0], sizes = [8, 128], strides = [1, 1]} : vector<8x512xf32> to vector<8x128xf32>
    %cst_209 = arith.constant 5.000000e-01 : f32
    %551 = vector.broadcast %cst_209 : f32 to vector<8x128xf32>
    %552 = arith.mulf %551, %550 : vector<8x128xf32>
    %553 = math.tanh %552 : vector<8x128xf32>
    %cst_210 = arith.constant 5.000000e-01 : f32
    %554 = vector.broadcast %cst_210 : f32 to vector<8x128xf32>
    %555 = arith.mulf %554, %553 : vector<8x128xf32>
    %cst_211 = arith.constant 5.000000e-01 : f32
    %556 = vector.broadcast %cst_211 : f32 to vector<8x128xf32>
    %557 = arith.addf %555, %556 : vector<8x128xf32>
    %558 = vector.extract_strided_slice %549 {offsets = [0, 128], sizes = [8, 128], strides = [1, 1]} : vector<8x512xf32> to vector<8x128xf32>
    %cst_212 = arith.constant 5.000000e-01 : f32
    %559 = vector.broadcast %cst_212 : f32 to vector<8x128xf32>
    %560 = arith.mulf %559, %558 : vector<8x128xf32>
    %561 = math.tanh %560 : vector<8x128xf32>
    %cst_213 = arith.constant 5.000000e-01 : f32
    %562 = vector.broadcast %cst_213 : f32 to vector<8x128xf32>
    %563 = arith.mulf %562, %561 : vector<8x128xf32>
    %cst_214 = arith.constant 5.000000e-01 : f32
    %564 = vector.broadcast %cst_214 : f32 to vector<8x128xf32>
    %565 = arith.addf %563, %564 : vector<8x128xf32>
    %566 = vector.extract_strided_slice %549 {offsets = [0, 256], sizes = [8, 128], strides = [1, 1]} : vector<8x512xf32> to vector<8x128xf32>
    %567 = math.tanh %566 : vector<8x128xf32>
    %568 = vector.extract_strided_slice %549 {offsets = [0, 384], sizes = [8, 128], strides = [1, 1]} : vector<8x512xf32> to vector<8x128xf32>
    %cst_215 = arith.constant 5.000000e-01 : f32
    %569 = vector.broadcast %cst_215 : f32 to vector<8x128xf32>
    %570 = arith.mulf %569, %568 : vector<8x128xf32>
    %571 = math.tanh %570 : vector<8x128xf32>
    %cst_216 = arith.constant 5.000000e-01 : f32
    %572 = vector.broadcast %cst_216 : f32 to vector<8x128xf32>
    %573 = arith.mulf %572, %571 : vector<8x128xf32>
    %cst_217 = arith.constant 5.000000e-01 : f32
    %574 = vector.broadcast %cst_217 : f32 to vector<8x128xf32>
    %575 = arith.addf %573, %574 : vector<8x128xf32>
    %576 = arith.mulf %565, %505 : vector<8x128xf32>
    %577 = arith.mulf %557, %567 : vector<8x128xf32>
    %578 = arith.addf %576, %577 : vector<8x128xf32>
    %579 = math.tanh %578 : vector<8x128xf32>
    %580 = arith.mulf %575, %579 : vector<8x128xf32>
    %cst_218 = arith.constant dense<0.000000e+00> : vector<8x512xf32>
    %581 = tpu.matmul %580, %18, %cst_218 {dimension_numbers = #tpu.dot_dimension_numbers<[1], [0], [0], [1], [0, 0, 1, 1], [], []>} : vector<8x128xf32>, vector<128x512xf32>, vector<8x512xf32> -> vector<8x512xf32>
    %cst_219 = arith.constant dense<0.000000e+00> : vector<8x512xf32>
    %582 = tpu.matmul %507, %19, %cst_219 {dimension_numbers = #tpu.dot_dimension_numbers<[1], [0], [0], [1], [0, 0, 1, 1], [], []>} : vector<8x128xf32>, vector<128x512xf32>, vector<8x512xf32> -> vector<8x512xf32>
    %583 = arith.addf %581, %582 : vector<8x512xf32>
    %584 = arith.addf %583, %14 : vector<8x512xf32>
    %585 = vector.extract_strided_slice %584 {offsets = [0, 0], sizes = [8, 128], strides = [1, 1]} : vector<8x512xf32> to vector<8x128xf32>
    %cst_220 = arith.constant 5.000000e-01 : f32
    %586 = vector.broadcast %cst_220 : f32 to vector<8x128xf32>
    %587 = arith.mulf %586, %585 : vector<8x128xf32>
    %588 = math.tanh %587 : vector<8x128xf32>
    %cst_221 = arith.constant 5.000000e-01 : f32
    %589 = vector.broadcast %cst_221 : f32 to vector<8x128xf32>
    %590 = arith.mulf %589, %588 : vector<8x128xf32>
    %cst_222 = arith.constant 5.000000e-01 : f32
    %591 = vector.broadcast %cst_222 : f32 to vector<8x128xf32>
    %592 = arith.addf %590, %591 : vector<8x128xf32>
    %593 = vector.extract_strided_slice %584 {offsets = [0, 256], sizes = [8, 128], strides = [1, 1]} : vector<8x512xf32> to vector<8x128xf32>
    %594 = math.tanh %593 : vector<8x128xf32>
    %595 = vector.extract_strided_slice %584 {offsets = [0, 384], sizes = [8, 128], strides = [1, 1]} : vector<8x512xf32> to vector<8x128xf32>
    %cst_223 = arith.constant 5.000000e-01 : f32
    %596 = vector.broadcast %cst_223 : f32 to vector<8x128xf32>
    %597 = arith.mulf %596, %595 : vector<8x128xf32>
    %598 = math.tanh %597 : vector<8x128xf32>
    %cst_224 = arith.constant 5.000000e-01 : f32
    %599 = vector.broadcast %cst_224 : f32 to vector<8x128xf32>
    %600 = arith.mulf %599, %598 : vector<8x128xf32>
    %cst_225 = arith.constant 5.000000e-01 : f32
    %601 = vector.broadcast %cst_225 : f32 to vector<8x128xf32>
    %602 = arith.addf %600, %601 : vector<8x128xf32>
    %603 = arith.mulf %592, %594 : vector<8x128xf32>
    %604 = math.tanh %603 : vector<8x128xf32>
    %605 = arith.mulf %602, %604 : vector<8x128xf32>
    %c5_226 = arith.constant 5 : index
    %c0_227 = arith.constant 0 : index
    %c0_228 = arith.constant 0 : index
    %606 = vector.load %arg15[%c5_226, %c0_227, %c0_228] : memref<8x8x128xf32, #tpu.memory_space<vmem>>, vector<1x8x128xf32>
    %607 = vector.shape_cast %606 : vector<1x8x128xf32> to vector<8x128xf32>
    %608 = vector.shape_cast %605 : vector<8x128xf32> to vector<1x8x128xf32>
    tpu.vector_store %arg15[%c5_226, %c0_227, %c0_228], %608 {strides = array<i32>} : memref<8x8x128xf32, #tpu.memory_space<vmem>>, vector<1x8x128xf32>,
    %c6 = arith.constant 6 : index
    %c0_229 = arith.constant 0 : index
    %c0_230 = arith.constant 0 : index
    %609 = vector.load %arg14[%c6, %c0_229, %c0_230] : memref<8x8x512xf32, #tpu.memory_space<vmem>>, vector<1x8x512xf32>
    %610 = vector.shape_cast %609 : vector<1x8x512xf32> to vector<8x512xf32>
    %cst_231 = arith.constant dense<0.000000e+00> : vector<8x512xf32>
    %611 = tpu.matmul %545, %15, %cst_231 {dimension_numbers = #tpu.dot_dimension_numbers<[1], [0], [0], [1], [0, 0, 1, 1], [], []>} : vector<8x128xf32>, vector<128x512xf32>, vector<8x512xf32> -> vector<8x512xf32>
    %612 = arith.addf %610, %611 : vector<8x512xf32>
    %613 = vector.extract_strided_slice %612 {offsets = [0, 0], sizes = [8, 128], strides = [1, 1]} : vector<8x512xf32> to vector<8x128xf32>
    %cst_232 = arith.constant 5.000000e-01 : f32
    %614 = vector.broadcast %cst_232 : f32 to vector<8x128xf32>
    %615 = arith.mulf %614, %613 : vector<8x128xf32>
    %616 = math.tanh %615 : vector<8x128xf32>
    %cst_233 = arith.constant 5.000000e-01 : f32
    %617 = vector.broadcast %cst_233 : f32 to vector<8x128xf32>
    %618 = arith.mulf %617, %616 : vector<8x128xf32>
    %cst_234 = arith.constant 5.000000e-01 : f32
    %619 = vector.broadcast %cst_234 : f32 to vector<8x128xf32>
    %620 = arith.addf %618, %619 : vector<8x128xf32>
    %621 = vector.extract_strided_slice %612 {offsets = [0, 128], sizes = [8, 128], strides = [1, 1]} : vector<8x512xf32> to vector<8x128xf32>
    %cst_235 = arith.constant 5.000000e-01 : f32
    %622 = vector.broadcast %cst_235 : f32 to vector<8x128xf32>
    %623 = arith.mulf %622, %621 : vector<8x128xf32>
    %624 = math.tanh %623 : vector<8x128xf32>
    %cst_236 = arith.constant 5.000000e-01 : f32
    %625 = vector.broadcast %cst_236 : f32 to vector<8x128xf32>
    %626 = arith.mulf %625, %624 : vector<8x128xf32>
    %cst_237 = arith.constant 5.000000e-01 : f32
    %627 = vector.broadcast %cst_237 : f32 to vector<8x128xf32>
    %628 = arith.addf %626, %627 : vector<8x128xf32>
    %629 = vector.extract_strided_slice %612 {offsets = [0, 256], sizes = [8, 128], strides = [1, 1]} : vector<8x512xf32> to vector<8x128xf32>
    %630 = math.tanh %629 : vector<8x128xf32>
    %631 = vector.extract_strided_slice %612 {offsets = [0, 384], sizes = [8, 128], strides = [1, 1]} : vector<8x512xf32> to vector<8x128xf32>
    %cst_238 = arith.constant 5.000000e-01 : f32
    %632 = vector.broadcast %cst_238 : f32 to vector<8x128xf32>
    %633 = arith.mulf %632, %631 : vector<8x128xf32>
    %634 = math.tanh %633 : vector<8x128xf32>
    %cst_239 = arith.constant 5.000000e-01 : f32
    %635 = vector.broadcast %cst_239 : f32 to vector<8x128xf32>
    %636 = arith.mulf %635, %634 : vector<8x128xf32>
    %cst_240 = arith.constant 5.000000e-01 : f32
    %637 = vector.broadcast %cst_240 : f32 to vector<8x128xf32>
    %638 = arith.addf %636, %637 : vector<8x128xf32>
    %639 = arith.mulf %628, %543 : vector<8x128xf32>
    %640 = arith.mulf %620, %630 : vector<8x128xf32>
    %641 = arith.addf %639, %640 : vector<8x128xf32>
    %642 = math.tanh %641 : vector<8x128xf32>
    %643 = arith.mulf %638, %642 : vector<8x128xf32>
    %cst_241 = arith.constant dense<0.000000e+00> : vector<8x512xf32>
    %644 = tpu.matmul %643, %16, %cst_241 {dimension_numbers = #tpu.dot_dimension_numbers<[1], [0], [0], [1], [0, 0, 1, 1], [], []>} : vector<8x128xf32>, vector<128x512xf32>, vector<8x512xf32> -> vector<8x512xf32>
    %cst_242 = arith.constant dense<0.000000e+00> : vector<8x512xf32>
    %645 = tpu.matmul %580, %17, %cst_242 {dimension_numbers = #tpu.dot_dimension_numbers<[1], [0], [0], [1], [0, 0, 1, 1], [], []>} : vector<8x128xf32>, vector<128x512xf32>, vector<8x512xf32> -> vector<8x512xf32>
    %646 = arith.addf %644, %645 : vector<8x512xf32>
    %647 = arith.addf %646, %11 : vector<8x512xf32>
    %648 = vector.extract_strided_slice %647 {offsets = [0, 0], sizes = [8, 128], strides = [1, 1]} : vector<8x512xf32> to vector<8x128xf32>
    %cst_243 = arith.constant 5.000000e-01 : f32
    %649 = vector.broadcast %cst_243 : f32 to vector<8x128xf32>
    %650 = arith.mulf %649, %648 : vector<8x128xf32>
    %651 = math.tanh %650 : vector<8x128xf32>
    %cst_244 = arith.constant 5.000000e-01 : f32
    %652 = vector.broadcast %cst_244 : f32 to vector<8x128xf32>
    %653 = arith.mulf %652, %651 : vector<8x128xf32>
    %cst_245 = arith.constant 5.000000e-01 : f32
    %654 = vector.broadcast %cst_245 : f32 to vector<8x128xf32>
    %655 = arith.addf %653, %654 : vector<8x128xf32>
    %656 = vector.extract_strided_slice %647 {offsets = [0, 128], sizes = [8, 128], strides = [1, 1]} : vector<8x512xf32> to vector<8x128xf32>
    %cst_246 = arith.constant 5.000000e-01 : f32
    %657 = vector.broadcast %cst_246 : f32 to vector<8x128xf32>
    %658 = arith.mulf %657, %656 : vector<8x128xf32>
    %659 = math.tanh %658 : vector<8x128xf32>
    %cst_247 = arith.constant 5.000000e-01 : f32
    %660 = vector.broadcast %cst_247 : f32 to vector<8x128xf32>
    %661 = arith.mulf %660, %659 : vector<8x128xf32>
    %cst_248 = arith.constant 5.000000e-01 : f32
    %662 = vector.broadcast %cst_248 : f32 to vector<8x128xf32>
    %663 = arith.addf %661, %662 : vector<8x128xf32>
    %664 = vector.extract_strided_slice %647 {offsets = [0, 256], sizes = [8, 128], strides = [1, 1]} : vector<8x512xf32> to vector<8x128xf32>
    %665 = math.tanh %664 : vector<8x128xf32>
    %666 = vector.extract_strided_slice %647 {offsets = [0, 384], sizes = [8, 128], strides = [1, 1]} : vector<8x512xf32> to vector<8x128xf32>
    %cst_249 = arith.constant 5.000000e-01 : f32
    %667 = vector.broadcast %cst_249 : f32 to vector<8x128xf32>
    %668 = arith.mulf %667, %666 : vector<8x128xf32>
    %669 = math.tanh %668 : vector<8x128xf32>
    %cst_250 = arith.constant 5.000000e-01 : f32
    %670 = vector.broadcast %cst_250 : f32 to vector<8x128xf32>
    %671 = arith.mulf %670, %669 : vector<8x128xf32>
    %cst_251 = arith.constant 5.000000e-01 : f32
    %672 = vector.broadcast %cst_251 : f32 to vector<8x128xf32>
    %673 = arith.addf %671, %672 : vector<8x128xf32>
    %674 = arith.mulf %663, %603 : vector<8x128xf32>
    %675 = arith.mulf %655, %665 : vector<8x128xf32>
    %676 = arith.addf %674, %675 : vector<8x128xf32>
    %677 = math.tanh %676 : vector<8x128xf32>
    %678 = arith.mulf %673, %677 : vector<8x128xf32>
    %cst_252 = arith.constant dense<0.000000e+00> : vector<8x512xf32>
    %679 = tpu.matmul %678, %18, %cst_252 {dimension_numbers = #tpu.dot_dimension_numbers<[1], [0], [0], [1], [0, 0, 1, 1], [], []>} : vector<8x128xf32>, vector<128x512xf32>, vector<8x512xf32> -> vector<8x512xf32>
    %cst_253 = arith.constant dense<0.000000e+00> : vector<8x512xf32>
    %680 = tpu.matmul %605, %19, %cst_253 {dimension_numbers = #tpu.dot_dimension_numbers<[1], [0], [0], [1], [0, 0, 1, 1], [], []>} : vector<8x128xf32>, vector<128x512xf32>, vector<8x512xf32> -> vector<8x512xf32>
    %681 = arith.addf %679, %680 : vector<8x512xf32>
    %682 = arith.addf %681, %14 : vector<8x512xf32>
    %683 = vector.extract_strided_slice %682 {offsets = [0, 0], sizes = [8, 128], strides = [1, 1]} : vector<8x512xf32> to vector<8x128xf32>
    %cst_254 = arith.constant 5.000000e-01 : f32
    %684 = vector.broadcast %cst_254 : f32 to vector<8x128xf32>
    %685 = arith.mulf %684, %683 : vector<8x128xf32>
    %686 = math.tanh %685 : vector<8x128xf32>
    %cst_255 = arith.constant 5.000000e-01 : f32
    %687 = vector.broadcast %cst_255 : f32 to vector<8x128xf32>
    %688 = arith.mulf %687, %686 : vector<8x128xf32>
    %cst_256 = arith.constant 5.000000e-01 : f32
    %689 = vector.broadcast %cst_256 : f32 to vector<8x128xf32>
    %690 = arith.addf %688, %689 : vector<8x128xf32>
    %691 = vector.extract_strided_slice %682 {offsets = [0, 256], sizes = [8, 128], strides = [1, 1]} : vector<8x512xf32> to vector<8x128xf32>
    %692 = math.tanh %691 : vector<8x128xf32>
    %693 = vector.extract_strided_slice %682 {offsets = [0, 384], sizes = [8, 128], strides = [1, 1]} : vector<8x512xf32> to vector<8x128xf32>
    %cst_257 = arith.constant 5.000000e-01 : f32
    %694 = vector.broadcast %cst_257 : f32 to vector<8x128xf32>
    %695 = arith.mulf %694, %693 : vector<8x128xf32>
    %696 = math.tanh %695 : vector<8x128xf32>
    %cst_258 = arith.constant 5.000000e-01 : f32
    %697 = vector.broadcast %cst_258 : f32 to vector<8x128xf32>
    %698 = arith.mulf %697, %696 : vector<8x128xf32>
    %cst_259 = arith.constant 5.000000e-01 : f32
    %699 = vector.broadcast %cst_259 : f32 to vector<8x128xf32>
    %700 = arith.addf %698, %699 : vector<8x128xf32>
    %701 = arith.mulf %690, %692 : vector<8x128xf32>
    %702 = math.tanh %701 : vector<8x128xf32>
    %703 = arith.mulf %700, %702 : vector<8x128xf32>
    %c6_260 = arith.constant 6 : index
    %c0_261 = arith.constant 0 : index
    %c0_262 = arith.constant 0 : index
    %704 = vector.load %arg15[%c6_260, %c0_261, %c0_262] : memref<8x8x128xf32, #tpu.memory_space<vmem>>, vector<1x8x128xf32>
    %705 = vector.shape_cast %704 : vector<1x8x128xf32> to vector<8x128xf32>
    %706 = vector.shape_cast %703 : vector<8x128xf32> to vector<1x8x128xf32>
    tpu.vector_store %arg15[%c6_260, %c0_261, %c0_262], %706 {strides = array<i32>} : memref<8x8x128xf32, #tpu.memory_space<vmem>>, vector<1x8x128xf32>,
    %c7 = arith.constant 7 : index
    %c0_263 = arith.constant 0 : index
    %c0_264 = arith.constant 0 : index
    %707 = vector.load %arg14[%c7, %c0_263, %c0_264] : memref<8x8x512xf32, #tpu.memory_space<vmem>>, vector<1x8x512xf32>
    %708 = vector.shape_cast %707 : vector<1x8x512xf32> to vector<8x512xf32>
    %cst_265 = arith.constant dense<0.000000e+00> : vector<8x512xf32>
    %709 = tpu.matmul %643, %15, %cst_265 {dimension_numbers = #tpu.dot_dimension_numbers<[1], [0], [0], [1], [0, 0, 1, 1], [], []>} : vector<8x128xf32>, vector<128x512xf32>, vector<8x512xf32> -> vector<8x512xf32>
    %710 = arith.addf %708, %709 : vector<8x512xf32>
    %711 = vector.extract_strided_slice %710 {offsets = [0, 0], sizes = [8, 128], strides = [1, 1]} : vector<8x512xf32> to vector<8x128xf32>
    %cst_266 = arith.constant 5.000000e-01 : f32
    %712 = vector.broadcast %cst_266 : f32 to vector<8x128xf32>
    %713 = arith.mulf %712, %711 : vector<8x128xf32>
    %714 = math.tanh %713 : vector<8x128xf32>
    %cst_267 = arith.constant 5.000000e-01 : f32
    %715 = vector.broadcast %cst_267 : f32 to vector<8x128xf32>
    %716 = arith.mulf %715, %714 : vector<8x128xf32>
    %cst_268 = arith.constant 5.000000e-01 : f32
    %717 = vector.broadcast %cst_268 : f32 to vector<8x128xf32>
    %718 = arith.addf %716, %717 : vector<8x128xf32>
    %719 = vector.extract_strided_slice %710 {offsets = [0, 128], sizes = [8, 128], strides = [1, 1]} : vector<8x512xf32> to vector<8x128xf32>
    %cst_269 = arith.constant 5.000000e-01 : f32
    %720 = vector.broadcast %cst_269 : f32 to vector<8x128xf32>
    %721 = arith.mulf %720, %719 : vector<8x128xf32>
    %722 = math.tanh %721 : vector<8x128xf32>
    %cst_270 = arith.constant 5.000000e-01 : f32
    %723 = vector.broadcast %cst_270 : f32 to vector<8x128xf32>
    %724 = arith.mulf %723, %722 : vector<8x128xf32>
    %cst_271 = arith.constant 5.000000e-01 : f32
    %725 = vector.broadcast %cst_271 : f32 to vector<8x128xf32>
    %726 = arith.addf %724, %725 : vector<8x128xf32>
    %727 = vector.extract_strided_slice %710 {offsets = [0, 256], sizes = [8, 128], strides = [1, 1]} : vector<8x512xf32> to vector<8x128xf32>
    %728 = math.tanh %727 : vector<8x128xf32>
    %729 = vector.extract_strided_slice %710 {offsets = [0, 384], sizes = [8, 128], strides = [1, 1]} : vector<8x512xf32> to vector<8x128xf32>
    %cst_272 = arith.constant 5.000000e-01 : f32
    %730 = vector.broadcast %cst_272 : f32 to vector<8x128xf32>
    %731 = arith.mulf %730, %729 : vector<8x128xf32>
    %732 = math.tanh %731 : vector<8x128xf32>
    %cst_273 = arith.constant 5.000000e-01 : f32
    %733 = vector.broadcast %cst_273 : f32 to vector<8x128xf32>
    %734 = arith.mulf %733, %732 : vector<8x128xf32>
    %cst_274 = arith.constant 5.000000e-01 : f32
    %735 = vector.broadcast %cst_274 : f32 to vector<8x128xf32>
    %736 = arith.addf %734, %735 : vector<8x128xf32>
    %737 = arith.mulf %726, %641 : vector<8x128xf32>
    %738 = arith.mulf %718, %728 : vector<8x128xf32>
    %739 = arith.addf %737, %738 : vector<8x128xf32>
    %740 = math.tanh %739 : vector<8x128xf32>
    %741 = arith.mulf %736, %740 : vector<8x128xf32>
    %cst_275 = arith.constant dense<0.000000e+00> : vector<8x512xf32>
    %742 = tpu.matmul %741, %16, %cst_275 {dimension_numbers = #tpu.dot_dimension_numbers<[1], [0], [0], [1], [0, 0, 1, 1], [], []>} : vector<8x128xf32>, vector<128x512xf32>, vector<8x512xf32> -> vector<8x512xf32>
    %cst_276 = arith.constant dense<0.000000e+00> : vector<8x512xf32>
    %743 = tpu.matmul %678, %17, %cst_276 {dimension_numbers = #tpu.dot_dimension_numbers<[1], [0], [0], [1], [0, 0, 1, 1], [], []>} : vector<8x128xf32>, vector<128x512xf32>, vector<8x512xf32> -> vector<8x512xf32>
    %744 = arith.addf %742, %743 : vector<8x512xf32>
    %745 = arith.addf %744, %11 : vector<8x512xf32>
    %746 = vector.extract_strided_slice %745 {offsets = [0, 0], sizes = [8, 128], strides = [1, 1]} : vector<8x512xf32> to vector<8x128xf32>
    %cst_277 = arith.constant 5.000000e-01 : f32
    %747 = vector.broadcast %cst_277 : f32 to vector<8x128xf32>
    %748 = arith.mulf %747, %746 : vector<8x128xf32>
    %749 = math.tanh %748 : vector<8x128xf32>
    %cst_278 = arith.constant 5.000000e-01 : f32
    %750 = vector.broadcast %cst_278 : f32 to vector<8x128xf32>
    %751 = arith.mulf %750, %749 : vector<8x128xf32>
    %cst_279 = arith.constant 5.000000e-01 : f32
    %752 = vector.broadcast %cst_279 : f32 to vector<8x128xf32>
    %753 = arith.addf %751, %752 : vector<8x128xf32>
    %754 = vector.extract_strided_slice %745 {offsets = [0, 128], sizes = [8, 128], strides = [1, 1]} : vector<8x512xf32> to vector<8x128xf32>
    %cst_280 = arith.constant 5.000000e-01 : f32
    %755 = vector.broadcast %cst_280 : f32 to vector<8x128xf32>
    %756 = arith.mulf %755, %754 : vector<8x128xf32>
    %757 = math.tanh %756 : vector<8x128xf32>
    %cst_281 = arith.constant 5.000000e-01 : f32
    %758 = vector.broadcast %cst_281 : f32 to vector<8x128xf32>
    %759 = arith.mulf %758, %757 : vector<8x128xf32>
    %cst_282 = arith.constant 5.000000e-01 : f32
    %760 = vector.broadcast %cst_282 : f32 to vector<8x128xf32>
    %761 = arith.addf %759, %760 : vector<8x128xf32>
    %762 = vector.extract_strided_slice %745 {offsets = [0, 256], sizes = [8, 128], strides = [1, 1]} : vector<8x512xf32> to vector<8x128xf32>
    %763 = math.tanh %762 : vector<8x128xf32>
    %764 = vector.extract_strided_slice %745 {offsets = [0, 384], sizes = [8, 128], strides = [1, 1]} : vector<8x512xf32> to vector<8x128xf32>
    %cst_283 = arith.constant 5.000000e-01 : f32
    %765 = vector.broadcast %cst_283 : f32 to vector<8x128xf32>
    %766 = arith.mulf %765, %764 : vector<8x128xf32>
    %767 = math.tanh %766 : vector<8x128xf32>
    %cst_284 = arith.constant 5.000000e-01 : f32
    %768 = vector.broadcast %cst_284 : f32 to vector<8x128xf32>
    %769 = arith.mulf %768, %767 : vector<8x128xf32>
    %cst_285 = arith.constant 5.000000e-01 : f32
    %770 = vector.broadcast %cst_285 : f32 to vector<8x128xf32>
    %771 = arith.addf %769, %770 : vector<8x128xf32>
    %772 = arith.mulf %761, %701 : vector<8x128xf32>
    %773 = arith.mulf %753, %763 : vector<8x128xf32>
    %774 = arith.addf %772, %773 : vector<8x128xf32>
    %775 = math.tanh %774 : vector<8x128xf32>
    %776 = arith.mulf %771, %775 : vector<8x128xf32>
    %cst_286 = arith.constant dense<0.000000e+00> : vector<8x512xf32>
    %777 = tpu.matmul %776, %18, %cst_286 {dimension_numbers = #tpu.dot_dimension_numbers<[1], [0], [0], [1], [0, 0, 1, 1], [], []>} : vector<8x128xf32>, vector<128x512xf32>, vector<8x512xf32> -> vector<8x512xf32>
    %cst_287 = arith.constant dense<0.000000e+00> : vector<8x512xf32>
    %778 = tpu.matmul %703, %19, %cst_287 {dimension_numbers = #tpu.dot_dimension_numbers<[1], [0], [0], [1], [0, 0, 1, 1], [], []>} : vector<8x128xf32>, vector<128x512xf32>, vector<8x512xf32> -> vector<8x512xf32>
    %779 = arith.addf %777, %778 : vector<8x512xf32>
    %780 = arith.addf %779, %14 : vector<8x512xf32>
    %781 = vector.extract_strided_slice %780 {offsets = [0, 0], sizes = [8, 128], strides = [1, 1]} : vector<8x512xf32> to vector<8x128xf32>
    %cst_288 = arith.constant 5.000000e-01 : f32
    %782 = vector.broadcast %cst_288 : f32 to vector<8x128xf32>
    %783 = arith.mulf %782, %781 : vector<8x128xf32>
    %784 = math.tanh %783 : vector<8x128xf32>
    %cst_289 = arith.constant 5.000000e-01 : f32
    %785 = vector.broadcast %cst_289 : f32 to vector<8x128xf32>
    %786 = arith.mulf %785, %784 : vector<8x128xf32>
    %cst_290 = arith.constant 5.000000e-01 : f32
    %787 = vector.broadcast %cst_290 : f32 to vector<8x128xf32>
    %788 = arith.addf %786, %787 : vector<8x128xf32>
    %789 = vector.extract_strided_slice %780 {offsets = [0, 256], sizes = [8, 128], strides = [1, 1]} : vector<8x512xf32> to vector<8x128xf32>
    %790 = math.tanh %789 : vector<8x128xf32>
    %791 = vector.extract_strided_slice %780 {offsets = [0, 384], sizes = [8, 128], strides = [1, 1]} : vector<8x512xf32> to vector<8x128xf32>
    %cst_291 = arith.constant 5.000000e-01 : f32
    %792 = vector.broadcast %cst_291 : f32 to vector<8x128xf32>
    %793 = arith.mulf %792, %791 : vector<8x128xf32>
    %794 = math.tanh %793 : vector<8x128xf32>
    %cst_292 = arith.constant 5.000000e-01 : f32
    %795 = vector.broadcast %cst_292 : f32 to vector<8x128xf32>
    %796 = arith.mulf %795, %794 : vector<8x128xf32>
    %cst_293 = arith.constant 5.000000e-01 : f32
    %797 = vector.broadcast %cst_293 : f32 to vector<8x128xf32>
    %798 = arith.addf %796, %797 : vector<8x128xf32>
    %799 = arith.mulf %788, %790 : vector<8x128xf32>
    %800 = math.tanh %799 : vector<8x128xf32>
    %801 = arith.mulf %798, %800 : vector<8x128xf32>
    %c7_294 = arith.constant 7 : index
    %c0_295 = arith.constant 0 : index
    %c0_296 = arith.constant 0 : index
    %802 = vector.load %arg15[%c7_294, %c0_295, %c0_296] : memref<8x8x128xf32, #tpu.memory_space<vmem>>, vector<1x8x128xf32>
    %803 = vector.shape_cast %802 : vector<1x8x128xf32> to vector<8x128xf32>
    %804 = vector.shape_cast %801 : vector<8x128xf32> to vector<1x8x128xf32>
    tpu.vector_store %arg15[%c7_294, %c0_295, %c0_296], %804 {strides = array<i32>} : memref<8x8x128xf32, #tpu.memory_space<vmem>>, vector<1x8x128xf32>,
    %c0_297 = arith.constant 0 : index
    %c0_298 = arith.constant 0 : index
    %c0_299 = arith.constant 0 : index
    %805 = vector.load %arg15[%c0_297, %c0_298, %c0_299] : memref<8x8x128xf32, #tpu.memory_space<vmem>>, vector<8x8x128xf32>
    %806 = vector.shape_cast %805 : vector<8x8x128xf32> to vector<64x128xf32>
    %c0_300 = arith.constant 0 : index
    %c0_301 = arith.constant 0 : index
    %807 = vector.load %arg11[%c0_300, %c0_301] : memref<128x128xf32, #tpu.memory_space<vmem>>, vector<128x128xf32>
    %cst_302 = arith.constant dense<0.000000e+00> : vector<64x128xf32>
    %808 = tpu.matmul %806, %807, %cst_302 {dimension_numbers = #tpu.dot_dimension_numbers<[1], [0], [0], [1], [0, 0, 1, 1], [], []>} : vector<64x128xf32>, vector<128x128xf32>, vector<64x128xf32> -> vector<64x128xf32>
    %c0_303 = arith.constant 0 : index
    %c0_304 = arith.constant 0 : index
    %809 = vector.load %arg12[%c0_303, %c0_304] : memref<1x128xf32, #tpu.memory_space<vmem>>, vector<1x128xf32>
    %810 = vector.broadcast %809 : vector<1x128xf32> to vector<64x128xf32>
    %811 = arith.addf %808, %810 : vector<64x128xf32>
    %c0_305 = arith.constant 0 : index
    %c0_306 = arith.constant 0 : index
    %812 = vector.load %arg13[%c0_305, %c0_306] : memref<64x128xf32, #tpu.memory_space<vmem>>, vector<64x128xf32>
    tpu.vector_store %arg13[%c0_305, %c0_306], %811 {strides = array<i32>} : memref<64x128xf32, #tpu.memory_space<vmem>>, vector<64x128xf32>,
    return
  }
  func.func @transform_0(%arg0: i32) -> (i32, i32, i32) {
    %c0_i32 = arith.constant 0 : i32
    %c0_i32_0 = arith.constant 0 : i32
    %c0_i32_1 = arith.constant 0 : i32
    %c0_i32_2 = arith.constant 0 : i32
    return %c0_i32, %c0_i32_0, %c0_i32_1 : i32, i32, i32
  }
  func.func @transform_1(%arg0: i32) -> (i32, i32) {
    %c0_i32 = arith.constant 0 : i32
    %c0_i32_0 = arith.constant 0 : i32
    %c0_i32_1 = arith.constant 0 : i32
    return %c0_i32, %c0_i32_0 : i32, i32
  }
  func.func @transform_2(%arg0: i32) -> (i32, i32) {
    %c0_i32 = arith.constant 0 : i32
    %c0_i32_0 = arith.constant 0 : i32
    %c0_i32_1 = arith.constant 0 : i32
    return %c0_i32, %c0_i32_0 : i32, i32
  }
  func.func @transform_3(%arg0: i32) -> (i32, i32) {
    %c0_i32 = arith.constant 0 : i32
    %c0_i32_0 = arith.constant 0 : i32
    %c0_i32_1 = arith.constant 0 : i32
    return %c0_i32, %c0_i32_0 : i32, i32
  }
  func.func @transform_4(%arg0: i32) -> (i32, i32) {
    %c0_i32 = arith.constant 0 : i32
    %c0_i32_0 = arith.constant 0 : i32
    %c0_i32_1 = arith.constant 0 : i32
    return %c0_i32, %c0_i32_0 : i32, i32
  }
  func.func @transform_5(%arg0: i32) -> (i32, i32) {
    %c0_i32 = arith.constant 0 : i32
    %c0_i32_0 = arith.constant 0 : i32
    %c0_i32_1 = arith.constant 0 : i32
    return %c0_i32, %c0_i32_0 : i32, i32
  }
  func.func @transform_6(%arg0: i32) -> (i32, i32) {
    %c0_i32 = arith.constant 0 : i32
    %c0_i32_0 = arith.constant 0 : i32
    %c0_i32_1 = arith.constant 0 : i32
    return %c0_i32, %c0_i32_0 : i32, i32
  }
  func.func @transform_7(%arg0: i32) -> (i32, i32) {
    %c0_i32 = arith.constant 0 : i32
    %c0_i32_0 = arith.constant 0 : i32
    %c0_i32_1 = arith.constant 0 : i32
    return %c0_i32, %c0_i32_0 : i32, i32
  }
  func.func @transform_8(%arg0: i32) -> (i32, i32) {
    %c0_i32 = arith.constant 0 : i32
    %c0_i32_0 = arith.constant 0 : i32
    %c0_i32_1 = arith.constant 0 : i32
    return %c0_i32, %c0_i32_0 : i32, i32
  }
  func.func @transform_9(%arg0: i32) -> (i32, i32) {
    %c0_i32 = arith.constant 0 : i32
    %c0_i32_0 = arith.constant 0 : i32
    %c0_i32_1 = arith.constant 0 : i32
    return %c0_i32, %c0_i32_0 : i32, i32
  }
  func.func @transform_10(%arg0: i32) -> (i32, i32) {
    %c0_i32 = arith.constant 0 : i32
    %c0_i32_0 = arith.constant 0 : i32
    %c0_i32_1 = arith.constant 0 : i32
    return %c0_i32, %c0_i32_0 : i32, i32
  }
  func.func @transform_11(%arg0: i32) -> (i32, i32) {
    %c0_i32 = arith.constant 0 : i32
    %c0_i32_0 = arith.constant 0 : i32
    %c0_i32_1 = arith.constant 0 : i32
    return %c0_i32, %c0_i32_0 : i32, i32
  }
  func.func @transform_12(%arg0: i32) -> (i32, i32) {
    %c0_i32 = arith.constant 0 : i32
    %c0_i32_0 = arith.constant 0 : i32
    %c0_i32_1 = arith.constant 0 : i32
    return %c0_i32, %c0_i32_0 : i32, i32
  }
}

</mosaic_0001>

<llo_original>
// kernel: net_forward.1
$region0: #{net_forward.1}
  #allocation0 [shape = 'u32[]', space=smem, size = 0x4, offset = 0x4, fixed_abs, tag = 'smem constant byte address 0x4 - core index']
  #allocation1 [shape = 'u32[72,128]{1,0:T(1,128)}', space=vmem, size = 0x9000, scoped, tag = 'internal scratch']
  #allocation2 [shape = 'f32[8,8,512]{2,1,0:T(8,128)}', space=vmem, size = 0x20000, scoped, tag = 'scratch operand']
  #allocation3 [shape = 'f32[8,8,128]{2,1,0:T(8,128)}', space=vmem, size = 0x8000, scoped, tag = 'scratch operand']
  %s0 = inlined_call_operand.vmem [shape: f32[8,8,128], index: 0, kind: input, shape index: {}]
  %s1 = inlined_call_operand.vmem [shape: f32[128,512], index: 1, kind: input, shape index: {}]
  %s2 = inlined_call_operand.vmem [shape: f32[1,512], index: 2, kind: input, shape index: {}]
  %s3 = inlined_call_operand.vmem [shape: f32[128,512], index: 3, kind: input, shape index: {}]
  %s4 = inlined_call_operand.vmem [shape: f32[128,512], index: 4, kind: input, shape index: {}]
  %s5 = inlined_call_operand.vmem [shape: f32[128,512], index: 5, kind: input, shape index: {}]
  %s6 = inlined_call_operand.vmem [shape: f32[1,512], index: 6, kind: input, shape index: {}]
  %s7 = inlined_call_operand.vmem [shape: f32[128,512], index: 7, kind: input, shape index: {}]
  %s8 = inlined_call_operand.vmem [shape: f32[128,512], index: 8, kind: input, shape index: {}]
  %s9 = inlined_call_operand.vmem [shape: f32[1,512], index: 9, kind: input, shape index: {}]
  %s10 = inlined_call_operand.vmem [shape: f32[128,128], index: 10, kind: input, shape index: {}]
  %s11 = inlined_call_operand.vmem [shape: f32[1,128], index: 11, kind: input, shape index: {}]
  %s12 = inlined_call_operand.vmem [shape: f32[64,128], index: 12, kind: output, shape index: {}]
  %s13 = sld [smem:[#allocation0]]
  $region58: #{net_forward.1} parent=0
    _
  %s15 = ssub.s32 1, %s13
  %s16 = scalar_select 0, %s15, %s13
  // Predicated region
  $region2: #{net_forward.1} parent=0 // pred_check
    _
  $region3: #{net_forward.1} parent=0 // pred_check_branch
    %18 = sbr.rel (0) target = $region5
  $region4: #{net_forward.1} parent=0 // pred_region
    _
  $region5: #{net_forward.1} parent=0 // pred_fallthru
    _
  // Predicated region
  $region6: #{net_forward.1} parent=0 // pred_check
    _
  $region7: #{net_forward.1} parent=0 // pred_check_branch
    %20 = sbr.rel (0) target = $region9
  $region8: #{net_forward.1} parent=0 // pred_region
    _
  $region9: #{net_forward.1} parent=0 // pred_fallthru
    _
  // Predicated region
  $region10: #{net_forward.1} parent=0 // pred_check
    _
  $region11: #{net_forward.1} parent=0 // pred_check_branch
    %22 = sbr.rel (0) target = $region13
  $region12: #{net_forward.1} parent=0 // pred_region
    _
  $region13: #{net_forward.1} parent=0 // pred_fallthru
    _
  // Predicated region
  $region14: #{net_forward.1} parent=0 // pred_check
    _
  $region15: #{net_forward.1} parent=0 // pred_check_branch
    %24 = sbr.rel (0) target = $region17
  $region16: #{net_forward.1} parent=0 // pred_region
    _
  $region17: #{net_forward.1} parent=0 // pred_fallthru
    _
  // Predicated region
  $region18: #{net_forward.1} parent=0 // pred_check
    _
  $region19: #{net_forward.1} parent=0 // pred_check_branch
    %26 = sbr.rel (0) target = $region21
  $region20: #{net_forward.1} parent=0 // pred_region
    _
  $region21: #{net_forward.1} parent=0 // pred_fallthru
    _
  // Predicated region
  $region22: #{net_forward.1} parent=0 // pred_check
    _
  $region23: #{net_forward.1} parent=0 // pred_check_branch
    %28 = sbr.rel (0) target = $region25
  $region24: #{net_forward.1} parent=0 // pred_region
    _
  $region25: #{net_forward.1} parent=0 // pred_fallthru
    _
  // Predicated region
  $region26: #{net_forward.1} parent=0 // pred_check
    _
  $region27: #{net_forward.1} parent=0 // pred_check_branch
    %30 = sbr.rel (0) target = $region29
  $region28: #{net_forward.1} parent=0 // pred_region
    _
  $region29: #{net_forward.1} parent=0 // pred_fallthru
    _
  // Predicated region
  $region30: #{net_forward.1} parent=0 // pred_check
    _
  $region31: #{net_forward.1} parent=0 // pred_check_branch
    %32 = sbr.rel (0) target = $region33
  $region32: #{net_forward.1} parent=0 // pred_region
    _
  $region33: #{net_forward.1} parent=0 // pred_fallthru
    _
  // Predicated region
  $region34: #{net_forward.1} parent=0 // pred_check
    _
  $region35: #{net_forward.1} parent=0 // pred_check_branch
    %34 = sbr.rel (0) target = $region37
  $region36: #{net_forward.1} parent=0 // pred_region
    _
  $region37: #{net_forward.1} parent=0 // pred_fallthru
    _
  // Predicated region
  $region38: #{net_forward.1} parent=0 // pred_check
    _
  $region39: #{net_forward.1} parent=0 // pred_check_branch
    %36 = sbr.rel (0) target = $region41
  $region40: #{net_forward.1} parent=0 // pred_region
    _
  $region41: #{net_forward.1} parent=0 // pred_fallthru
    _
  // Predicated region
  $region42: #{net_forward.1} parent=0 // pred_check
    _
  $region43: #{net_forward.1} parent=0 // pred_check_branch
    %38 = sbr.rel (0) target = $region45
  $region44: #{net_forward.1} parent=0 // pred_region
    _
  $region45: #{net_forward.1} parent=0 // pred_fallthru
    _
  // Predicated region
  $region46: #{net_forward.1} parent=0 // pred_check
    _
  $region47: #{net_forward.1} parent=0 // pred_check_branch
    %40 = sbr.rel (0) target = $region49
  $region48: #{net_forward.1} parent=0 // pred_region
    _
  $region49: #{net_forward.1} parent=0 // pred_fallthru
    _
  %v41 = vld [vmem:[%s0] sm:$0xff]
  %v42 = vld [vmem:[%s0 + $0x8] sm:$0xff]
  %v43 = vld [vmem:[%s0 + $0x10] sm:$0xff]
  %v44 = vld [vmem:[%s0 + $0x18] sm:$0xff]
  %v45 = vld [vmem:[%s0 + $0x20] sm:$0xff]
  %v46 = vld [vmem:[%s0 + $0x28] sm:$0xff]
  %v47 = vld [vmem:[%s0 + $0x30] sm:$0xff]
  %v48 = vld [vmem:[%s0 + $0x38] sm:$0xff]
  %v49 = vld [vmem:[%s1] sm:$0xff]
  %v50 = vld [vmem:[%s1 + $0x8] sm:$0xff]
  %v51 = vld [vmem:[%s1 + $0x10] sm:$0xff]
  %v52 = vld [vmem:[%s1 + $0x18] sm:$0xff]
  %v53 = vld [vmem:[%s1 + $0x20] sm:$0xff]
  %v54 = vld [vmem:[%s1 + $0x28] sm:$0xff]
  %v55 = vld [vmem:[%s1 + $0x30] sm:$0xff]
  %v56 = vld [vmem:[%s1 + $0x38] sm:$0xff]
  %v57 = vld [vmem:[%s1 + $0x40] sm:$0xff]
  %v58 = vld [vmem:[%s1 + $0x48] sm:$0xff]
  %v59 = vld [vmem:[%s1 + $0x50] sm:$0xff]
  %v60 = vld [vmem:[%s1 + $0x58] sm:$0xff]
  %v61 = vld [vmem:[%s1 + $0x60] sm:$0xff]
  %v62 = vld [vmem:[%s1 + $0x68] sm:$0xff]
  %v63 = vld [vmem:[%s1 + $0x70] sm:$0xff]
  %v64 = vld [vmem:[%s1 + $0x78] sm:$0xff]
  %v65 = vld [vmem:[%s1 + $0x80] sm:$0xff]
  %v66 = vld [vmem:[%s1 + $0x88] sm:$0xff]
  %v67 = vld [vmem:[%s1 + $0x90] sm:$0xff]
  %v68 = vld [vmem:[%s1 + $0x98] sm:$0xff]
  %v69 = vld [vmem:[%s1 + $0xa0] sm:$0xff]
  %v70 = vld [vmem:[%s1 + $0xa8] sm:$0xff]
  %v71 = vld [vmem:[%s1 + $0xb0] sm:$0xff]
  %v72 = vld [vmem:[%s1 + $0xb8] sm:$0xff]
  %v73 = vld [vmem:[%s1 + $0xc0] sm:$0xff]
  %v74 = vld [vmem:[%s1 + $0xc8] sm:$0xff]
  %v75 = vld [vmem:[%s1 + $0xd0] sm:$0xff]
  %v76 = vld [vmem:[%s1 + $0xd8] sm:$0xff]
  %v77 = vld [vmem:[%s1 + $0xe0] sm:$0xff]
  %v78 = vld [vmem:[%s1 + $0xe8] sm:$0xff]
  %v79 = vld [vmem:[%s1 + $0xf0] sm:$0xff]
  %v80 = vld [vmem:[%s1 + $0xf8] sm:$0xff]
  %v81 = vld [vmem:[%s1 + $0x100] sm:$0xff]
  %v82 = vld [vmem:[%s1 + $0x108] sm:$0xff]
  %v83 = vld [vmem:[%s1 + $0x110] sm:$0xff]
  %v84 = vld [vmem:[%s1 + $0x118] sm:$0xff]
  %v85 = vld [vmem:[%s1 + $0x120] sm:$0xff]
  %v86 = vld [vmem:[%s1 + $0x128] sm:$0xff]
  %v87 = vld [vmem:[%s1 + $0x130] sm:$0xff]
  %v88 = vld [vmem:[%s1 + $0x138] sm:$0xff]
  %v89 = vld [vmem:[%s1 + $0x140] sm:$0xff]
  %v90 = vld [vmem:[%s1 + $0x148] sm:$0xff]
  %v91 = vld [vmem:[%s1 + $0x150] sm:$0xff]
  %v92 = vld [vmem:[%s1 + $0x158] sm:$0xff]
  %v93 = vld [vmem:[%s1 + $0x160] sm:$0xff]
  %v94 = vld [vmem:[%s1 + $0x168] sm:$0xff]
  %v95 = vld [vmem:[%s1 + $0x170] sm:$0xff]
  %v96 = vld [vmem:[%s1 + $0x178] sm:$0xff]
  %v97 = vld [vmem:[%s1 + $0x180] sm:$0xff]
  %v98 = vld [vmem:[%s1 + $0x188] sm:$0xff]
  %v99 = vld [vmem:[%s1 + $0x190] sm:$0xff]
  %v100 = vld [vmem:[%s1 + $0x198] sm:$0xff]
  %v101 = vld [vmem:[%s1 + $0x1a0] sm:$0xff]
  %v102 = vld [vmem:[%s1 + $0x1a8] sm:$0xff]
  %v103 = vld [vmem:[%s1 + $0x1b0] sm:$0xff]
  %v104 = vld [vmem:[%s1 + $0x1b8] sm:$0xff]
  %v105 = vld [vmem:[%s1 + $0x1c0] sm:$0xff]
  %v106 = vld [vmem:[%s1 + $0x1c8] sm:$0xff]
  %v107 = vld [vmem:[%s1 + $0x1d0] sm:$0xff]
  %v108 = vld [vmem:[%s1 + $0x1d8] sm:$0xff]
  %v109 = vld [vmem:[%s1 + $0x1e0] sm:$0xff]
  %v110 = vld [vmem:[%s1 + $0x1e8] sm:$0xff]
  %v111 = vld [vmem:[%s1 + $0x1f0] sm:$0xff]
  %v112 = vld [vmem:[%s1 + $0x1f8] sm:$0xff]
  %v113 = vld [vmem:[%s2] sm:$0xf]
  %v115 = vperm.slane %v113, 0
  %v116 = vperm.slane %v113, 1
  %v117 = vperm.slane %v113, 2
  %v118 = vperm.slane %v113, 3
  %123 = vmatpush.msra.mxu0 %v109
  %124 = vmatpush.msra.mxu0 %v105
  %125 = vmatpush.msra.mxu0 %v101
  %126 = vmatpush.msra.mxu0 %v97
  %127 = vmatpush.msra.mxu0 %v93
  %128 = vmatpush.msra.mxu0 %v89
  %129 = vmatpush.msra.mxu0 %v85
  %130 = vmatpush.msra.mxu0 %v81
  %131 = vmatpush.msra.mxu0 %v77
  %132 = vmatpush.msra.mxu0 %v73
  %133 = vmatpush.msra.mxu0 %v69
  %134 = vmatpush.msra.mxu0 %v65
  %135 = vmatpush.msra.mxu0 %v61
  %136 = vmatpush.msra.mxu0 %v57
  %137 = vmatpush.msra.mxu0 %v53
  %138 = vmatpush.msra.mxu0 %v49
  %139 = vmatmul.f32.gmra.mxu0 %v41
  %v140 = vpop.f32.mrf.mxu0
  %v141 = vadd.f32 %v115, %v140
  %142 = vmatmul.f32.gmra.mxu0 %v42
  %v143 = vpop.f32.mrf.mxu0
  %v144 = vadd.f32 %v115, %v143
  %145 = vmatmul.f32.gmra.mxu0 %v43
  %v146 = vpop.f32.mrf.mxu0
  %v147 = vadd.f32 %v115, %v146
  %148 = vmatmul.f32.gmra.mxu0 %v44
  %v149 = vpop.f32.mrf.mxu0
  %v150 = vadd.f32 %v115, %v149
  %151 = vmatmul.f32.gmra.mxu0 %v45
  %v152 = vpop.f32.mrf.mxu0
  %v153 = vadd.f32 %v115, %v152
  %154 = vmatmul.f32.gmra.mxu0 %v46
  %v155 = vpop.f32.mrf.mxu0
  %v156 = vadd.f32 %v115, %v155
  %157 = vmatmul.f32.gmra.mxu0 %v47
  %v158 = vpop.f32.mrf.mxu0
  %v159 = vadd.f32 %v115, %v158
  %160 = vmatmul.f32.gmra.mxu0 %v48
  %v161 = vpop.f32.mrf.mxu0
  %v162 = vadd.f32 %v115, %v161
  %163 = vdwg.mxu0
  %164 = vmatpush.msra.mxu0 %v110
  %165 = vmatpush.msra.mxu0 %v106
  %166 = vmatpush.msra.mxu0 %v102
  %167 = vmatpush.msra.mxu0 %v98
  %168 = vmatpush.msra.mxu0 %v94
  %169 = vmatpush.msra.mxu0 %v90
  %170 = vmatpush.msra.mxu0 %v86
  %171 = vmatpush.msra.mxu0 %v82
  %172 = vmatpush.msra.mxu0 %v78
  %173 = vmatpush.msra.mxu0 %v74
  %174 = vmatpush.msra.mxu0 %v70
  %175 = vmatpush.msra.mxu0 %v66
  %176 = vmatpush.msra.mxu0 %v62
  %177 = vmatpush.msra.mxu0 %v58
  %178 = vmatpush.msra.mxu0 %v54
  %179 = vmatpush.msra.mxu0 %v50
  %180 = vmatmul.f32.gmra.mxu0 %v41
  %v181 = vpop.f32.mrf.mxu0
  %v182 = vadd.f32 %v116, %v181
  %183 = vmatmul.f32.gmra.mxu0 %v42
  %v184 = vpop.f32.mrf.mxu0
  %v185 = vadd.f32 %v116, %v184
  %186 = vmatmul.f32.gmra.mxu0 %v43
  %v187 = vpop.f32.mrf.mxu0
  %v188 = vadd.f32 %v116, %v187
  %189 = vmatmul.f32.gmra.mxu0 %v44
  %v190 = vpop.f32.mrf.mxu0
  %v191 = vadd.f32 %v116, %v190
  %192 = vmatmul.f32.gmra.mxu0 %v45
  %v193 = vpop.f32.mrf.mxu0
  %v194 = vadd.f32 %v116, %v193
  %195 = vmatmul.f32.gmra.mxu0 %v46
  %v196 = vpop.f32.mrf.mxu0
  %v197 = vadd.f32 %v116, %v196
  %198 = vmatmul.f32.gmra.mxu0 %v47
  %v199 = vpop.f32.mrf.mxu0
  %v200 = vadd.f32 %v116, %v199
  %201 = vmatmul.f32.gmra.mxu0 %v48
  %v202 = vpop.f32.mrf.mxu0
  %v203 = vadd.f32 %v116, %v202
  %204 = vdwg.mxu0
  %205 = vmatpush.msra.mxu0 %v111
  %206 = vmatpush.msra.mxu0 %v107
  %207 = vmatpush.msra.mxu0 %v103
  %208 = vmatpush.msra.mxu0 %v99
  %209 = vmatpush.msra.mxu0 %v95
  %210 = vmatpush.msra.mxu0 %v91
  %211 = vmatpush.msra.mxu0 %v87
  %212 = vmatpush.msra.mxu0 %v83
  %213 = vmatpush.msra.mxu0 %v79
  %214 = vmatpush.msra.mxu0 %v75
  %215 = vmatpush.msra.mxu0 %v71
  %216 = vmatpush.msra.mxu0 %v67
  %217 = vmatpush.msra.mxu0 %v63
  %218 = vmatpush.msra.mxu0 %v59
  %219 = vmatpush.msra.mxu0 %v55
  %220 = vmatpush.msra.mxu0 %v51
  %221 = vmatmul.f32.gmra.mxu0 %v41
  %v222 = vpop.f32.mrf.mxu0
  %v223 = vadd.f32 %v117, %v222
  %224 = vmatmul.f32.gmra.mxu0 %v42
  %v225 = vpop.f32.mrf.mxu0
  %v226 = vadd.f32 %v117, %v225
  %227 = vmatmul.f32.gmra.mxu0 %v43
  %v228 = vpop.f32.mrf.mxu0
  %v229 = vadd.f32 %v117, %v228
  %230 = vmatmul.f32.gmra.mxu0 %v44
  %v231 = vpop.f32.mrf.mxu0
  %v232 = vadd.f32 %v117, %v231
  %233 = vmatmul.f32.gmra.mxu0 %v45
  %v234 = vpop.f32.mrf.mxu0
  %v235 = vadd.f32 %v117, %v234
  %236 = vmatmul.f32.gmra.mxu0 %v46
  %v237 = vpop.f32.mrf.mxu0
  %v238 = vadd.f32 %v117, %v237
  %239 = vmatmul.f32.gmra.mxu0 %v47
  %v240 = vpop.f32.mrf.mxu0
  %v241 = vadd.f32 %v117, %v240
  %242 = vmatmul.f32.gmra.mxu0 %v48
  %v243 = vpop.f32.mrf.mxu0
  %v244 = vadd.f32 %v117, %v243
  %245 = vdwg.mxu0
  %246 = vmatpush.msra.mxu0 %v112
  %247 = vmatpush.msra.mxu0 %v108
  %248 = vmatpush.msra.mxu0 %v104
  %249 = vmatpush.msra.mxu0 %v100
  %250 = vmatpush.msra.mxu0 %v96
  %251 = vmatpush.msra.mxu0 %v92
  %252 = vmatpush.msra.mxu0 %v88
  %253 = vmatpush.msra.mxu0 %v84
  %254 = vmatpush.msra.mxu0 %v80
  %255 = vmatpush.msra.mxu0 %v76
  %256 = vmatpush.msra.mxu0 %v72
  %257 = vmatpush.msra.mxu0 %v68
  %258 = vmatpush.msra.mxu0 %v64
  %259 = vmatpush.msra.mxu0 %v60
  %260 = vmatpush.msra.mxu0 %v56
  %261 = vmatpush.msra.mxu0 %v52
  %262 = vmatmul.f32.gmra.mxu0 %v41
  %v263 = vpop.f32.mrf.mxu0
  %v264 = vadd.f32 %v118, %v263
  %265 = vmatmul.f32.gmra.mxu0 %v42
  %v266 = vpop.f32.mrf.mxu0
  %v267 = vadd.f32 %v118, %v266
  %268 = vmatmul.f32.gmra.mxu0 %v43
  %v269 = vpop.f32.mrf.mxu0
  %v270 = vadd.f32 %v118, %v269
  %271 = vmatmul.f32.gmra.mxu0 %v44
  %v272 = vpop.f32.mrf.mxu0
  %v273 = vadd.f32 %v118, %v272
  %274 = vmatmul.f32.gmra.mxu0 %v45
  %v275 = vpop.f32.mrf.mxu0
  %v276 = vadd.f32 %v118, %v275
  %277 = vmatmul.f32.gmra.mxu0 %v46
  %v278 = vpop.f32.mrf.mxu0
  %v279 = vadd.f32 %v118, %v278
  %280 = vmatmul.f32.gmra.mxu0 %v47
  %v281 = vpop.f32.mrf.mxu0
  %v282 = vadd.f32 %v118, %v281
  %283 = vmatmul.f32.gmra.mxu0 %v48
  %v284 = vpop.f32.mrf.mxu0
  %v285 = vadd.f32 %v118, %v284
  %286 = vdwg.mxu0
  %287 = vst [vmem:[#allocation2] sm:$0xff] %v141
  %288 = vst [vmem:[#allocation2 + $0x8] sm:$0xff] %v182
  %289 = vst [vmem:[#allocation2 + $0x10] sm:$0xff] %v223
  %290 = vst [vmem:[#allocation2 + $0x18] sm:$0xff] %v264
  %291 = vst [vmem:[#allocation2 + $0x20] sm:$0xff] %v144
  %292 = vst [vmem:[#allocation2 + $0x28] sm:$0xff] %v185
  %293 = vst [vmem:[#allocation2 + $0x30] sm:$0xff] %v226
  %294 = vst [vmem:[#allocation2 + $0x38] sm:$0xff] %v267
  %295 = vst [vmem:[#allocation2 + $0x40] sm:$0xff] %v147
  %296 = vst [vmem:[#allocation2 + $0x48] sm:$0xff] %v188
  %297 = vst [vmem:[#allocation2 + $0x50] sm:$0xff] %v229
  %298 = vst [vmem:[#allocation2 + $0x58] sm:$0xff] %v270
  %299 = vst [vmem:[#allocation2 + $0x60] sm:$0xff] %v150
  %300 = vst [vmem:[#allocation2 + $0x68] sm:$0xff] %v191
  %301 = vst [vmem:[#allocation2 + $0x70] sm:$0xff] %v232
  %302 = vst [vmem:[#allocation2 + $0x78] sm:$0xff] %v273
  %303 = vst [vmem:[#allocation2 + $0x80] sm:$0xff] %v153
  %304 = vst [vmem:[#allocation2 + $0x88] sm:$0xff] %v194
  %305 = vst [vmem:[#allocation2 + $0x90] sm:$0xff] %v235
  %306 = vst [vmem:[#allocation2 + $0x98] sm:$0xff] %v276
  %307 = vst [vmem:[#allocation2 + $0xa0] sm:$0xff] %v156
  %308 = vst [vmem:[#allocation2 + $0xa8] sm:$0xff] %v197
  %309 = vst [vmem:[#allocation2 + $0xb0] sm:$0xff] %v238
  %310 = vst [vmem:[#allocation2 + $0xb8] sm:$0xff] %v279
  %311 = vst [vmem:[#allocation2 + $0xc0] sm:$0xff] %v159
  %312 = vst [vmem:[#allocation2 + $0xc8] sm:$0xff] %v200
  %313 = vst [vmem:[#allocation2 + $0xd0] sm:$0xff] %v241
  %314 = vst [vmem:[#allocation2 + $0xd8] sm:$0xff] %v282
  %315 = vst [vmem:[#allocation2 + $0xe0] sm:$0xff] %v162
  %316 = vst [vmem:[#allocation2 + $0xe8] sm:$0xff] %v203
  %317 = vst [vmem:[#allocation2 + $0xf0] sm:$0xff] %v244
  %318 = vst [vmem:[#allocation2 + $0xf8] sm:$0xff] %v285
  %v319 = vld [vmem:[%s6] sm:$0xf]
  %v321 = vperm.slane %v319, 0
  %v322 = vperm.slane %v319, 1
  %v323 = vperm.slane %v319, 2
  %v324 = vperm.slane %v319, 3
  %v329 = vld [vmem:[%s9] sm:$0xf]
  %v331 = vperm.slane %v329, 0
  %v332 = vperm.slane %v329, 2
  %v333 = vperm.slane %v329, 3
  %v337 = vld [vmem:[%s3] sm:$0xff]
  %v338 = vld [vmem:[%s3 + $0x8] sm:$0xff]
  %v339 = vld [vmem:[%s3 + $0x10] sm:$0xff]
  %v340 = vld [vmem:[%s3 + $0x18] sm:$0xff]
  %v341 = vld [vmem:[%s3 + $0x20] sm:$0xff]
  %v342 = vld [vmem:[%s3 + $0x28] sm:$0xff]
  %v343 = vld [vmem:[%s3 + $0x30] sm:$0xff]
  %v344 = vld [vmem:[%s3 + $0x38] sm:$0xff]
  %v345 = vld [vmem:[%s3 + $0x40] sm:$0xff]
  %v346 = vld [vmem:[%s3 + $0x48] sm:$0xff]
  %v347 = vld [vmem:[%s3 + $0x50] sm:$0xff]
  %v348 = vld [vmem:[%s3 + $0x58] sm:$0xff]
  %v349 = vld [vmem:[%s3 + $0x60] sm:$0xff]
  %v350 = vld [vmem:[%s3 + $0x68] sm:$0xff]
  %v351 = vld [vmem:[%s3 + $0x70] sm:$0xff]
  %v352 = vld [vmem:[%s3 + $0x78] sm:$0xff]
  %v353 = vld [vmem:[%s3 + $0x80] sm:$0xff]
  %v354 = vld [vmem:[%s3 + $0x88] sm:$0xff]
  %v355 = vld [vmem:[%s3 + $0x90] sm:$0xff]
  %v356 = vld [vmem:[%s3 + $0x98] sm:$0xff]
  %v357 = vld [vmem:[%s3 + $0xa0] sm:$0xff]
  %v358 = vld [vmem:[%s3 + $0xa8] sm:$0xff]
  %v359 = vld [vmem:[%s3 + $0xb0] sm:$0xff]
  %v360 = vld [vmem:[%s3 + $0xb8] sm:$0xff]
  %v361 = vld [vmem:[%s3 + $0xc0] sm:$0xff]
  %v362 = vld [vmem:[%s3 + $0xc8] sm:$0xff]
  %v363 = vld [vmem:[%s3 + $0xd0] sm:$0xff]
  %v364 = vld [vmem:[%s3 + $0xd8] sm:$0xff]
  %v365 = vld [vmem:[%s3 + $0xe0] sm:$0xff]
  %v366 = vld [vmem:[%s3 + $0xe8] sm:$0xff]
  %v367 = vld [vmem:[%s3 + $0xf0] sm:$0xff]
  %v368 = vld [vmem:[%s3 + $0xf8] sm:$0xff]
  %v369 = vld [vmem:[%s3 + $0x100] sm:$0xff]
  %v370 = vld [vmem:[%s3 + $0x108] sm:$0xff]
  %v371 = vld [vmem:[%s3 + $0x110] sm:$0xff]
  %v372 = vld [vmem:[%s3 + $0x118] sm:$0xff]
  %v373 = vld [vmem:[%s3 + $0x120] sm:$0xff]
  %v374 = vld [vmem:[%s3 + $0x128] sm:$0xff]
  %v375 = vld [vmem:[%s3 + $0x130] sm:$0xff]
  %v376 = vld [vmem:[%s3 + $0x138] sm:$0xff]
  %v377 = vld [vmem:[%s3 + $0x140] sm:$0xff]
  %v378 = vld [vmem:[%s3 + $0x148] sm:$0xff]
  %v379 = vld [vmem:[%s3 + $0x150] sm:$0xff]
  %v380 = vld [vmem:[%s3 + $0x158] sm:$0xff]
  %v381 = vld [vmem:[%s3 + $0x160] sm:$0xff]
  %v382 = vld [vmem:[%s3 + $0x168] sm:$0xff]
  %v383 = vld [vmem:[%s3 + $0x170] sm:$0xff]
  %v384 = vld [vmem:[%s3 + $0x178] sm:$0xff]
  %v385 = vld [vmem:[%s3 + $0x180] sm:$0xff]
  %v386 = vld [vmem:[%s3 + $0x188] sm:$0xff]
  %v387 = vld [vmem:[%s3 + $0x190] sm:$0xff]
  %v388 = vld [vmem:[%s3 + $0x198] sm:$0xff]
  %v389 = vld [vmem:[%s3 + $0x1a0] sm:$0xff]
  %v390 = vld [vmem:[%s3 + $0x1a8] sm:$0xff]
  %v391 = vld [vmem:[%s3 + $0x1b0] sm:$0xff]
  %v392 = vld [vmem:[%s3 + $0x1b8] sm:$0xff]
  %v393 = vld [vmem:[%s3 + $0x1c0] sm:$0xff]
  %v394 = vld [vmem:[%s3 + $0x1c8] sm:$0xff]
  %v395 = vld [vmem:[%s3 + $0x1d0] sm:$0xff]
  %v396 = vld [vmem:[%s3 + $0x1d8] sm:$0xff]
  %v397 = vld [vmem:[%s3 + $0x1e0] sm:$0xff]
  %v398 = vld [vmem:[%s3 + $0x1e8] sm:$0xff]
  %v399 = vld [vmem:[%s3 + $0x1f0] sm:$0xff]
  %v400 = vld [vmem:[%s3 + $0x1f8] sm:$0xff]
  %v401 = vld [vmem:[%s4] sm:$0xff]
  %v402 = vld [vmem:[%s4 + $0x8] sm:$0xff]
  %v403 = vld [vmem:[%s4 + $0x10] sm:$0xff]
  %v404 = vld [vmem:[%s4 + $0x18] sm:$0xff]
  %v405 = vld [vmem:[%s4 + $0x20] sm:$0xff]
  %v406 = vld [vmem:[%s4 + $0x28] sm:$0xff]
  %v407 = vld [vmem:[%s4 + $0x30] sm:$0xff]
  %v408 = vld [vmem:[%s4 + $0x38] sm:$0xff]
  %v409 = vld [vmem:[%s4 + $0x40] sm:$0xff]
  %v410 = vld [vmem:[%s4 + $0x48] sm:$0xff]
  %v411 = vld [vmem:[%s4 + $0x50] sm:$0xff]
  %v412 = vld [vmem:[%s4 + $0x58] sm:$0xff]
  %v413 = vld [vmem:[%s4 + $0x60] sm:$0xff]
  %v414 = vld [vmem:[%s4 + $0x68] sm:$0xff]
  %v415 = vld [vmem:[%s4 + $0x70] sm:$0xff]
  %v416 = vld [vmem:[%s4 + $0x78] sm:$0xff]
  %v417 = vld [vmem:[%s4 + $0x80] sm:$0xff]
  %v418 = vld [vmem:[%s4 + $0x88] sm:$0xff]
  %v419 = vld [vmem:[%s4 + $0x90] sm:$0xff]
  %v420 = vld [vmem:[%s4 + $0x98] sm:$0xff]
  %v421 = vld [vmem:[%s4 + $0xa0] sm:$0xff]
  %v422 = vld [vmem:[%s4 + $0xa8] sm:$0xff]
  %v423 = vld [vmem:[%s4 + $0xb0] sm:$0xff]
  %v424 = vld [vmem:[%s4 + $0xb8] sm:$0xff]
  %v425 = vld [vmem:[%s4 + $0xc0] sm:$0xff]
  %v426 = vld [vmem:[%s4 + $0xc8] sm:$0xff]
  %v427 = vld [vmem:[%s4 + $0xd0] sm:$0xff]
  %v428 = vld [vmem:[%s4 + $0xd8] sm:$0xff]
  %v429 = vld [vmem:[%s4 + $0xe0] sm:$0xff]
  %v430 = vld [vmem:[%s4 + $0xe8] sm:$0xff]
  %v431 = vld [vmem:[%s4 + $0xf0] sm:$0xff]
  %v432 = vld [vmem:[%s4 + $0xf8] sm:$0xff]
  %v433 = vld [vmem:[%s4 + $0x100] sm:$0xff]
  %v434 = vld [vmem:[%s4 + $0x108] sm:$0xff]
  %v435 = vld [vmem:[%s4 + $0x110] sm:$0xff]
  %v436 = vld [vmem:[%s4 + $0x118] sm:$0xff]
  %v437 = vld [vmem:[%s4 + $0x120] sm:$0xff]
  %v438 = vld [vmem:[%s4 + $0x128] sm:$0xff]
  %v439 = vld [vmem:[%s4 + $0x130] sm:$0xff]
  %v440 = vld [vmem:[%s4 + $0x138] sm:$0xff]
  %v441 = vld [vmem:[%s4 + $0x140] sm:$0xff]
  %v442 = vld [vmem:[%s4 + $0x148] sm:$0xff]
  %v443 = vld [vmem:[%s4 + $0x150] sm:$0xff]
  %v444 = vld [vmem:[%s4 + $0x158] sm:$0xff]
  %v445 = vld [vmem:[%s4 + $0x160] sm:$0xff]
  %v446 = vld [vmem:[%s4 + $0x168] sm:$0xff]
  %v447 = vld [vmem:[%s4 + $0x170] sm:$0xff]
  %v448 = vld [vmem:[%s4 + $0x178] sm:$0xff]
  %v449 = vld [vmem:[%s4 + $0x180] sm:$0xff]
  %v450 = vld [vmem:[%s4 + $0x188] sm:$0xff]
  %v451 = vld [vmem:[%s4 + $0x190] sm:$0xff]
  %v452 = vld [vmem:[%s4 + $0x198] sm:$0xff]
  %v453 = vld [vmem:[%s4 + $0x1a0] sm:$0xff]
  %v454 = vld [vmem:[%s4 + $0x1a8] sm:$0xff]
  %v455 = vld [vmem:[%s4 + $0x1b0] sm:$0xff]
  %v456 = vld [vmem:[%s4 + $0x1b8] sm:$0xff]
  %v457 = vld [vmem:[%s4 + $0x1c0] sm:$0xff]
  %v458 = vld [vmem:[%s4 + $0x1c8] sm:$0xff]
  %v459 = vld [vmem:[%s4 + $0x1d0] sm:$0xff]
  %v460 = vld [vmem:[%s4 + $0x1d8] sm:$0xff]
  %v461 = vld [vmem:[%s4 + $0x1e0] sm:$0xff]
  %v462 = vld [vmem:[%s4 + $0x1e8] sm:$0xff]
  %v463 = vld [vmem:[%s4 + $0x1f0] sm:$0xff]
  %v464 = vld [vmem:[%s4 + $0x1f8] sm:$0xff]
  %v465 = vld [vmem:[%s5] sm:$0xff]
  %v466 = vld [vmem:[%s5 + $0x8] sm:$0xff]
  %v467 = vld [vmem:[%s5 + $0x10] sm:$0xff]
  %v468 = vld [vmem:[%s5 + $0x18] sm:$0xff]
  %v469 = vld [vmem:[%s5 + $0x20] sm:$0xff]
  %v470 = vld [vmem:[%s5 + $0x28] sm:$0xff]
  %v471 = vld [vmem:[%s5 + $0x30] sm:$0xff]
  %v472 = vld [vmem:[%s5 + $0x38] sm:$0xff]
  %v473 = vld [vmem:[%s5 + $0x40] sm:$0xff]
  %v474 = vld [vmem:[%s5 + $0x48] sm:$0xff]
  %v475 = vld [vmem:[%s5 + $0x50] sm:$0xff]
  %v476 = vld [vmem:[%s5 + $0x58] sm:$0xff]
  %v477 = vld [vmem:[%s5 + $0x60] sm:$0xff]
  %v478 = vld [vmem:[%s5 + $0x68] sm:$0xff]
  %v479 = vld [vmem:[%s5 + $0x70] sm:$0xff]
  %v480 = vld [vmem:[%s5 + $0x78] sm:$0xff]
  %v481 = vld [vmem:[%s5 + $0x80] sm:$0xff]
  %v482 = vld [vmem:[%s5 + $0x88] sm:$0xff]
  %v483 = vld [vmem:[%s5 + $0x90] sm:$0xff]
  %v484 = vld [vmem:[%s5 + $0x98] sm:$0xff]
  %v485 = vld [vmem:[%s5 + $0xa0] sm:$0xff]
  %v486 = vld [vmem:[%s5 + $0xa8] sm:$0xff]
  %v487 = vld [vmem:[%s5 + $0xb0] sm:$0xff]
  %v488 = vld [vmem:[%s5 + $0xb8] sm:$0xff]
  %v489 = vld [vmem:[%s5 + $0xc0] sm:$0xff]
  %v490 = vld [vmem:[%s5 + $0xc8] sm:$0xff]
  %v491 = vld [vmem:[%s5 + $0xd0] sm:$0xff]
  %v492 = vld [vmem:[%s5 + $0xd8] sm:$0xff]
  %v493 = vld [vmem:[%s5 + $0xe0] sm:$0xff]
  %v494 = vld [vmem:[%s5 + $0xe8] sm:$0xff]
  %v495 = vld [vmem:[%s5 + $0xf0] sm:$0xff]
  %v496 = vld [vmem:[%s5 + $0xf8] sm:$0xff]
  %v497 = vld [vmem:[%s5 + $0x100] sm:$0xff]
  %v498 = vld [vmem:[%s5 + $0x108] sm:$0xff]
  %v499 = vld [vmem:[%s5 + $0x110] sm:$0xff]
  %v500 = vld [vmem:[%s5 + $0x118] sm:$0xff]
  %v501 = vld [vmem:[%s5 + $0x120] sm:$0xff]
  %v502 = vld [vmem:[%s5 + $0x128] sm:$0xff]
  %v503 = vld [vmem:[%s5 + $0x130] sm:$0xff]
  %v504 = vld [vmem:[%s5 + $0x138] sm:$0xff]
  %v505 = vld [vmem:[%s5 + $0x140] sm:$0xff]
  %v506 = vld [vmem:[%s5 + $0x148] sm:$0xff]
  %v507 = vld [vmem:[%s5 + $0x150] sm:$0xff]
  %v508 = vld [vmem:[%s5 + $0x158] sm:$0xff]
  %v509 = vld [vmem:[%s5 + $0x160] sm:$0xff]
  %v510 = vld [vmem:[%s5 + $0x168] sm:$0xff]
  %v511 = vld [vmem:[%s5 + $0x170] sm:$0xff]
  %v512 = vld [vmem:[%s5 + $0x178] sm:$0xff]
  %v513 = vld [vmem:[%s5 + $0x180] sm:$0xff]
  %v514 = vld [vmem:[%s5 + $0x188] sm:$0xff]
  %v515 = vld [vmem:[%s5 + $0x190] sm:$0xff]
  %v516 = vld [vmem:[%s5 + $0x198] sm:$0xff]
  %v517 = vld [vmem:[%s5 + $0x1a0] sm:$0xff]
  %v518 = vld [vmem:[%s5 + $0x1a8] sm:$0xff]
  %v519 = vld [vmem:[%s5 + $0x1b0] sm:$0xff]
  %v520 = vld [vmem:[%s5 + $0x1b8] sm:$0xff]
  %v521 = vld [vmem:[%s5 + $0x1c0] sm:$0xff]
  %v522 = vld [vmem:[%s5 + $0x1c8] sm:$0xff]
  %v523 = vld [vmem:[%s5 + $0x1d0] sm:$0xff]
  %v524 = vld [vmem:[%s5 + $0x1d8] sm:$0xff]
  %v525 = vld [vmem:[%s5 + $0x1e0] sm:$0xff]
  %v526 = vld [vmem:[%s5 + $0x1e8] sm:$0xff]
  %v527 = vld [vmem:[%s5 + $0x1f0] sm:$0xff]
  %v528 = vld [vmem:[%s5 + $0x1f8] sm:$0xff]
  %v529 = vld [vmem:[%s7] sm:$0xff]
  %v530 = vld [vmem:[%s7 + $0x10] sm:$0xff]
  %v531 = vld [vmem:[%s7 + $0x18] sm:$0xff]
  %v532 = vld [vmem:[%s7 + $0x20] sm:$0xff]
  %v533 = vld [vmem:[%s7 + $0x30] sm:$0xff]
  %v534 = vld [vmem:[%s7 + $0x38] sm:$0xff]
  %v535 = vld [vmem:[%s7 + $0x40] sm:$0xff]
  %v536 = vld [vmem:[%s7 + $0x50] sm:$0xff]
  %v537 = vld [vmem:[%s7 + $0x58] sm:$0xff]
  %v538 = vld [vmem:[%s7 + $0x60] sm:$0xff]
  %v539 = vld [vmem:[%s7 + $0x70] sm:$0xff]
  %v540 = vld [vmem:[%s7 + $0x78] sm:$0xff]
  %v541 = vld [vmem:[%s7 + $0x80] sm:$0xff]
  %v542 = vld [vmem:[%s7 + $0x90] sm:$0xff]
  %v543 = vld [vmem:[%s7 + $0x98] sm:$0xff]
  %v544 = vld [vmem:[%s7 + $0xa0] sm:$0xff]
  %v545 = vld [vmem:[%s7 + $0xb0] sm:$0xff]
  %v546 = vld [vmem:[%s7 + $0xb8] sm:$0xff]
  %v547 = vld [vmem:[%s7 + $0xc0] sm:$0xff]
  %v548 = vld [vmem:[%s7 + $0xd0] sm:$0xff]
  %v549 = vld [vmem:[%s7 + $0xd8] sm:$0xff]
  %v550 = vld [vmem:[%s7 + $0xe0] sm:$0xff]
  %v551 = vld [vmem:[%s7 + $0xf0] sm:$0xff]
  %v552 = vld [vmem:[%s7 + $0xf8] sm:$0xff]
  %v553 = vld [vmem:[%s7 + $0x100] sm:$0xff]
  %v554 = vld [vmem:[%s7 + $0x110] sm:$0xff]
  %v555 = vld [vmem:[%s7 + $0x118] sm:$0xff]
  %v556 = vld [vmem:[%s7 + $0x120] sm:$0xff]
  %v557 = vld [vmem:[%s7 + $0x130] sm:$0xff]
  %v558 = vld [vmem:[%s7 + $0x138] sm:$0xff]
  %v559 = vld [vmem:[%s7 + $0x140] sm:$0xff]
  %v560 = vld [vmem:[%s7 + $0x150] sm:$0xff]
  %v561 = vld [vmem:[%s7 + $0x158] sm:$0xff]
  %v562 = vld [vmem:[%s7 + $0x160] sm:$0xff]
  %v563 = vld [vmem:[%s7 + $0x170] sm:$0xff]
  %v564 = vld [vmem:[%s7 + $0x178] sm:$0xff]
  %v565 = vld [vmem:[%s7 + $0x180] sm:$0xff]
  %v566 = vld [vmem:[%s7 + $0x190] sm:$0xff]
  %v567 = vld [vmem:[%s7 + $0x198] sm:$0xff]
  %v568 = vld [vmem:[%s7 + $0x1a0] sm:$0xff]
  %v569 = vld [vmem:[%s7 + $0x1b0] sm:$0xff]
  %v570 = vld [vmem:[%s7 + $0x1b8] sm:$0xff]
  %v571 = vld [vmem:[%s7 + $0x1c0] sm:$0xff]
  %v572 = vld [vmem:[%s7 + $0x1d0] sm:$0xff]
  %v573 = vld [vmem:[%s7 + $0x1d8] sm:$0xff]
  %v574 = vld [vmem:[%s7 + $0x1e0] sm:$0xff]
  %v575 = vld [vmem:[%s7 + $0x1f0] sm:$0xff]
  %v576 = vld [vmem:[%s7 + $0x1f8] sm:$0xff]
  %v577 = vld [vmem:[%s8] sm:$0xff]
  %v578 = vld [vmem:[%s8 + $0x10] sm:$0xff]
  %v579 = vld [vmem:[%s8 + $0x18] sm:$0xff]
  %v580 = vld [vmem:[%s8 + $0x20] sm:$0xff]
  %v581 = vld [vmem:[%s8 + $0x30] sm:$0xff]
  %v582 = vld [vmem:[%s8 + $0x38] sm:$0xff]
  %v583 = vld [vmem:[%s8 + $0x40] sm:$0xff]
  %v584 = vld [vmem:[%s8 + $0x50] sm:$0xff]
  %v585 = vld [vmem:[%s8 + $0x58] sm:$0xff]
  %v586 = vld [vmem:[%s8 + $0x60] sm:$0xff]
  %v587 = vld [vmem:[%s8 + $0x70] sm:$0xff]
  %v588 = vld [vmem:[%s8 + $0x78] sm:$0xff]
  %v589 = vld [vmem:[%s8 + $0x80] sm:$0xff]
  %v590 = vld [vmem:[%s8 + $0x90] sm:$0xff]
  %v591 = vld [vmem:[%s8 + $0x98] sm:$0xff]
  %v592 = vld [vmem:[%s8 + $0xa0] sm:$0xff]
  %v593 = vld [vmem:[%s8 + $0xb0] sm:$0xff]
  %v594 = vld [vmem:[%s8 + $0xb8] sm:$0xff]
  %v595 = vld [vmem:[%s8 + $0xc0] sm:$0xff]
  %v596 = vld [vmem:[%s8 + $0xd0] sm:$0xff]
  %v597 = vld [vmem:[%s8 + $0xd8] sm:$0xff]
  %v598 = vld [vmem:[%s8 + $0xe0] sm:$0xff]
  %v599 = vld [vmem:[%s8 + $0xf0] sm:$0xff]
  %v600 = vld [vmem:[%s8 + $0xf8] sm:$0xff]
  %v601 = vld [vmem:[%s8 + $0x100] sm:$0xff]
  %v602 = vld [vmem:[%s8 + $0x110] sm:$0xff]
  %v603 = vld [vmem:[%s8 + $0x118] sm:$0xff]
  %v604 = vld [vmem:[%s8 + $0x120] sm:$0xff]
  %v605 = vld [vmem:[%s8 + $0x130] sm:$0xff]
  %v606 = vld [vmem:[%s8 + $0x138] sm:$0xff]
  %v607 = vld [vmem:[%s8 + $0x140] sm:$0xff]
  %v608 = vld [vmem:[%s8 + $0x150] sm:$0xff]
  %v609 = vld [vmem:[%s8 + $0x158] sm:$0xff]
  %v610 = vld [vmem:[%s8 + $0x160] sm:$0xff]
  %v611 = vld [vmem:[%s8 + $0x170] sm:$0xff]
  %v612 = vld [vmem:[%s8 + $0x178] sm:$0xff]
  %v613 = vld [vmem:[%s8 + $0x180] sm:$0xff]
  %v614 = vld [vmem:[%s8 + $0x190] sm:$0xff]
  %v615 = vld [vmem:[%s8 + $0x198] sm:$0xff]
  %v616 = vld [vmem:[%s8 + $0x1a0] sm:$0xff]
  %v617 = vld [vmem:[%s8 + $0x1b0] sm:$0xff]
  %v618 = vld [vmem:[%s8 + $0x1b8] sm:$0xff]
  %v619 = vld [vmem:[%s8 + $0x1c0] sm:$0xff]
  %v620 = vld [vmem:[%s8 + $0x1d0] sm:$0xff]
  %v621 = vld [vmem:[%s8 + $0x1d8] sm:$0xff]
  %v622 = vld [vmem:[%s8 + $0x1e0] sm:$0xff]
  %v623 = vld [vmem:[%s8 + $0x1f0] sm:$0xff]
  %v624 = vld [vmem:[%s8 + $0x1f8] sm:$0xff]
  %v625 = vld [vmem:[#allocation2] sm:$0xff]
  %v626 = vld [vmem:[#allocation2 + $0x8] sm:$0xff]
  %v627 = vld [vmem:[#allocation2 + $0x10] sm:$0xff]
  %v628 = vld [vmem:[#allocation2 + $0x18] sm:$0xff]
  %629 = vmatpush.msra.mxu0 %v397
  %630 = vmatpush.msra.mxu0 %v393
  %631 = vmatpush.msra.mxu0 %v389
  %632 = vmatpush.msra.mxu0 %v385
  %633 = vmatpush.msra.mxu0 %v381
  %634 = vmatpush.msra.mxu0 %v377
  %635 = vmatpush.msra.mxu0 %v373
  %636 = vmatpush.msra.mxu0 %v369
  %637 = vmatpush.msra.mxu0 %v365
  %638 = vmatpush.msra.mxu0 %v361
  %639 = vmatpush.msra.mxu0 %v357
  %640 = vmatpush.msra.mxu0 %v353
  %641 = vmatpush.msra.mxu0 %v349
  %642 = vmatpush.msra.mxu0 %v345
  %643 = vmatpush.msra.mxu0 %v341
  %644 = vmatpush.msra.mxu0 %v337
  %645 = vmatmul.f32.gmra.mxu0 0.0
  %v646 = vpop.f32.mrf.mxu0
  %v647 = vadd.f32 0.0, %v646
  %648 = vdwg.mxu0
  %649 = vmatpush.msra.mxu0 %v398
  %650 = vmatpush.msra.mxu0 %v394
  %651 = vmatpush.msra.mxu0 %v390
  %652 = vmatpush.msra.mxu0 %v386
  %653 = vmatpush.msra.mxu0 %v382
  %654 = vmatpush.msra.mxu0 %v378
  %655 = vmatpush.msra.mxu0 %v374
  %656 = vmatpush.msra.mxu0 %v370
  %657 = vmatpush.msra.mxu0 %v366
  %658 = vmatpush.msra.mxu0 %v362
  %659 = vmatpush.msra.mxu0 %v358
  %660 = vmatpush.msra.mxu0 %v354
  %661 = vmatpush.msra.mxu0 %v350
  %662 = vmatpush.msra.mxu0 %v346
  %663 = vmatpush.msra.mxu0 %v342
  %664 = vmatpush.msra.mxu0 %v338
  %665 = vmatmul.f32.gmra.mxu0 0.0
  %v666 = vpop.f32.mrf.mxu0
  %v667 = vadd.f32 0.0, %v666
  %668 = vdwg.mxu0
  %669 = vmatpush.msra.mxu0 %v399
  %670 = vmatpush.msra.mxu0 %v395
  %671 = vmatpush.msra.mxu0 %v391
  %672 = vmatpush.msra.mxu0 %v387
  %673 = vmatpush.msra.mxu0 %v383
  %674 = vmatpush.msra.mxu0 %v379
  %675 = vmatpush.msra.mxu0 %v375
  %676 = vmatpush.msra.mxu0 %v371
  %677 = vmatpush.msra.mxu0 %v367
  %678 = vmatpush.msra.mxu0 %v363
  %679 = vmatpush.msra.mxu0 %v359
  %680 = vmatpush.msra.mxu0 %v355
  %681 = vmatpush.msra.mxu0 %v351
  %682 = vmatpush.msra.mxu0 %v347
  %683 = vmatpush.msra.mxu0 %v343
  %684 = vmatpush.msra.mxu0 %v339
  %685 = vmatmul.f32.gmra.mxu0 0.0
  %v686 = vpop.f32.mrf.mxu0
  %v687 = vadd.f32 0.0, %v686
  %688 = vdwg.mxu0
  %689 = vmatpush.msra.mxu0 %v400
  %690 = vmatpush.msra.mxu0 %v396
  %691 = vmatpush.msra.mxu0 %v392
  %692 = vmatpush.msra.mxu0 %v388
  %693 = vmatpush.msra.mxu0 %v384
  %694 = vmatpush.msra.mxu0 %v380
  %695 = vmatpush.msra.mxu0 %v376
  %696 = vmatpush.msra.mxu0 %v372
  %697 = vmatpush.msra.mxu0 %v368
  %698 = vmatpush.msra.mxu0 %v364
  %699 = vmatpush.msra.mxu0 %v360
  %700 = vmatpush.msra.mxu0 %v356
  %701 = vmatpush.msra.mxu0 %v352
  %702 = vmatpush.msra.mxu0 %v348
  %703 = vmatpush.msra.mxu0 %v344
  %704 = vmatpush.msra.mxu0 %v340
  %705 = vmatmul.f32.gmra.mxu0 0.0
  %v706 = vpop.f32.mrf.mxu0
  %v707 = vadd.f32 0.0, %v706
  %708 = vdwg.mxu0
  %v709 = vadd.f32 %v625, %v647
  %v710 = vadd.f32 %v626, %v667
  %v711 = vadd.f32 %v627, %v687
  %v712 = vadd.f32 %v628, %v707
  %v713 = vmul.f32 %v709, 0.5
  %v714 = vtanh.pop %v713
  %v715 = vmul.f32 %v714, 0.5
  %v716 = vadd.f32 %v715, 0.5
  %v717 = vmul.f32 %v710, 0.5
  %v718 = vtanh.pop %v717
  %v719 = vmul.f32 %v718, 0.5
  %v720 = vadd.f32 %v719, 0.5
  %v721 = vtanh.pop %v711
  %v722 = vmul.f32 %v712, 0.5
  %v723 = vtanh.pop %v722
  %v724 = vmul.f32 %v723, 0.5
  %v725 = vadd.f32 %v724, 0.5
  %v726 = vmul.f32 %v720, 0.0
  %v727 = vmul.f32 %v716, %v721
  %v728 = vadd.f32 %v726, %v727
  %v729 = vtanh.pop %v728
  %v730 = vmul.f32 %v725, %v729
  %731 = vmatpush.msra.mxu0 %v525
  %732 = vmatpush.msra.mxu0 %v521
  %733 = vmatpush.msra.mxu0 %v517
  %734 = vmatpush.msra.mxu0 %v513
  %735 = vmatpush.msra.mxu0 %v509
  %736 = vmatpush.msra.mxu0 %v505
  %737 = vmatpush.msra.mxu0 %v501
  %738 = vmatpush.msra.mxu0 %v497
  %739 = vmatpush.msra.mxu0 %v493
  %740 = vmatpush.msra.mxu0 %v489
  %741 = vmatpush.msra.mxu0 %v485
  %742 = vmatpush.msra.mxu0 %v481
  %743 = vmatpush.msra.mxu0 %v477
  %744 = vmatpush.msra.mxu0 %v473
  %745 = vmatpush.msra.mxu0 %v469
  %746 = vmatpush.msra.mxu0 %v465
  %747 = vmatmul.f32.gmra.mxu0 0.0
  %v748 = vpop.f32.mrf.mxu0
  %v749 = vadd.f32 0.0, %v748
  %750 = vdwg.mxu0
  %751 = vmatpush.msra.mxu0 %v526
  %752 = vmatpush.msra.mxu0 %v522
  %753 = vmatpush.msra.mxu0 %v518
  %754 = vmatpush.msra.mxu0 %v514
  %755 = vmatpush.msra.mxu0 %v510
  %756 = vmatpush.msra.mxu0 %v506
  %757 = vmatpush.msra.mxu0 %v502
  %758 = vmatpush.msra.mxu0 %v498
  %759 = vmatpush.msra.mxu0 %v494
  %760 = vmatpush.msra.mxu0 %v490
  %761 = vmatpush.msra.mxu0 %v486
  %762 = vmatpush.msra.mxu0 %v482
  %763 = vmatpush.msra.mxu0 %v478
  %764 = vmatpush.msra.mxu0 %v474
  %765 = vmatpush.msra.mxu0 %v470
  %766 = vmatpush.msra.mxu0 %v466
  %767 = vmatmul.f32.gmra.mxu0 0.0
  %v768 = vpop.f32.mrf.mxu0
  %v769 = vadd.f32 0.0, %v768
  %770 = vdwg.mxu0
  %771 = vmatpush.msra.mxu0 %v527
  %772 = vmatpush.msra.mxu0 %v523
  %773 = vmatpush.msra.mxu0 %v519
  %774 = vmatpush.msra.mxu0 %v515
  %775 = vmatpush.msra.mxu0 %v511
  %776 = vmatpush.msra.mxu0 %v507
  %777 = vmatpush.msra.mxu0 %v503
  %778 = vmatpush.msra.mxu0 %v499
  %779 = vmatpush.msra.mxu0 %v495
  %780 = vmatpush.msra.mxu0 %v491
  %781 = vmatpush.msra.mxu0 %v487
  %782 = vmatpush.msra.mxu0 %v483
  %783 = vmatpush.msra.mxu0 %v479
  %784 = vmatpush.msra.mxu0 %v475
  %785 = vmatpush.msra.mxu0 %v471
  %786 = vmatpush.msra.mxu0 %v467
  %787 = vmatmul.f32.gmra.mxu0 0.0
  %v788 = vpop.f32.mrf.mxu0
  %v789 = vadd.f32 0.0, %v788
  %790 = vdwg.mxu0
  %791 = vmatpush.msra.mxu0 %v528
  %792 = vmatpush.msra.mxu0 %v524
  %793 = vmatpush.msra.mxu0 %v520
  %794 = vmatpush.msra.mxu0 %v516
  %795 = vmatpush.msra.mxu0 %v512
  %796 = vmatpush.msra.mxu0 %v508
  %797 = vmatpush.msra.mxu0 %v504
  %798 = vmatpush.msra.mxu0 %v500
  %799 = vmatpush.msra.mxu0 %v496
  %800 = vmatpush.msra.mxu0 %v492
  %801 = vmatpush.msra.mxu0 %v488
  %802 = vmatpush.msra.mxu0 %v484
  %803 = vmatpush.msra.mxu0 %v480
  %804 = vmatpush.msra.mxu0 %v476
  %805 = vmatpush.msra.mxu0 %v472
  %806 = vmatpush.msra.mxu0 %v468
  %807 = vmatmul.f32.gmra.mxu0 0.0
  %v808 = vpop.f32.mrf.mxu0
  %v809 = vadd.f32 0.0, %v808
  %810 = vdwg.mxu0
  %811 = vmatpush.msra.mxu0 %v461
  %812 = vmatpush.msra.mxu0 %v457
  %813 = vmatpush.msra.mxu0 %v453
  %814 = vmatpush.msra.mxu0 %v449
  %815 = vmatpush.msra.mxu0 %v445
  %816 = vmatpush.msra.mxu0 %v441
  %817 = vmatpush.msra.mxu0 %v437
  %818 = vmatpush.msra.mxu0 %v433
  %819 = vmatpush.msra.mxu0 %v429
  %820 = vmatpush.msra.mxu0 %v425
  %821 = vmatpush.msra.mxu0 %v421
  %822 = vmatpush.msra.mxu0 %v417
  %823 = vmatpush.msra.mxu0 %v413
  %824 = vmatpush.msra.mxu0 %v409
  %825 = vmatpush.msra.mxu0 %v405
  %826 = vmatpush.msra.mxu0 %v401
  %827 = vmatmul.f32.gmra.mxu0 %v730
  %v828 = vpop.f32.mrf.mxu0
  %v829 = vadd.f32 %v749, %v828
  %830 = vdwg.mxu0
  %831 = vmatpush.msra.mxu0 %v462
  %832 = vmatpush.msra.mxu0 %v458
  %833 = vmatpush.msra.mxu0 %v454
  %834 = vmatpush.msra.mxu0 %v450
  %835 = vmatpush.msra.mxu0 %v446
  %836 = vmatpush.msra.mxu0 %v442
  %837 = vmatpush.msra.mxu0 %v438
  %838 = vmatpush.msra.mxu0 %v434
  %839 = vmatpush.msra.mxu0 %v430
  %840 = vmatpush.msra.mxu0 %v426
  %841 = vmatpush.msra.mxu0 %v422
  %842 = vmatpush.msra.mxu0 %v418
  %843 = vmatpush.msra.mxu0 %v414
  %844 = vmatpush.msra.mxu0 %v410
  %845 = vmatpush.msra.mxu0 %v406
  %846 = vmatpush.msra.mxu0 %v402
  %847 = vmatmul.f32.gmra.mxu0 %v730
  %v848 = vpop.f32.mrf.mxu0
  %v849 = vadd.f32 %v769, %v848
  %850 = vdwg.mxu0
  %851 = vmatpush.msra.mxu0 %v463
  %852 = vmatpush.msra.mxu0 %v459
  %853 = vmatpush.msra.mxu0 %v455
  %854 = vmatpush.msra.mxu0 %v451
  %855 = vmatpush.msra.mxu0 %v447
  %856 = vmatpush.msra.mxu0 %v443
  %857 = vmatpush.msra.mxu0 %v439
  %858 = vmatpush.msra.mxu0 %v435
  %859 = vmatpush.msra.mxu0 %v431
  %860 = vmatpush.msra.mxu0 %v427
  %861 = vmatpush.msra.mxu0 %v423
  %862 = vmatpush.msra.mxu0 %v419
  %863 = vmatpush.msra.mxu0 %v415
  %864 = vmatpush.msra.mxu0 %v411
  %865 = vmatpush.msra.mxu0 %v407
  %866 = vmatpush.msra.mxu0 %v403
  %867 = vmatmul.f32.gmra.mxu0 %v730
  %v868 = vpop.f32.mrf.mxu0
  %v869 = vadd.f32 %v789, %v868
  %870 = vdwg.mxu0
  %871 = vmatpush.msra.mxu0 %v464
  %872 = vmatpush.msra.mxu0 %v460
  %873 = vmatpush.msra.mxu0 %v456
  %874 = vmatpush.msra.mxu0 %v452
  %875 = vmatpush.msra.mxu0 %v448
  %876 = vmatpush.msra.mxu0 %v444
  %877 = vmatpush.msra.mxu0 %v440
  %878 = vmatpush.msra.mxu0 %v436
  %879 = vmatpush.msra.mxu0 %v432
  %880 = vmatpush.msra.mxu0 %v428
  %881 = vmatpush.msra.mxu0 %v424
  %882 = vmatpush.msra.mxu0 %v420
  %883 = vmatpush.msra.mxu0 %v416
  %884 = vmatpush.msra.mxu0 %v412
  %885 = vmatpush.msra.mxu0 %v408
  %886 = vmatpush.msra.mxu0 %v404
  %887 = vmatmul.f32.gmra.mxu0 %v730
  %v888 = vpop.f32.mrf.mxu0
  %v889 = vadd.f32 %v809, %v888
  %890 = vdwg.mxu0
  %v891 = vadd.f32 %v829, %v321
  %v892 = vadd.f32 %v849, %v322
  %v893 = vadd.f32 %v869, %v323
  %v894 = vadd.f32 %v889, %v324
  %v895 = vmul.f32 %v891, 0.5
  %v896 = vtanh.pop %v895
  %v897 = vmul.f32 %v896, 0.5
  %v898 = vadd.f32 %v897, 0.5
  %v899 = vmul.f32 %v892, 0.5
  %v900 = vtanh.pop %v899
  %v901 = vmul.f32 %v900, 0.5
  %v902 = vadd.f32 %v901, 0.5
  %v903 = vtanh.pop %v893
  %v904 = vmul.f32 %v894, 0.5
  %v905 = vtanh.pop %v904
  %v906 = vmul.f32 %v905, 0.5
  %v907 = vadd.f32 %v906, 0.5
  %v908 = vmul.f32 %v902, 0.0
  %v909 = vmul.f32 %v898, %v903
  %v910 = vadd.f32 %v908, %v909
  %v911 = vtanh.pop %v910
  %v912 = vmul.f32 %v907, %v911
  %913 = vmatpush.msra.mxu0 %v622
  %914 = vmatpush.msra.mxu0 %v619
  %915 = vmatpush.msra.mxu0 %v616
  %916 = vmatpush.msra.mxu0 %v613
  %917 = vmatpush.msra.mxu0 %v610
  %918 = vmatpush.msra.mxu0 %v607
  %919 = vmatpush.msra.mxu0 %v604
  %920 = vmatpush.msra.mxu0 %v601
  %921 = vmatpush.msra.mxu0 %v598
  %922 = vmatpush.msra.mxu0 %v595
  %923 = vmatpush.msra.mxu0 %v592
  %924 = vmatpush.msra.mxu0 %v589
  %925 = vmatpush.msra.mxu0 %v586
  %926 = vmatpush.msra.mxu0 %v583
  %927 = vmatpush.msra.mxu0 %v580
  %928 = vmatpush.msra.mxu0 %v577
  %929 = vmatmul.f32.gmra.mxu0 0.0
  %v930 = vpop.f32.mrf.mxu0
  %v931 = vadd.f32 0.0, %v930
  %932 = vdwg.mxu0
  %933 = vmatpush.msra.mxu0 %v623
  %934 = vmatpush.msra.mxu0 %v620
  %935 = vmatpush.msra.mxu0 %v617
  %936 = vmatpush.msra.mxu0 %v614
  %937 = vmatpush.msra.mxu0 %v611
  %938 = vmatpush.msra.mxu0 %v608
  %939 = vmatpush.msra.mxu0 %v605
  %940 = vmatpush.msra.mxu0 %v602
  %941 = vmatpush.msra.mxu0 %v599
  %942 = vmatpush.msra.mxu0 %v596
  %943 = vmatpush.msra.mxu0 %v593
  %944 = vmatpush.msra.mxu0 %v590
  %945 = vmatpush.msra.mxu0 %v587
  %946 = vmatpush.msra.mxu0 %v584
  %947 = vmatpush.msra.mxu0 %v581
  %948 = vmatpush.msra.mxu0 %v578
  %949 = vmatmul.f32.gmra.mxu0 0.0
  %v950 = vpop.f32.mrf.mxu0
  %v951 = vadd.f32 0.0, %v950
  %952 = vdwg.mxu0
  %953 = vmatpush.msra.mxu0 %v624
  %954 = vmatpush.msra.mxu0 %v621
  %955 = vmatpush.msra.mxu0 %v618
  %956 = vmatpush.msra.mxu0 %v615
  %957 = vmatpush.msra.mxu0 %v612
  %958 = vmatpush.msra.mxu0 %v609
  %959 = vmatpush.msra.mxu0 %v606
  %960 = vmatpush.msra.mxu0 %v603
  %961 = vmatpush.msra.mxu0 %v600
  %962 = vmatpush.msra.mxu0 %v597
  %963 = vmatpush.msra.mxu0 %v594
  %964 = vmatpush.msra.mxu0 %v591
  %965 = vmatpush.msra.mxu0 %v588
  %966 = vmatpush.msra.mxu0 %v585
  %967 = vmatpush.msra.mxu0 %v582
  %968 = vmatpush.msra.mxu0 %v579
  %969 = vmatmul.f32.gmra.mxu0 0.0
  %v970 = vpop.f32.mrf.mxu0
  %v971 = vadd.f32 0.0, %v970
  %972 = vdwg.mxu0
  %973 = vmatpush.msra.mxu0 %v574
  %974 = vmatpush.msra.mxu0 %v571
  %975 = vmatpush.msra.mxu0 %v568
  %976 = vmatpush.msra.mxu0 %v565
  %977 = vmatpush.msra.mxu0 %v562
  %978 = vmatpush.msra.mxu0 %v559
  %979 = vmatpush.msra.mxu0 %v556
  %980 = vmatpush.msra.mxu0 %v553
  %981 = vmatpush.msra.mxu0 %v550
  %982 = vmatpush.msra.mxu0 %v547
  %983 = vmatpush.msra.mxu0 %v544
  %984 = vmatpush.msra.mxu0 %v541
  %985 = vmatpush.msra.mxu0 %v538
  %986 = vmatpush.msra.mxu0 %v535
  %987 = vmatpush.msra.mxu0 %v532
  %988 = vmatpush.msra.mxu0 %v529
  %989 = vmatmul.f32.gmra.mxu0 %v912
  %v990 = vpop.f32.mrf.mxu0
  %v991 = vadd.f32 %v931, %v990
  %992 = vdwg.mxu0
  %993 = vmatpush.msra.mxu0 %v575
  %994 = vmatpush.msra.mxu0 %v572
  %995 = vmatpush.msra.mxu0 %v569
  %996 = vmatpush.msra.mxu0 %v566
  %997 = vmatpush.msra.mxu0 %v563
  %998 = vmatpush.msra.mxu0 %v560
  %999 = vmatpush.msra.mxu0 %v557
  %1000 = vmatpush.msra.mxu0 %v554
  %1001 = vmatpush.msra.mxu0 %v551
  %1002 = vmatpush.msra.mxu0 %v548
  %1003 = vmatpush.msra.mxu0 %v545
  %1004 = vmatpush.msra.mxu0 %v542
  %1005 = vmatpush.msra.mxu0 %v539
  %1006 = vmatpush.msra.mxu0 %v536
  %1007 = vmatpush.msra.mxu0 %v533
  %1008 = vmatpush.msra.mxu0 %v530
  %1009 = vmatmul.f32.gmra.mxu0 %v912
  %v1010 = vpop.f32.mrf.mxu0
  %v1011 = vadd.f32 %v951, %v1010
  %1012 = vdwg.mxu0
  %1013 = vmatpush.msra.mxu0 %v576
  %1014 = vmatpush.msra.mxu0 %v573
  %1015 = vmatpush.msra.mxu0 %v570
  %1016 = vmatpush.msra.mxu0 %v567
  %1017 = vmatpush.msra.mxu0 %v564
  %1018 = vmatpush.msra.mxu0 %v561
  %1019 = vmatpush.msra.mxu0 %v558
  %1020 = vmatpush.msra.mxu0 %v555
  %1021 = vmatpush.msra.mxu0 %v552
  %1022 = vmatpush.msra.mxu0 %v549
  %1023 = vmatpush.msra.mxu0 %v546
  %1024 = vmatpush.msra.mxu0 %v543
  %1025 = vmatpush.msra.mxu0 %v540
  %1026 = vmatpush.msra.mxu0 %v537
  %1027 = vmatpush.msra.mxu0 %v534
  %1028 = vmatpush.msra.mxu0 %v531
  %1029 = vmatmul.f32.gmra.mxu0 %v912
  %v1030 = vpop.f32.mrf.mxu0
  %v1031 = vadd.f32 %v971, %v1030
  %1032 = vdwg.mxu0
  %v1033 = vadd.f32 %v991, %v331
  %v1034 = vadd.f32 %v1011, %v332
  %v1035 = vadd.f32 %v1031, %v333
  %v1036 = vmul.f32 %v1033, 0.5
  %v1037 = vtanh.pop %v1036
  %v1038 = vmul.f32 %v1037, 0.5
  %v1039 = vadd.f32 %v1038, 0.5
  %v1040 = vtanh.pop %v1034
  %v1041 = vmul.f32 %v1035, 0.5
  %v1042 = vtanh.pop %v1041
  %v1043 = vmul.f32 %v1042, 0.5
  %v1044 = vadd.f32 %v1043, 0.5
  %v1045 = vmul.f32 %v1039, %v1040
  %v1046 = vtanh.pop %v1045
  %v1047 = vmul.f32 %v1044, %v1046
  %1048 = vst [vmem:[#allocation3] sm:$0xff] %v1047
  %s1049 = scalar_lea.vmem [#allocation2], 32
  %v1050 = vld [vmem:[%s1049] sm:$0xff]
  %v1051 = vld [vmem:[%s1049 + $0x8] sm:$0xff]
  %v1052 = vld [vmem:[%s1049 + $0x10] sm:$0xff]
  %v1053 = vld [vmem:[%s1049 + $0x18] sm:$0xff]
  %1054 = vmatpush.msra.mxu0 %v397
  %1055 = vmatpush.msra.mxu0 %v393
  %1056 = vmatpush.msra.mxu0 %v389
  %1057 = vmatpush.msra.mxu0 %v385
  %1058 = vmatpush.msra.mxu0 %v381
  %1059 = vmatpush.msra.mxu0 %v377
  %1060 = vmatpush.msra.mxu0 %v373
  %1061 = vmatpush.msra.mxu0 %v369
  %1062 = vmatpush.msra.mxu0 %v365
  %1063 = vmatpush.msra.mxu0 %v361
  %1064 = vmatpush.msra.mxu0 %v357
  %1065 = vmatpush.msra.mxu0 %v353
  %1066 = vmatpush.msra.mxu0 %v349
  %1067 = vmatpush.msra.mxu0 %v345
  %1068 = vmatpush.msra.mxu0 %v341
  %1069 = vmatpush.msra.mxu0 %v337
  %1070 = vmatmul.f32.gmra.mxu0 %v730
  %v1071 = vpop.f32.mrf.mxu0
  %v1072 = vadd.f32 0.0, %v1071
  %1073 = vdwg.mxu0
  %1074 = vmatpush.msra.mxu0 %v398
  %1075 = vmatpush.msra.mxu0 %v394
  %1076 = vmatpush.msra.mxu0 %v390
  %1077 = vmatpush.msra.mxu0 %v386
  %1078 = vmatpush.msra.mxu0 %v382
  %1079 = vmatpush.msra.mxu0 %v378
  %1080 = vmatpush.msra.mxu0 %v374
  %1081 = vmatpush.msra.mxu0 %v370
  %1082 = vmatpush.msra.mxu0 %v366
  %1083 = vmatpush.msra.mxu0 %v362
  %1084 = vmatpush.msra.mxu0 %v358
  %1085 = vmatpush.msra.mxu0 %v354
  %1086 = vmatpush.msra.mxu0 %v350
  %1087 = vmatpush.msra.mxu0 %v346
  %1088 = vmatpush.msra.mxu0 %v342
  %1089 = vmatpush.msra.mxu0 %v338
  %1090 = vmatmul.f32.gmra.mxu0 %v730
  %v1091 = vpop.f32.mrf.mxu0
  %v1092 = vadd.f32 0.0, %v1091
  %1093 = vdwg.mxu0
  %1094 = vmatpush.msra.mxu0 %v399
  %1095 = vmatpush.msra.mxu0 %v395
  %1096 = vmatpush.msra.mxu0 %v391
  %1097 = vmatpush.msra.mxu0 %v387
  %1098 = vmatpush.msra.mxu0 %v383
  %1099 = vmatpush.msra.mxu0 %v379
  %1100 = vmatpush.msra.mxu0 %v375
  %1101 = vmatpush.msra.mxu0 %v371
  %1102 = vmatpush.msra.mxu0 %v367
  %1103 = vmatpush.msra.mxu0 %v363
  %1104 = vmatpush.msra.mxu0 %v359
  %1105 = vmatpush.msra.mxu0 %v355
  %1106 = vmatpush.msra.mxu0 %v351
  %1107 = vmatpush.msra.mxu0 %v347
  %1108 = vmatpush.msra.mxu0 %v343
  %1109 = vmatpush.msra.mxu0 %v339
  %1110 = vmatmul.f32.gmra.mxu0 %v730
  %v1111 = vpop.f32.mrf.mxu0
  %v1112 = vadd.f32 0.0, %v1111
  %1113 = vdwg.mxu0
  %1114 = vmatpush.msra.mxu0 %v400
  %1115 = vmatpush.msra.mxu0 %v396
  %1116 = vmatpush.msra.mxu0 %v392
  %1117 = vmatpush.msra.mxu0 %v388
  %1118 = vmatpush.msra.mxu0 %v384
  %1119 = vmatpush.msra.mxu0 %v380
  %1120 = vmatpush.msra.mxu0 %v376
  %1121 = vmatpush.msra.mxu0 %v372
  %1122 = vmatpush.msra.mxu0 %v368
  %1123 = vmatpush.msra.mxu0 %v364
  %1124 = vmatpush.msra.mxu0 %v360
  %1125 = vmatpush.msra.mxu0 %v356
  %1126 = vmatpush.msra.mxu0 %v352
  %1127 = vmatpush.msra.mxu0 %v348
  %1128 = vmatpush.msra.mxu0 %v344
  %1129 = vmatpush.msra.mxu0 %v340
  %1130 = vmatmul.f32.gmra.mxu0 %v730
  %v1131 = vpop.f32.mrf.mxu0
  %v1132 = vadd.f32 0.0, %v1131
  %1133 = vdwg.mxu0
  %v1134 = vadd.f32 %v1050, %v1072
  %v1135 = vadd.f32 %v1051, %v1092
  %v1136 = vadd.f32 %v1052, %v1112
  %v1137 = vadd.f32 %v1053, %v1132
  %v1138 = vmul.f32 %v1134, 0.5
  %v1139 = vtanh.pop %v1138
  %v1140 = vmul.f32 %v1139, 0.5
  %v1141 = vadd.f32 %v1140, 0.5
  %v1142 = vmul.f32 %v1135, 0.5
  %v1143 = vtanh.pop %v1142
  %v1144 = vmul.f32 %v1143, 0.5
  %v1145 = vadd.f32 %v1144, 0.5
  %v1146 = vtanh.pop %v1136
  %v1147 = vmul.f32 %v1137, 0.5
  %v1148 = vtanh.pop %v1147
  %v1149 = vmul.f32 %v1148, 0.5
  %v1150 = vadd.f32 %v1149, 0.5
  %v1151 = vmul.f32 %v1145, %v728
  %v1152 = vmul.f32 %v1141, %v1146
  %v1153 = vadd.f32 %v1151, %v1152
  %v1154 = vtanh.pop %v1153
  %v1155 = vmul.f32 %v1150, %v1154
  %1156 = vmatpush.msra.mxu0 %v525
  %1157 = vmatpush.msra.mxu0 %v521
  %1158 = vmatpush.msra.mxu0 %v517
  %1159 = vmatpush.msra.mxu0 %v513
  %1160 = vmatpush.msra.mxu0 %v509
  %1161 = vmatpush.msra.mxu0 %v505
  %1162 = vmatpush.msra.mxu0 %v501
  %1163 = vmatpush.msra.mxu0 %v497
  %1164 = vmatpush.msra.mxu0 %v493
  %1165 = vmatpush.msra.mxu0 %v489
  %1166 = vmatpush.msra.mxu0 %v485
  %1167 = vmatpush.msra.mxu0 %v481
  %1168 = vmatpush.msra.mxu0 %v477
  %1169 = vmatpush.msra.mxu0 %v473
  %1170 = vmatpush.msra.mxu0 %v469
  %1171 = vmatpush.msra.mxu0 %v465
  %1172 = vmatmul.f32.gmra.mxu0 %v912
  %v1173 = vpop.f32.mrf.mxu0
  %v1174 = vadd.f32 0.0, %v1173
  %1175 = vdwg.mxu0
  %1176 = vmatpush.msra.mxu0 %v526
  %1177 = vmatpush.msra.mxu0 %v522
  %1178 = vmatpush.msra.mxu0 %v518
  %1179 = vmatpush.msra.mxu0 %v514
  %1180 = vmatpush.msra.mxu0 %v510
  %1181 = vmatpush.msra.mxu0 %v506
  %1182 = vmatpush.msra.mxu0 %v502
  %1183 = vmatpush.msra.mxu0 %v498
  %1184 = vmatpush.msra.mxu0 %v494
  %1185 = vmatpush.msra.mxu0 %v490
  %1186 = vmatpush.msra.mxu0 %v486
  %1187 = vmatpush.msra.mxu0 %v482
  %1188 = vmatpush.msra.mxu0 %v478
  %1189 = vmatpush.msra.mxu0 %v474
  %1190 = vmatpush.msra.mxu0 %v470
  %1191 = vmatpush.msra.mxu0 %v466
  %1192 = vmatmul.f32.gmra.mxu0 %v912
  %v1193 = vpop.f32.mrf.mxu0
  %v1194 = vadd.f32 0.0, %v1193
  %1195 = vdwg.mxu0
  %1196 = vmatpush.msra.mxu0 %v527
  %1197 = vmatpush.msra.mxu0 %v523
  %1198 = vmatpush.msra.mxu0 %v519
  %1199 = vmatpush.msra.mxu0 %v515
  %1200 = vmatpush.msra.mxu0 %v511
  %1201 = vmatpush.msra.mxu0 %v507
  %1202 = vmatpush.msra.mxu0 %v503
  %1203 = vmatpush.msra.mxu0 %v499
  %1204 = vmatpush.msra.mxu0 %v495
  %1205 = vmatpush.msra.mxu0 %v491
  %1206 = vmatpush.msra.mxu0 %v487
  %1207 = vmatpush.msra.mxu0 %v483
  %1208 = vmatpush.msra.mxu0 %v479
  %1209 = vmatpush.msra.mxu0 %v475
  %1210 = vmatpush.msra.mxu0 %v471
  %1211 = vmatpush.msra.mxu0 %v467
  %1212 = vmatmul.f32.gmra.mxu0 %v912
  %v1213 = vpop.f32.mrf.mxu0
  %v1214 = vadd.f32 0.0, %v1213
  %1215 = vdwg.mxu0
  %1216 = vmatpush.msra.mxu0 %v528
  %1217 = vmatpush.msra.mxu0 %v524
  %1218 = vmatpush.msra.mxu0 %v520
  %1219 = vmatpush.msra.mxu0 %v516
  %1220 = vmatpush.msra.mxu0 %v512
  %1221 = vmatpush.msra.mxu0 %v508
  %1222 = vmatpush.msra.mxu0 %v504
  %1223 = vmatpush.msra.mxu0 %v500
  %1224 = vmatpush.msra.mxu0 %v496
  %1225 = vmatpush.msra.mxu0 %v492
  %1226 = vmatpush.msra.mxu0 %v488
  %1227 = vmatpush.msra.mxu0 %v484
  %1228 = vmatpush.msra.mxu0 %v480
  %1229 = vmatpush.msra.mxu0 %v476
  %1230 = vmatpush.msra.mxu0 %v472
  %1231 = vmatpush.msra.mxu0 %v468
  %1232 = vmatmul.f32.gmra.mxu0 %v912
  %v1233 = vpop.f32.mrf.mxu0
  %v1234 = vadd.f32 0.0, %v1233
  %1235 = vdwg.mxu0
  %1236 = vmatpush.msra.mxu0 %v461
  %1237 = vmatpush.msra.mxu0 %v457
  %1238 = vmatpush.msra.mxu0 %v453
  %1239 = vmatpush.msra.mxu0 %v449
  %1240 = vmatpush.msra.mxu0 %v445
  %1241 = vmatpush.msra.mxu0 %v441
  %1242 = vmatpush.msra.mxu0 %v437
  %1243 = vmatpush.msra.mxu0 %v433
  %1244 = vmatpush.msra.mxu0 %v429
  %1245 = vmatpush.msra.mxu0 %v425
  %1246 = vmatpush.msra.mxu0 %v421
  %1247 = vmatpush.msra.mxu0 %v417
  %1248 = vmatpush.msra.mxu0 %v413
  %1249 = vmatpush.msra.mxu0 %v409
  %1250 = vmatpush.msra.mxu0 %v405
  %1251 = vmatpush.msra.mxu0 %v401
  %1252 = vmatmul.f32.gmra.mxu0 %v1155
  %v1253 = vpop.f32.mrf.mxu0
  %v1254 = vadd.f32 %v1174, %v1253
  %1255 = vdwg.mxu0
  %1256 = vmatpush.msra.mxu0 %v462
  %1257 = vmatpush.msra.mxu0 %v458
  %1258 = vmatpush.msra.mxu0 %v454
  %1259 = vmatpush.msra.mxu0 %v450
  %1260 = vmatpush.msra.mxu0 %v446
  %1261 = vmatpush.msra.mxu0 %v442
  %1262 = vmatpush.msra.mxu0 %v438
  %1263 = vmatpush.msra.mxu0 %v434
  %1264 = vmatpush.msra.mxu0 %v430
  %1265 = vmatpush.msra.mxu0 %v426
  %1266 = vmatpush.msra.mxu0 %v422
  %1267 = vmatpush.msra.mxu0 %v418
  %1268 = vmatpush.msra.mxu0 %v414
  %1269 = vmatpush.msra.mxu0 %v410
  %1270 = vmatpush.msra.mxu0 %v406
  %1271 = vmatpush.msra.mxu0 %v402
  %1272 = vmatmul.f32.gmra.mxu0 %v1155
  %v1273 = vpop.f32.mrf.mxu0
  %v1274 = vadd.f32 %v1194, %v1273
  %1275 = vdwg.mxu0
  %1276 = vmatpush.msra.mxu0 %v463
  %1277 = vmatpush.msra.mxu0 %v459
  %1278 = vmatpush.msra.mxu0 %v455
  %1279 = vmatpush.msra.mxu0 %v451
  %1280 = vmatpush.msra.mxu0 %v447
  %1281 = vmatpush.msra.mxu0 %v443
  %1282 = vmatpush.msra.mxu0 %v439
  %1283 = vmatpush.msra.mxu0 %v435
  %1284 = vmatpush.msra.mxu0 %v431
  %1285 = vmatpush.msra.mxu0 %v427
  %1286 = vmatpush.msra.mxu0 %v423
  %1287 = vmatpush.msra.mxu0 %v419
  %1288 = vmatpush.msra.mxu0 %v415
  %1289 = vmatpush.msra.mxu0 %v411
  %1290 = vmatpush.msra.mxu0 %v407
  %1291 = vmatpush.msra.mxu0 %v403
  %1292 = vmatmul.f32.gmra.mxu0 %v1155
  %v1293 = vpop.f32.mrf.mxu0
  %v1294 = vadd.f32 %v1214, %v1293
  %1295 = vdwg.mxu0
  %1296 = vmatpush.msra.mxu0 %v464
  %1297 = vmatpush.msra.mxu0 %v460
  %1298 = vmatpush.msra.mxu0 %v456
  %1299 = vmatpush.msra.mxu0 %v452
  %1300 = vmatpush.msra.mxu0 %v448
  %1301 = vmatpush.msra.mxu0 %v444
  %1302 = vmatpush.msra.mxu0 %v440
  %1303 = vmatpush.msra.mxu0 %v436
  %1304 = vmatpush.msra.mxu0 %v432
  %1305 = vmatpush.msra.mxu0 %v428
  %1306 = vmatpush.msra.mxu0 %v424
  %1307 = vmatpush.msra.mxu0 %v420
  %1308 = vmatpush.msra.mxu0 %v416
  %1309 = vmatpush.msra.mxu0 %v412
  %1310 = vmatpush.msra.mxu0 %v408
  %1311 = vmatpush.msra.mxu0 %v404
  %1312 = vmatmul.f32.gmra.mxu0 %v1155
  %v1313 = vpop.f32.mrf.mxu0
  %v1314 = vadd.f32 %v1234, %v1313
  %1315 = vdwg.mxu0
  %v1316 = vadd.f32 %v1254, %v321
  %v1317 = vadd.f32 %v1274, %v322
  %v1318 = vadd.f32 %v1294, %v323
  %v1319 = vadd.f32 %v1314, %v324
  %v1320 = vmul.f32 %v1316, 0.5
  %v1321 = vtanh.pop %v1320
  %v1322 = vmul.f32 %v1321, 0.5
  %v1323 = vadd.f32 %v1322, 0.5
  %v1324 = vmul.f32 %v1317, 0.5
  %v1325 = vtanh.pop %v1324
  %v1326 = vmul.f32 %v1325, 0.5
  %v1327 = vadd.f32 %v1326, 0.5
  %v1328 = vtanh.pop %v1318
  %v1329 = vmul.f32 %v1319, 0.5
  %v1330 = vtanh.pop %v1329
  %v1331 = vmul.f32 %v1330, 0.5
  %v1332 = vadd.f32 %v1331, 0.5
  %v1333 = vmul.f32 %v1327, %v1045
  %v1334 = vmul.f32 %v1323, %v1328
  %v1335 = vadd.f32 %v1333, %v1334
  %v1336 = vtanh.pop %v1335
  %v1337 = vmul.f32 %v1332, %v1336
  %1338 = vmatpush.msra.mxu0 %v622
  %1339 = vmatpush.msra.mxu0 %v619
  %1340 = vmatpush.msra.mxu0 %v616
  %1341 = vmatpush.msra.mxu0 %v613
  %1342 = vmatpush.msra.mxu0 %v610
  %1343 = vmatpush.msra.mxu0 %v607
  %1344 = vmatpush.msra.mxu0 %v604
  %1345 = vmatpush.msra.mxu0 %v601
  %1346 = vmatpush.msra.mxu0 %v598
  %1347 = vmatpush.msra.mxu0 %v595
  %1348 = vmatpush.msra.mxu0 %v592
  %1349 = vmatpush.msra.mxu0 %v589
  %1350 = vmatpush.msra.mxu0 %v586
  %1351 = vmatpush.msra.mxu0 %v583
  %1352 = vmatpush.msra.mxu0 %v580
  %1353 = vmatpush.msra.mxu0 %v577
  %1354 = vmatmul.f32.gmra.mxu0 %v1047
  %v1355 = vpop.f32.mrf.mxu0
  %v1356 = vadd.f32 0.0, %v1355
  %1357 = vdwg.mxu0
  %1358 = vmatpush.msra.mxu0 %v623
  %1359 = vmatpush.msra.mxu0 %v620
  %1360 = vmatpush.msra.mxu0 %v617
  %1361 = vmatpush.msra.mxu0 %v614
  %1362 = vmatpush.msra.mxu0 %v611
  %1363 = vmatpush.msra.mxu0 %v608
  %1364 = vmatpush.msra.mxu0 %v605
  %1365 = vmatpush.msra.mxu0 %v602
  %1366 = vmatpush.msra.mxu0 %v599
  %1367 = vmatpush.msra.mxu0 %v596
  %1368 = vmatpush.msra.mxu0 %v593
  %1369 = vmatpush.msra.mxu0 %v590
  %1370 = vmatpush.msra.mxu0 %v587
  %1371 = vmatpush.msra.mxu0 %v584
  %1372 = vmatpush.msra.mxu0 %v581
  %1373 = vmatpush.msra.mxu0 %v578
  %1374 = vmatmul.f32.gmra.mxu0 %v1047
  %v1375 = vpop.f32.mrf.mxu0
  %v1376 = vadd.f32 0.0, %v1375
  %1377 = vdwg.mxu0
  %1378 = vmatpush.msra.mxu0 %v624
  %1379 = vmatpush.msra.mxu0 %v621
  %1380 = vmatpush.msra.mxu0 %v618
  %1381 = vmatpush.msra.mxu0 %v615
  %1382 = vmatpush.msra.mxu0 %v612
  %1383 = vmatpush.msra.mxu0 %v609
  %1384 = vmatpush.msra.mxu0 %v606
  %1385 = vmatpush.msra.mxu0 %v603
  %1386 = vmatpush.msra.mxu0 %v600
  %1387 = vmatpush.msra.mxu0 %v597
  %1388 = vmatpush.msra.mxu0 %v594
  %1389 = vmatpush.msra.mxu0 %v591
  %1390 = vmatpush.msra.mxu0 %v588
  %1391 = vmatpush.msra.mxu0 %v585
  %1392 = vmatpush.msra.mxu0 %v582
  %1393 = vmatpush.msra.mxu0 %v579
  %1394 = vmatmul.f32.gmra.mxu0 %v1047
  %v1395 = vpop.f32.mrf.mxu0
  %v1396 = vadd.f32 0.0, %v1395
  %1397 = vdwg.mxu0
  %1398 = vmatpush.msra.mxu0 %v574
  %1399 = vmatpush.msra.mxu0 %v571
  %1400 = vmatpush.msra.mxu0 %v568
  %1401 = vmatpush.msra.mxu0 %v565
  %1402 = vmatpush.msra.mxu0 %v562
  %1403 = vmatpush.msra.mxu0 %v559
  %1404 = vmatpush.msra.mxu0 %v556
  %1405 = vmatpush.msra.mxu0 %v553
  %1406 = vmatpush.msra.mxu0 %v550
  %1407 = vmatpush.msra.mxu0 %v547
  %1408 = vmatpush.msra.mxu0 %v544
  %1409 = vmatpush.msra.mxu0 %v541
  %1410 = vmatpush.msra.mxu0 %v538
  %1411 = vmatpush.msra.mxu0 %v535
  %1412 = vmatpush.msra.mxu0 %v532
  %1413 = vmatpush.msra.mxu0 %v529
  %1414 = vmatmul.f32.gmra.mxu0 %v1337
  %v1415 = vpop.f32.mrf.mxu0
  %v1416 = vadd.f32 %v1356, %v1415
  %1417 = vdwg.mxu0
  %1418 = vmatpush.msra.mxu0 %v575
  %1419 = vmatpush.msra.mxu0 %v572
  %1420 = vmatpush.msra.mxu0 %v569
  %1421 = vmatpush.msra.mxu0 %v566
  %1422 = vmatpush.msra.mxu0 %v563
  %1423 = vmatpush.msra.mxu0 %v560
  %1424 = vmatpush.msra.mxu0 %v557
  %1425 = vmatpush.msra.mxu0 %v554
  %1426 = vmatpush.msra.mxu0 %v551
  %1427 = vmatpush.msra.mxu0 %v548
  %1428 = vmatpush.msra.mxu0 %v545
  %1429 = vmatpush.msra.mxu0 %v542
  %1430 = vmatpush.msra.mxu0 %v539
  %1431 = vmatpush.msra.mxu0 %v536
  %1432 = vmatpush.msra.mxu0 %v533
  %1433 = vmatpush.msra.mxu0 %v530
  %1434 = vmatmul.f32.gmra.mxu0 %v1337
  %v1435 = vpop.f32.mrf.mxu0
  %v1436 = vadd.f32 %v1376, %v1435
  %1437 = vdwg.mxu0
  %1438 = vmatpush.msra.mxu0 %v576
  %1439 = vmatpush.msra.mxu0 %v573
  %1440 = vmatpush.msra.mxu0 %v570
  %1441 = vmatpush.msra.mxu0 %v567
  %1442 = vmatpush.msra.mxu0 %v564
  %1443 = vmatpush.msra.mxu0 %v561
  %1444 = vmatpush.msra.mxu0 %v558
  %1445 = vmatpush.msra.mxu0 %v555
  %1446 = vmatpush.msra.mxu0 %v552
  %1447 = vmatpush.msra.mxu0 %v549
  %1448 = vmatpush.msra.mxu0 %v546
  %1449 = vmatpush.msra.mxu0 %v543
  %1450 = vmatpush.msra.mxu0 %v540
  %1451 = vmatpush.msra.mxu0 %v537
  %1452 = vmatpush.msra.mxu0 %v534
  %1453 = vmatpush.msra.mxu0 %v531
  %1454 = vmatmul.f32.gmra.mxu0 %v1337
  %v1455 = vpop.f32.mrf.mxu0
  %v1456 = vadd.f32 %v1396, %v1455
  %1457 = vdwg.mxu0
  %v1458 = vadd.f32 %v1416, %v331
  %v1459 = vadd.f32 %v1436, %v332
  %v1460 = vadd.f32 %v1456, %v333
  %v1461 = vmul.f32 %v1458, 0.5
  %v1462 = vtanh.pop %v1461
  %v1463 = vmul.f32 %v1462, 0.5
  %v1464 = vadd.f32 %v1463, 0.5
  %v1465 = vtanh.pop %v1459
  %v1466 = vmul.f32 %v1460, 0.5
  %v1467 = vtanh.pop %v1466
  %v1468 = vmul.f32 %v1467, 0.5
  %v1469 = vadd.f32 %v1468, 0.5
  %v1470 = vmul.f32 %v1464, %v1465
  %v1471 = vtanh.pop %v1470
  %v1472 = vmul.f32 %v1469, %v1471
  %s1473 = scalar_lea.vmem [#allocation3], 8
  %1474 = vst [vmem:[%s1473] sm:$0xff] %v1472
  %s1475 = scalar_lea.vmem [#allocation2], 64
  %v1476 = vld [vmem:[%s1475] sm:$0xff]
  %v1477 = vld [vmem:[%s1475 + $0x8] sm:$0xff]
  %v1478 = vld [vmem:[%s1475 + $0x10] sm:$0xff]
  %v1479 = vld [vmem:[%s1475 + $0x18] sm:$0xff]
  %1480 = vmatpush.msra.mxu0 %v397
  %1481 = vmatpush.msra.mxu0 %v393
  %1482 = vmatpush.msra.mxu0 %v389
  %1483 = vmatpush.msra.mxu0 %v385
  %1484 = vmatpush.msra.mxu0 %v381
  %1485 = vmatpush.msra.mxu0 %v377
  %1486 = vmatpush.msra.mxu0 %v373
  %1487 = vmatpush.msra.mxu0 %v369
  %1488 = vmatpush.msra.mxu0 %v365
  %1489 = vmatpush.msra.mxu0 %v361
  %1490 = vmatpush.msra.mxu0 %v357
  %1491 = vmatpush.msra.mxu0 %v353
  %1492 = vmatpush.msra.mxu0 %v349
  %1493 = vmatpush.msra.mxu0 %v345
  %1494 = vmatpush.msra.mxu0 %v341
  %1495 = vmatpush.msra.mxu0 %v337
  %1496 = vmatmul.f32.gmra.mxu0 %v1155
  %v1497 = vpop.f32.mrf.mxu0
  %v1498 = vadd.f32 0.0, %v1497
  %1499 = vdwg.mxu0
  %1500 = vmatpush.msra.mxu0 %v398
  %1501 = vmatpush.msra.mxu0 %v394
  %1502 = vmatpush.msra.mxu0 %v390
  %1503 = vmatpush.msra.mxu0 %v386
  %1504 = vmatpush.msra.mxu0 %v382
  %1505 = vmatpush.msra.mxu0 %v378
  %1506 = vmatpush.msra.mxu0 %v374
  %1507 = vmatpush.msra.mxu0 %v370
  %1508 = vmatpush.msra.mxu0 %v366
  %1509 = vmatpush.msra.mxu0 %v362
  %1510 = vmatpush.msra.mxu0 %v358
  %1511 = vmatpush.msra.mxu0 %v354
  %1512 = vmatpush.msra.mxu0 %v350
  %1513 = vmatpush.msra.mxu0 %v346
  %1514 = vmatpush.msra.mxu0 %v342
  %1515 = vmatpush.msra.mxu0 %v338
  %1516 = vmatmul.f32.gmra.mxu0 %v1155
  %v1517 = vpop.f32.mrf.mxu0
  %v1518 = vadd.f32 0.0, %v1517
  %1519 = vdwg.mxu0
  %1520 = vmatpush.msra.mxu0 %v399
  %1521 = vmatpush.msra.mxu0 %v395
  %1522 = vmatpush.msra.mxu0 %v391
  %1523 = vmatpush.msra.mxu0 %v387
  %1524 = vmatpush.msra.mxu0 %v383
  %1525 = vmatpush.msra.mxu0 %v379
  %1526 = vmatpush.msra.mxu0 %v375
  %1527 = vmatpush.msra.mxu0 %v371
  %1528 = vmatpush.msra.mxu0 %v367
  %1529 = vmatpush.msra.mxu0 %v363
  %1530 = vmatpush.msra.mxu0 %v359
  %1531 = vmatpush.msra.mxu0 %v355
  %1532 = vmatpush.msra.mxu0 %v351
  %1533 = vmatpush.msra.mxu0 %v347
  %1534 = vmatpush.msra.mxu0 %v343
  %1535 = vmatpush.msra.mxu0 %v339
  %1536 = vmatmul.f32.gmra.mxu0 %v1155
  %v1537 = vpop.f32.mrf.mxu0
  %v1538 = vadd.f32 0.0, %v1537
  %1539 = vdwg.mxu0
  %1540 = vmatpush.msra.mxu0 %v400
  %1541 = vmatpush.msra.mxu0 %v396
  %1542 = vmatpush.msra.mxu0 %v392
  %1543 = vmatpush.msra.mxu0 %v388
  %1544 = vmatpush.msra.mxu0 %v384
  %1545 = vmatpush.msra.mxu0 %v380
  %1546 = vmatpush.msra.mxu0 %v376
  %1547 = vmatpush.msra.mxu0 %v372
  %1548 = vmatpush.msra.mxu0 %v368
  %1549 = vmatpush.msra.mxu0 %v364
  %1550 = vmatpush.msra.mxu0 %v360
  %1551 = vmatpush.msra.mxu0 %v356
  %1552 = vmatpush.msra.mxu0 %v352
  %1553 = vmatpush.msra.mxu0 %v348
  %1554 = vmatpush.msra.mxu0 %v344
  %1555 = vmatpush.msra.mxu0 %v340
  %1556 = vmatmul.f32.gmra.mxu0 %v1155
  %v1557 = vpop.f32.mrf.mxu0
  %v1558 = vadd.f32 0.0, %v1557
  %1559 = vdwg.mxu0
  %v1560 = vadd.f32 %v1476, %v1498
  %v1561 = vadd.f32 %v1477, %v1518
  %v1562 = vadd.f32 %v1478, %v1538
  %v1563 = vadd.f32 %v1479, %v1558
  %v1564 = vmul.f32 %v1560, 0.5
  %v1565 = vtanh.pop %v1564
  %v1566 = vmul.f32 %v1565, 0.5
  %v1567 = vadd.f32 %v1566, 0.5
  %v1568 = vmul.f32 %v1561, 0.5
  %v1569 = vtanh.pop %v1568
  %v1570 = vmul.f32 %v1569, 0.5
  %v1571 = vadd.f32 %v1570, 0.5
  %v1572 = vtanh.pop %v1562
  %v1573 = vmul.f32 %v1563, 0.5
  %v1574 = vtanh.pop %v1573
  %v1575 = vmul.f32 %v1574, 0.5
  %v1576 = vadd.f32 %v1575, 0.5
  %v1577 = vmul.f32 %v1571, %v1153
  %v1578 = vmul.f32 %v1567, %v1572
  %v1579 = vadd.f32 %v1577, %v1578
  %v1580 = vtanh.pop %v1579
  %v1581 = vmul.f32 %v1576, %v1580
  %1582 = vmatpush.msra.mxu0 %v525
  %1583 = vmatpush.msra.mxu0 %v521
  %1584 = vmatpush.msra.mxu0 %v517
  %1585 = vmatpush.msra.mxu0 %v513
  %1586 = vmatpush.msra.mxu0 %v509
  %1587 = vmatpush.msra.mxu0 %v505
  %1588 = vmatpush.msra.mxu0 %v501
  %1589 = vmatpush.msra.mxu0 %v497
  %1590 = vmatpush.msra.mxu0 %v493
  %1591 = vmatpush.msra.mxu0 %v489
  %1592 = vmatpush.msra.mxu0 %v485
  %1593 = vmatpush.msra.mxu0 %v481
  %1594 = vmatpush.msra.mxu0 %v477
  %1595 = vmatpush.msra.mxu0 %v473
  %1596 = vmatpush.msra.mxu0 %v469
  %1597 = vmatpush.msra.mxu0 %v465
  %1598 = vmatmul.f32.gmra.mxu0 %v1337
  %v1599 = vpop.f32.mrf.mxu0
  %v1600 = vadd.f32 0.0, %v1599
  %1601 = vdwg.mxu0
  %1602 = vmatpush.msra.mxu0 %v526
  %1603 = vmatpush.msra.mxu0 %v522
  %1604 = vmatpush.msra.mxu0 %v518
  %1605 = vmatpush.msra.mxu0 %v514
  %1606 = vmatpush.msra.mxu0 %v510
  %1607 = vmatpush.msra.mxu0 %v506
  %1608 = vmatpush.msra.mxu0 %v502
  %1609 = vmatpush.msra.mxu0 %v498
  %1610 = vmatpush.msra.mxu0 %v494
  %1611 = vmatpush.msra.mxu0 %v490
  %1612 = vmatpush.msra.mxu0 %v486
  %1613 = vmatpush.msra.mxu0 %v482
  %1614 = vmatpush.msra.mxu0 %v478
  %1615 = vmatpush.msra.mxu0 %v474
  %1616 = vmatpush.msra.mxu0 %v470
  %1617 = vmatpush.msra.mxu0 %v466
  %1618 = vmatmul.f32.gmra.mxu0 %v1337
  %v1619 = vpop.f32.mrf.mxu0
  %v1620 = vadd.f32 0.0, %v1619
  %1621 = vdwg.mxu0
  %1622 = vmatpush.msra.mxu0 %v527
  %1623 = vmatpush.msra.mxu0 %v523
  %1624 = vmatpush.msra.mxu0 %v519
  %1625 = vmatpush.msra.mxu0 %v515
  %1626 = vmatpush.msra.mxu0 %v511
  %1627 = vmatpush.msra.mxu0 %v507
  %1628 = vmatpush.msra.mxu0 %v503
  %1629 = vmatpush.msra.mxu0 %v499
  %1630 = vmatpush.msra.mxu0 %v495
  %1631 = vmatpush.msra.mxu0 %v491
  %1632 = vmatpush.msra.mxu0 %v487
  %1633 = vmatpush.msra.mxu0 %v483
  %1634 = vmatpush.msra.mxu0 %v479
  %1635 = vmatpush.msra.mxu0 %v475
  %1636 = vmatpush.msra.mxu0 %v471
  %1637 = vmatpush.msra.mxu0 %v467
  %1638 = vmatmul.f32.gmra.mxu0 %v1337
  %v1639 = vpop.f32.mrf.mxu0
  %v1640 = vadd.f32 0.0, %v1639
  %1641 = vdwg.mxu0
  %1642 = vmatpush.msra.mxu0 %v528
  %1643 = vmatpush.msra.mxu0 %v524
  %1644 = vmatpush.msra.mxu0 %v520
  %1645 = vmatpush.msra.mxu0 %v516
  %1646 = vmatpush.msra.mxu0 %v512
  %1647 = vmatpush.msra.mxu0 %v508
  %1648 = vmatpush.msra.mxu0 %v504
  %1649 = vmatpush.msra.mxu0 %v500
  %1650 = vmatpush.msra.mxu0 %v496
  %1651 = vmatpush.msra.mxu0 %v492
  %1652 = vmatpush.msra.mxu0 %v488
  %1653 = vmatpush.msra.mxu0 %v484
  %1654 = vmatpush.msra.mxu0 %v480
  %1655 = vmatpush.msra.mxu0 %v476
  %1656 = vmatpush.msra.mxu0 %v472
  %1657 = vmatpush.msra.mxu0 %v468
  %1658 = vmatmul.f32.gmra.mxu0 %v1337
  %v1659 = vpop.f32.mrf.mxu0
  %v1660 = vadd.f32 0.0, %v1659
  %1661 = vdwg.mxu0
  %1662 = vmatpush.msra.mxu0 %v461
  %1663 = vmatpush.msra.mxu0 %v457
  %1664 = vmatpush.msra.mxu0 %v453
  %1665 = vmatpush.msra.mxu0 %v449
  %1666 = vmatpush.msra.mxu0 %v445
  %1667 = vmatpush.msra.mxu0 %v441
  %1668 = vmatpush.msra.mxu0 %v437
  %1669 = vmatpush.msra.mxu0 %v433
  %1670 = vmatpush.msra.mxu0 %v429
  %1671 = vmatpush.msra.mxu0 %v425
  %1672 = vmatpush.msra.mxu0 %v421
  %1673 = vmatpush.msra.mxu0 %v417
  %1674 = vmatpush.msra.mxu0 %v413
  %1675 = vmatpush.msra.mxu0 %v409
  %1676 = vmatpush.msra.mxu0 %v405
  %1677 = vmatpush.msra.mxu0 %v401
  %1678 = vmatmul.f32.gmra.mxu0 %v1581
  %v1679 = vpop.f32.mrf.mxu0
  %v1680 = vadd.f32 %v1600, %v1679
  %1681 = vdwg.mxu0
  %1682 = vmatpush.msra.mxu0 %v462
  %1683 = vmatpush.msra.mxu0 %v458
  %1684 = vmatpush.msra.mxu0 %v454
  %1685 = vmatpush.msra.mxu0 %v450
  %1686 = vmatpush.msra.mxu0 %v446
  %1687 = vmatpush.msra.mxu0 %v442
  %1688 = vmatpush.msra.mxu0 %v438
  %1689 = vmatpush.msra.mxu0 %v434
  %1690 = vmatpush.msra.mxu0 %v430
  %1691 = vmatpush.msra.mxu0 %v426
  %1692 = vmatpush.msra.mxu0 %v422
  %1693 = vmatpush.msra.mxu0 %v418
  %1694 = vmatpush.msra.mxu0 %v414
  %1695 = vmatpush.msra.mxu0 %v410
  %1696 = vmatpush.msra.mxu0 %v406
  %1697 = vmatpush.msra.mxu0 %v402
  %1698 = vmatmul.f32.gmra.mxu0 %v1581
  %v1699 = vpop.f32.mrf.mxu0
  %v1700 = vadd.f32 %v1620, %v1699
  %1701 = vdwg.mxu0
  %1702 = vmatpush.msra.mxu0 %v463
  %1703 = vmatpush.msra.mxu0 %v459
  %1704 = vmatpush.msra.mxu0 %v455
  %1705 = vmatpush.msra.mxu0 %v451
  %1706 = vmatpush.msra.mxu0 %v447
  %1707 = vmatpush.msra.mxu0 %v443
  %1708 = vmatpush.msra.mxu0 %v439
  %1709 = vmatpush.msra.mxu0 %v435
  %1710 = vmatpush.msra.mxu0 %v431
  %1711 = vmatpush.msra.mxu0 %v427
  %1712 = vmatpush.msra.mxu0 %v423
  %1713 = vmatpush.msra.mxu0 %v419
  %1714 = vmatpush.msra.mxu0 %v415
  %1715 = vmatpush.msra.mxu0 %v411
  %1716 = vmatpush.msra.mxu0 %v407
  %1717 = vmatpush.msra.mxu0 %v403
  %1718 = vmatmul.f32.gmra.mxu0 %v1581
  %v1719 = vpop.f32.mrf.mxu0
  %v1720 = vadd.f32 %v1640, %v1719
  %1721 = vdwg.mxu0
  %1722 = vmatpush.msra.mxu0 %v464
  %1723 = vmatpush.msra.mxu0 %v460
  %1724 = vmatpush.msra.mxu0 %v456
  %1725 = vmatpush.msra.mxu0 %v452
  %1726 = vmatpush.msra.mxu0 %v448
  %1727 = vmatpush.msra.mxu0 %v444
  %1728 = vmatpush.msra.mxu0 %v440
  %1729 = vmatpush.msra.mxu0 %v436
  %1730 = vmatpush.msra.mxu0 %v432
  %1731 = vmatpush.msra.mxu0 %v428
  %1732 = vmatpush.msra.mxu0 %v424
  %1733 = vmatpush.msra.mxu0 %v420
  %1734 = vmatpush.msra.mxu0 %v416
  %1735 = vmatpush.msra.mxu0 %v412
  %1736 = vmatpush.msra.mxu0 %v408
  %1737 = vmatpush.msra.mxu0 %v404
  %1738 = vmatmul.f32.gmra.mxu0 %v1581
  %v1739 = vpop.f32.mrf.mxu0
  %v1740 = vadd.f32 %v1660, %v1739
  %1741 = vdwg.mxu0
  %v1742 = vadd.f32 %v1680, %v321
  %v1743 = vadd.f32 %v1700, %v322
  %v1744 = vadd.f32 %v1720, %v323
  %v1745 = vadd.f32 %v1740, %v324
  %v1746 = vmul.f32 %v1742, 0.5
  %v1747 = vtanh.pop %v1746
  %v1748 = vmul.f32 %v1747, 0.5
  %v1749 = vadd.f32 %v1748, 0.5
  %v1750 = vmul.f32 %v1743, 0.5
  %v1751 = vtanh.pop %v1750
  %v1752 = vmul.f32 %v1751, 0.5
  %v1753 = vadd.f32 %v1752, 0.5
  %v1754 = vtanh.pop %v1744
  %v1755 = vmul.f32 %v1745, 0.5
  %v1756 = vtanh.pop %v1755
  %v1757 = vmul.f32 %v1756, 0.5
  %v1758 = vadd.f32 %v1757, 0.5
  %v1759 = vmul.f32 %v1753, %v1470
  %v1760 = vmul.f32 %v1749, %v1754
  %v1761 = vadd.f32 %v1759, %v1760
  %v1762 = vtanh.pop %v1761
  %v1763 = vmul.f32 %v1758, %v1762
  %1764 = vmatpush.msra.mxu0 %v622
  %1765 = vmatpush.msra.mxu0 %v619
  %1766 = vmatpush.msra.mxu0 %v616
  %1767 = vmatpush.msra.mxu0 %v613
  %1768 = vmatpush.msra.mxu0 %v610
  %1769 = vmatpush.msra.mxu0 %v607
  %1770 = vmatpush.msra.mxu0 %v604
  %1771 = vmatpush.msra.mxu0 %v601
  %1772 = vmatpush.msra.mxu0 %v598
  %1773 = vmatpush.msra.mxu0 %v595
  %1774 = vmatpush.msra.mxu0 %v592
  %1775 = vmatpush.msra.mxu0 %v589
  %1776 = vmatpush.msra.mxu0 %v586
  %1777 = vmatpush.msra.mxu0 %v583
  %1778 = vmatpush.msra.mxu0 %v580
  %1779 = vmatpush.msra.mxu0 %v577
  %1780 = vmatmul.f32.gmra.mxu0 %v1472
  %v1781 = vpop.f32.mrf.mxu0
  %v1782 = vadd.f32 0.0, %v1781
  %1783 = vdwg.mxu0
  %1784 = vmatpush.msra.mxu0 %v623
  %1785 = vmatpush.msra.mxu0 %v620
  %1786 = vmatpush.msra.mxu0 %v617
  %1787 = vmatpush.msra.mxu0 %v614
  %1788 = vmatpush.msra.mxu0 %v611
  %1789 = vmatpush.msra.mxu0 %v608
  %1790 = vmatpush.msra.mxu0 %v605
  %1791 = vmatpush.msra.mxu0 %v602
  %1792 = vmatpush.msra.mxu0 %v599
  %1793 = vmatpush.msra.mxu0 %v596
  %1794 = vmatpush.msra.mxu0 %v593
  %1795 = vmatpush.msra.mxu0 %v590
  %1796 = vmatpush.msra.mxu0 %v587
  %1797 = vmatpush.msra.mxu0 %v584
  %1798 = vmatpush.msra.mxu0 %v581
  %1799 = vmatpush.msra.mxu0 %v578
  %1800 = vmatmul.f32.gmra.mxu0 %v1472
  %v1801 = vpop.f32.mrf.mxu0
  %v1802 = vadd.f32 0.0, %v1801
  %1803 = vdwg.mxu0
  %1804 = vmatpush.msra.mxu0 %v624
  %1805 = vmatpush.msra.mxu0 %v621
  %1806 = vmatpush.msra.mxu0 %v618
  %1807 = vmatpush.msra.mxu0 %v615
  %1808 = vmatpush.msra.mxu0 %v612
  %1809 = vmatpush.msra.mxu0 %v609
  %1810 = vmatpush.msra.mxu0 %v606
  %1811 = vmatpush.msra.mxu0 %v603
  %1812 = vmatpush.msra.mxu0 %v600
  %1813 = vmatpush.msra.mxu0 %v597
  %1814 = vmatpush.msra.mxu0 %v594
  %1815 = vmatpush.msra.mxu0 %v591
  %1816 = vmatpush.msra.mxu0 %v588
  %1817 = vmatpush.msra.mxu0 %v585
  %1818 = vmatpush.msra.mxu0 %v582
  %1819 = vmatpush.msra.mxu0 %v579
  %1820 = vmatmul.f32.gmra.mxu0 %v1472
  %v1821 = vpop.f32.mrf.mxu0
  %v1822 = vadd.f32 0.0, %v1821
  %1823 = vdwg.mxu0
  %1824 = vmatpush.msra.mxu0 %v574
  %1825 = vmatpush.msra.mxu0 %v571
  %1826 = vmatpush.msra.mxu0 %v568
  %1827 = vmatpush.msra.mxu0 %v565
  %1828 = vmatpush.msra.mxu0 %v562
  %1829 = vmatpush.msra.mxu0 %v559
  %1830 = vmatpush.msra.mxu0 %v556
  %1831 = vmatpush.msra.mxu0 %v553
  %1832 = vmatpush.msra.mxu0 %v550
  %1833 = vmatpush.msra.mxu0 %v547
  %1834 = vmatpush.msra.mxu0 %v544
  %1835 = vmatpush.msra.mxu0 %v541
  %1836 = vmatpush.msra.mxu0 %v538
  %1837 = vmatpush.msra.mxu0 %v535
  %1838 = vmatpush.msra.mxu0 %v532
  %1839 = vmatpush.msra.mxu0 %v529
  %1840 = vmatmul.f32.gmra.mxu0 %v1763
  %v1841 = vpop.f32.mrf.mxu0
  %v1842 = vadd.f32 %v1782, %v1841
  %1843 = vdwg.mxu0
  %1844 = vmatpush.msra.mxu0 %v575
  %1845 = vmatpush.msra.mxu0 %v572
  %1846 = vmatpush.msra.mxu0 %v569
  %1847 = vmatpush.msra.mxu0 %v566
  %1848 = vmatpush.msra.mxu0 %v563
  %1849 = vmatpush.msra.mxu0 %v560
  %1850 = vmatpush.msra.mxu0 %v557
  %1851 = vmatpush.msra.mxu0 %v554
  %1852 = vmatpush.msra.mxu0 %v551
  %1853 = vmatpush.msra.mxu0 %v548
  %1854 = vmatpush.msra.mxu0 %v545
  %1855 = vmatpush.msra.mxu0 %v542
  %1856 = vmatpush.msra.mxu0 %v539
  %1857 = vmatpush.msra.mxu0 %v536
  %1858 = vmatpush.msra.mxu0 %v533
  %1859 = vmatpush.msra.mxu0 %v530
  %1860 = vmatmul.f32.gmra.mxu0 %v1763
  %v1861 = vpop.f32.mrf.mxu0
  %v1862 = vadd.f32 %v1802, %v1861
  %1863 = vdwg.mxu0
  %1864 = vmatpush.msra.mxu0 %v576
  %1865 = vmatpush.msra.mxu0 %v573
  %1866 = vmatpush.msra.mxu0 %v570
  %1867 = vmatpush.msra.mxu0 %v567
  %1868 = vmatpush.msra.mxu0 %v564
  %1869 = vmatpush.msra.mxu0 %v561
  %1870 = vmatpush.msra.mxu0 %v558
  %1871 = vmatpush.msra.mxu0 %v555
  %1872 = vmatpush.msra.mxu0 %v552
  %1873 = vmatpush.msra.mxu0 %v549
  %1874 = vmatpush.msra.mxu0 %v546
  %1875 = vmatpush.msra.mxu0 %v543
  %1876 = vmatpush.msra.mxu0 %v540
  %1877 = vmatpush.msra.mxu0 %v537
  %1878 = vmatpush.msra.mxu0 %v534
  %1879 = vmatpush.msra.mxu0 %v531
  %1880 = vmatmul.f32.gmra.mxu0 %v1763
  %v1881 = vpop.f32.mrf.mxu0
  %v1882 = vadd.f32 %v1822, %v1881
  %1883 = vdwg.mxu0
  %v1884 = vadd.f32 %v1842, %v331
  %v1885 = vadd.f32 %v1862, %v332
  %v1886 = vadd.f32 %v1882, %v333
  %v1887 = vmul.f32 %v1884, 0.5
  %v1888 = vtanh.pop %v1887
  %v1889 = vmul.f32 %v1888, 0.5
  %v1890 = vadd.f32 %v1889, 0.5
  %v1891 = vtanh.pop %v1885
  %v1892 = vmul.f32 %v1886, 0.5
  %v1893 = vtanh.pop %v1892
  %v1894 = vmul.f32 %v1893, 0.5
  %v1895 = vadd.f32 %v1894, 0.5
  %v1896 = vmul.f32 %v1890, %v1891
  %v1897 = vtanh.pop %v1896
  %v1898 = vmul.f32 %v1895, %v1897
  %s1899 = scalar_lea.vmem [#allocation3], 16
  %1900 = vst [vmem:[%s1899] sm:$0xff] %v1898
  %s1901 = scalar_lea.vmem [#allocation2], 96
  %v1902 = vld [vmem:[%s1901] sm:$0xff]
  %v1903 = vld [vmem:[%s1901 + $0x8] sm:$0xff]
  %v1904 = vld [vmem:[%s1901 + $0x10] sm:$0xff]
  %v1905 = vld [vmem:[%s1901 + $0x18] sm:$0xff]
  %1906 = vmatpush.msra.mxu0 %v397
  %1907 = vmatpush.msra.mxu0 %v393
  %1908 = vmatpush.msra.mxu0 %v389
  %1909 = vmatpush.msra.mxu0 %v385
  %1910 = vmatpush.msra.mxu0 %v381
  %1911 = vmatpush.msra.mxu0 %v377
  %1912 = vmatpush.msra.mxu0 %v373
  %1913 = vmatpush.msra.mxu0 %v369
  %1914 = vmatpush.msra.mxu0 %v365
  %1915 = vmatpush.msra.mxu0 %v361
  %1916 = vmatpush.msra.mxu0 %v357
  %1917 = vmatpush.msra.mxu0 %v353
  %1918 = vmatpush.msra.mxu0 %v349
  %1919 = vmatpush.msra.mxu0 %v345
  %1920 = vmatpush.msra.mxu0 %v341
  %1921 = vmatpush.msra.mxu0 %v337
  %1922 = vmatmul.f32.gmra.mxu0 %v1581
  %v1923 = vpop.f32.mrf.mxu0
  %v1924 = vadd.f32 0.0, %v1923
  %1925 = vdwg.mxu0
  %1926 = vmatpush.msra.mxu0 %v398
  %1927 = vmatpush.msra.mxu0 %v394
  %1928 = vmatpush.msra.mxu0 %v390
  %1929 = vmatpush.msra.mxu0 %v386
  %1930 = vmatpush.msra.mxu0 %v382
  %1931 = vmatpush.msra.mxu0 %v378
  %1932 = vmatpush.msra.mxu0 %v374
  %1933 = vmatpush.msra.mxu0 %v370
  %1934 = vmatpush.msra.mxu0 %v366
  %1935 = vmatpush.msra.mxu0 %v362
  %1936 = vmatpush.msra.mxu0 %v358
  %1937 = vmatpush.msra.mxu0 %v354
  %1938 = vmatpush.msra.mxu0 %v350
  %1939 = vmatpush.msra.mxu0 %v346
  %1940 = vmatpush.msra.mxu0 %v342
  %1941 = vmatpush.msra.mxu0 %v338
  %1942 = vmatmul.f32.gmra.mxu0 %v1581
  %v1943 = vpop.f32.mrf.mxu0
  %v1944 = vadd.f32 0.0, %v1943
  %1945 = vdwg.mxu0
  %1946 = vmatpush.msra.mxu0 %v399
  %1947 = vmatpush.msra.mxu0 %v395
  %1948 = vmatpush.msra.mxu0 %v391
  %1949 = vmatpush.msra.mxu0 %v387
  %1950 = vmatpush.msra.mxu0 %v383
  %1951 = vmatpush.msra.mxu0 %v379
  %1952 = vmatpush.msra.mxu0 %v375
  %1953 = vmatpush.msra.mxu0 %v371
  %1954 = vmatpush.msra.mxu0 %v367
  %1955 = vmatpush.msra.mxu0 %v363
  %1956 = vmatpush.msra.mxu0 %v359
  %1957 = vmatpush.msra.mxu0 %v355
  %1958 = vmatpush.msra.mxu0 %v351
  %1959 = vmatpush.msra.mxu0 %v347
  %1960 = vmatpush.msra.mxu0 %v343
  %1961 = vmatpush.msra.mxu0 %v339
  %1962 = vmatmul.f32.gmra.mxu0 %v1581
  %v1963 = vpop.f32.mrf.mxu0
  %v1964 = vadd.f32 0.0, %v1963
  %1965 = vdwg.mxu0
  %1966 = vmatpush.msra.mxu0 %v400
  %1967 = vmatpush.msra.mxu0 %v396
  %1968 = vmatpush.msra.mxu0 %v392
  %1969 = vmatpush.msra.mxu0 %v388
  %1970 = vmatpush.msra.mxu0 %v384
  %1971 = vmatpush.msra.mxu0 %v380
  %1972 = vmatpush.msra.mxu0 %v376
  %1973 = vmatpush.msra.mxu0 %v372
  %1974 = vmatpush.msra.mxu0 %v368
  %1975 = vmatpush.msra.mxu0 %v364
  %1976 = vmatpush.msra.mxu0 %v360
  %1977 = vmatpush.msra.mxu0 %v356
  %1978 = vmatpush.msra.mxu0 %v352
  %1979 = vmatpush.msra.mxu0 %v348
  %1980 = vmatpush.msra.mxu0 %v344
  %1981 = vmatpush.msra.mxu0 %v340
  %1982 = vmatmul.f32.gmra.mxu0 %v1581
  %v1983 = vpop.f32.mrf.mxu0
  %v1984 = vadd.f32 0.0, %v1983
  %1985 = vdwg.mxu0
  %v1986 = vadd.f32 %v1902, %v1924
  %v1987 = vadd.f32 %v1903, %v1944
  %v1988 = vadd.f32 %v1904, %v1964
  %v1989 = vadd.f32 %v1905, %v1984
  %v1990 = vmul.f32 %v1986, 0.5
  %v1991 = vtanh.pop %v1990
  %v1992 = vmul.f32 %v1991, 0.5
  %v1993 = vadd.f32 %v1992, 0.5
  %v1994 = vmul.f32 %v1987, 0.5
  %v1995 = vtanh.pop %v1994
  %v1996 = vmul.f32 %v1995, 0.5
  %v1997 = vadd.f32 %v1996, 0.5
  %v1998 = vtanh.pop %v1988
  %v1999 = vmul.f32 %v1989, 0.5
  %v2000 = vtanh.pop %v1999
  %v2001 = vmul.f32 %v2000, 0.5
  %v2002 = vadd.f32 %v2001, 0.5
  %v2003 = vmul.f32 %v1997, %v1579
  %v2004 = vmul.f32 %v1993, %v1998
  %v2005 = vadd.f32 %v2003, %v2004
  %v2006 = vtanh.pop %v2005
  %v2007 = vmul.f32 %v2002, %v2006
  %2008 = vmatpush.msra.mxu0 %v525
  %2009 = vmatpush.msra.mxu0 %v521
  %2010 = vmatpush.msra.mxu0 %v517
  %2011 = vmatpush.msra.mxu0 %v513
  %2012 = vmatpush.msra.mxu0 %v509
  %2013 = vmatpush.msra.mxu0 %v505
  %2014 = vmatpush.msra.mxu0 %v501
  %2015 = vmatpush.msra.mxu0 %v497
  %2016 = vmatpush.msra.mxu0 %v493
  %2017 = vmatpush.msra.mxu0 %v489
  %2018 = vmatpush.msra.mxu0 %v485
  %2019 = vmatpush.msra.mxu0 %v481
  %2020 = vmatpush.msra.mxu0 %v477
  %2021 = vmatpush.msra.mxu0 %v473
  %2022 = vmatpush.msra.mxu0 %v469
  %2023 = vmatpush.msra.mxu0 %v465
  %2024 = vmatmul.f32.gmra.mxu0 %v1763
  %v2025 = vpop.f32.mrf.mxu0
  %v2026 = vadd.f32 0.0, %v2025
  %2027 = vdwg.mxu0
  %2028 = vmatpush.msra.mxu0 %v526
  %2029 = vmatpush.msra.mxu0 %v522
  %2030 = vmatpush.msra.mxu0 %v518
  %2031 = vmatpush.msra.mxu0 %v514
  %2032 = vmatpush.msra.mxu0 %v510
  %2033 = vmatpush.msra.mxu0 %v506
  %2034 = vmatpush.msra.mxu0 %v502
  %2035 = vmatpush.msra.mxu0 %v498
  %2036 = vmatpush.msra.mxu0 %v494
  %2037 = vmatpush.msra.mxu0 %v490
  %2038 = vmatpush.msra.mxu0 %v486
  %2039 = vmatpush.msra.mxu0 %v482
  %2040 = vmatpush.msra.mxu0 %v478
  %2041 = vmatpush.msra.mxu0 %v474
  %2042 = vmatpush.msra.mxu0 %v470
  %2043 = vmatpush.msra.mxu0 %v466
  %2044 = vmatmul.f32.gmra.mxu0 %v1763
  %v2045 = vpop.f32.mrf.mxu0
  %v2046 = vadd.f32 0.0, %v2045
  %2047 = vdwg.mxu0
  %2048 = vmatpush.msra.mxu0 %v527
  %2049 = vmatpush.msra.mxu0 %v523
  %2050 = vmatpush.msra.mxu0 %v519
  %2051 = vmatpush.msra.mxu0 %v515
  %2052 = vmatpush.msra.mxu0 %v511
  %2053 = vmatpush.msra.mxu0 %v507
  %2054 = vmatpush.msra.mxu0 %v503
  %2055 = vmatpush.msra.mxu0 %v499
  %2056 = vmatpush.msra.mxu0 %v495
  %2057 = vmatpush.msra.mxu0 %v491
  %2058 = vmatpush.msra.mxu0 %v487
  %2059 = vmatpush.msra.mxu0 %v483
  %2060 = vmatpush.msra.mxu0 %v479
  %2061 = vmatpush.msra.mxu0 %v475
  %2062 = vmatpush.msra.mxu0 %v471
  %2063 = vmatpush.msra.mxu0 %v467
  %2064 = vmatmul.f32.gmra.mxu0 %v1763
  %v2065 = vpop.f32.mrf.mxu0
  %v2066 = vadd.f32 0.0, %v2065
  %2067 = vdwg.mxu0
  %2068 = vmatpush.msra.mxu0 %v528
  %2069 = vmatpush.msra.mxu0 %v524
  %2070 = vmatpush.msra.mxu0 %v520
  %2071 = vmatpush.msra.mxu0 %v516
  %2072 = vmatpush.msra.mxu0 %v512
  %2073 = vmatpush.msra.mxu0 %v508
  %2074 = vmatpush.msra.mxu0 %v504
  %2075 = vmatpush.msra.mxu0 %v500
  %2076 = vmatpush.msra.mxu0 %v496
  %2077 = vmatpush.msra.mxu0 %v492
  %2078 = vmatpush.msra.mxu0 %v488
  %2079 = vmatpush.msra.mxu0 %v484
  %2080 = vmatpush.msra.mxu0 %v480
  %2081 = vmatpush.msra.mxu0 %v476
  %2082 = vmatpush.msra.mxu0 %v472
  %2083 = vmatpush.msra.mxu0 %v468
  %2084 = vmatmul.f32.gmra.mxu0 %v1763
  %v2085 = vpop.f32.mrf.mxu0
  %v2086 = vadd.f32 0.0, %v2085
  %2087 = vdwg.mxu0
  %2088 = vmatpush.msra.mxu0 %v461
  %2089 = vmatpush.msra.mxu0 %v457
  %2090 = vmatpush.msra.mxu0 %v453
  %2091 = vmatpush.msra.mxu0 %v449
  %2092 = vmatpush.msra.mxu0 %v445
  %2093 = vmatpush.msra.mxu0 %v441
  %2094 = vmatpush.msra.mxu0 %v437
  %2095 = vmatpush.msra.mxu0 %v433
  %2096 = vmatpush.msra.mxu0 %v429
  %2097 = vmatpush.msra.mxu0 %v425
  %2098 = vmatpush.msra.mxu0 %v421
  %2099 = vmatpush.msra.mxu0 %v417
  %2100 = vmatpush.msra.mxu0 %v413
  %2101 = vmatpush.msra.mxu0 %v409
  %2102 = vmatpush.msra.mxu0 %v405
  %2103 = vmatpush.msra.mxu0 %v401
  %2104 = vmatmul.f32.gmra.mxu0 %v2007
  %v2105 = vpop.f32.mrf.mxu0
  %v2106 = vadd.f32 %v2026, %v2105
  %2107 = vdwg.mxu0
  %2108 = vmatpush.msra.mxu0 %v462
  %2109 = vmatpush.msra.mxu0 %v458
  %2110 = vmatpush.msra.mxu0 %v454
  %2111 = vmatpush.msra.mxu0 %v450
  %2112 = vmatpush.msra.mxu0 %v446
  %2113 = vmatpush.msra.mxu0 %v442
  %2114 = vmatpush.msra.mxu0 %v438
  %2115 = vmatpush.msra.mxu0 %v434
  %2116 = vmatpush.msra.mxu0 %v430
  %2117 = vmatpush.msra.mxu0 %v426
  %2118 = vmatpush.msra.mxu0 %v422
  %2119 = vmatpush.msra.mxu0 %v418
  %2120 = vmatpush.msra.mxu0 %v414
  %2121 = vmatpush.msra.mxu0 %v410
  %2122 = vmatpush.msra.mxu0 %v406
  %2123 = vmatpush.msra.mxu0 %v402
  %2124 = vmatmul.f32.gmra.mxu0 %v2007
  %v2125 = vpop.f32.mrf.mxu0
  %v2126 = vadd.f32 %v2046, %v2125
  %2127 = vdwg.mxu0
  %2128 = vmatpush.msra.mxu0 %v463
  %2129 = vmatpush.msra.mxu0 %v459
  %2130 = vmatpush.msra.mxu0 %v455
  %2131 = vmatpush.msra.mxu0 %v451
  %2132 = vmatpush.msra.mxu0 %v447
  %2133 = vmatpush.msra.mxu0 %v443
  %2134 = vmatpush.msra.mxu0 %v439
  %2135 = vmatpush.msra.mxu0 %v435
  %2136 = vmatpush.msra.mxu0 %v431
  %2137 = vmatpush.msra.mxu0 %v427
  %2138 = vmatpush.msra.mxu0 %v423
  %2139 = vmatpush.msra.mxu0 %v419
  %2140 = vmatpush.msra.mxu0 %v415
  %2141 = vmatpush.msra.mxu0 %v411
  %2142 = vmatpush.msra.mxu0 %v407
  %2143 = vmatpush.msra.mxu0 %v403
  %2144 = vmatmul.f32.gmra.mxu0 %v2007
  %v2145 = vpop.f32.mrf.mxu0
  %v2146 = vadd.f32 %v2066, %v2145
  %2147 = vdwg.mxu0
  %2148 = vmatpush.msra.mxu0 %v464
  %2149 = vmatpush.msra.mxu0 %v460
  %2150 = vmatpush.msra.mxu0 %v456
  %2151 = vmatpush.msra.mxu0 %v452
  %2152 = vmatpush.msra.mxu0 %v448
  %2153 = vmatpush.msra.mxu0 %v444
  %2154 = vmatpush.msra.mxu0 %v440
  %2155 = vmatpush.msra.mxu0 %v436
  %2156 = vmatpush.msra.mxu0 %v432
  %2157 = vmatpush.msra.mxu0 %v428
  %2158 = vmatpush.msra.mxu0 %v424
  %2159 = vmatpush.msra.mxu0 %v420
  %2160 = vmatpush.msra.mxu0 %v416
  %2161 = vmatpush.msra.mxu0 %v412
  %2162 = vmatpush.msra.mxu0 %v408
  %2163 = vmatpush.msra.mxu0 %v404
  %2164 = vmatmul.f32.gmra.mxu0 %v2007
  %v2165 = vpop.f32.mrf.mxu0
  %v2166 = vadd.f32 %v2086, %v2165
  %2167 = vdwg.mxu0
  %v2168 = vadd.f32 %v2106, %v321
  %v2169 = vadd.f32 %v2126, %v322
  %v2170 = vadd.f32 %v2146, %v323
  %v2171 = vadd.f32 %v2166, %v324
  %v2172 = vmul.f32 %v2168, 0.5
  %v2173 = vtanh.pop %v2172
  %v2174 = vmul.f32 %v2173, 0.5
  %v2175 = vadd.f32 %v2174, 0.5
  %v2176 = vmul.f32 %v2169, 0.5
  %v2177 = vtanh.pop %v2176
  %v2178 = vmul.f32 %v2177, 0.5
  %v2179 = vadd.f32 %v2178, 0.5
  %v2180 = vtanh.pop %v2170
  %v2181 = vmul.f32 %v2171, 0.5
  %v2182 = vtanh.pop %v2181
  %v2183 = vmul.f32 %v2182, 0.5
  %v2184 = vadd.f32 %v2183, 0.5
  %v2185 = vmul.f32 %v2179, %v1896
  %v2186 = vmul.f32 %v2175, %v2180
  %v2187 = vadd.f32 %v2185, %v2186
  %v2188 = vtanh.pop %v2187
  %v2189 = vmul.f32 %v2184, %v2188
  %2190 = vmatpush.msra.mxu0 %v622
  %2191 = vmatpush.msra.mxu0 %v619
  %2192 = vmatpush.msra.mxu0 %v616
  %2193 = vmatpush.msra.mxu0 %v613
  %2194 = vmatpush.msra.mxu0 %v610
  %2195 = vmatpush.msra.mxu0 %v607
  %2196 = vmatpush.msra.mxu0 %v604
  %2197 = vmatpush.msra.mxu0 %v601
  %2198 = vmatpush.msra.mxu0 %v598
  %2199 = vmatpush.msra.mxu0 %v595
  %2200 = vmatpush.msra.mxu0 %v592
  %2201 = vmatpush.msra.mxu0 %v589
  %2202 = vmatpush.msra.mxu0 %v586
  %2203 = vmatpush.msra.mxu0 %v583
  %2204 = vmatpush.msra.mxu0 %v580
  %2205 = vmatpush.msra.mxu0 %v577
  %2206 = vmatmul.f32.gmra.mxu0 %v1898
  %v2207 = vpop.f32.mrf.mxu0
  %v2208 = vadd.f32 0.0, %v2207
  %2209 = vdwg.mxu0
  %2210 = vmatpush.msra.mxu0 %v623
  %2211 = vmatpush.msra.mxu0 %v620
  %2212 = vmatpush.msra.mxu0 %v617
  %2213 = vmatpush.msra.mxu0 %v614
  %2214 = vmatpush.msra.mxu0 %v611
  %2215 = vmatpush.msra.mxu0 %v608
  %2216 = vmatpush.msra.mxu0 %v605
  %2217 = vmatpush.msra.mxu0 %v602
  %2218 = vmatpush.msra.mxu0 %v599
  %2219 = vmatpush.msra.mxu0 %v596
  %2220 = vmatpush.msra.mxu0 %v593
  %2221 = vmatpush.msra.mxu0 %v590
  %2222 = vmatpush.msra.mxu0 %v587
  %2223 = vmatpush.msra.mxu0 %v584
  %2224 = vmatpush.msra.mxu0 %v581
  %2225 = vmatpush.msra.mxu0 %v578
  %2226 = vmatmul.f32.gmra.mxu0 %v1898
  %v2227 = vpop.f32.mrf.mxu0
  %v2228 = vadd.f32 0.0, %v2227
  %2229 = vdwg.mxu0
  %2230 = vmatpush.msra.mxu0 %v624
  %2231 = vmatpush.msra.mxu0 %v621
  %2232 = vmatpush.msra.mxu0 %v618
  %2233 = vmatpush.msra.mxu0 %v615
  %2234 = vmatpush.msra.mxu0 %v612
  %2235 = vmatpush.msra.mxu0 %v609
  %2236 = vmatpush.msra.mxu0 %v606
  %2237 = vmatpush.msra.mxu0 %v603
  %2238 = vmatpush.msra.mxu0 %v600
  %2239 = vmatpush.msra.mxu0 %v597
  %2240 = vmatpush.msra.mxu0 %v594
  %2241 = vmatpush.msra.mxu0 %v591
  %2242 = vmatpush.msra.mxu0 %v588
  %2243 = vmatpush.msra.mxu0 %v585
  %2244 = vmatpush.msra.mxu0 %v582
  %2245 = vmatpush.msra.mxu0 %v579
  %2246 = vmatmul.f32.gmra.mxu0 %v1898
  %v2247 = vpop.f32.mrf.mxu0
  %v2248 = vadd.f32 0.0, %v2247
  %2249 = vdwg.mxu0
  %2250 = vmatpush.msra.mxu0 %v574
  %2251 = vmatpush.msra.mxu0 %v571
  %2252 = vmatpush.msra.mxu0 %v568
  %2253 = vmatpush.msra.mxu0 %v565
  %2254 = vmatpush.msra.mxu0 %v562
  %2255 = vmatpush.msra.mxu0 %v559
  %2256 = vmatpush.msra.mxu0 %v556
  %2257 = vmatpush.msra.mxu0 %v553
  %2258 = vmatpush.msra.mxu0 %v550
  %2259 = vmatpush.msra.mxu0 %v547
  %2260 = vmatpush.msra.mxu0 %v544
  %2261 = vmatpush.msra.mxu0 %v541
  %2262 = vmatpush.msra.mxu0 %v538
  %2263 = vmatpush.msra.mxu0 %v535
  %2264 = vmatpush.msra.mxu0 %v532
  %2265 = vmatpush.msra.mxu0 %v529
  %2266 = vmatmul.f32.gmra.mxu0 %v2189
  %v2267 = vpop.f32.mrf.mxu0
  %v2268 = vadd.f32 %v2208, %v2267
  %2269 = vdwg.mxu0
  %2270 = vmatpush.msra.mxu0 %v575
  %2271 = vmatpush.msra.mxu0 %v572
  %2272 = vmatpush.msra.mxu0 %v569
  %2273 = vmatpush.msra.mxu0 %v566
  %2274 = vmatpush.msra.mxu0 %v563
  %2275 = vmatpush.msra.mxu0 %v560
  %2276 = vmatpush.msra.mxu0 %v557
  %2277 = vmatpush.msra.mxu0 %v554
  %2278 = vmatpush.msra.mxu0 %v551
  %2279 = vmatpush.msra.mxu0 %v548
  %2280 = vmatpush.msra.mxu0 %v545
  %2281 = vmatpush.msra.mxu0 %v542
  %2282 = vmatpush.msra.mxu0 %v539
  %2283 = vmatpush.msra.mxu0 %v536
  %2284 = vmatpush.msra.mxu0 %v533
  %2285 = vmatpush.msra.mxu0 %v530
  %2286 = vmatmul.f32.gmra.mxu0 %v2189
  %v2287 = vpop.f32.mrf.mxu0
  %v2288 = vadd.f32 %v2228, %v2287
  %2289 = vdwg.mxu0
  %2290 = vmatpush.msra.mxu0 %v576
  %2291 = vmatpush.msra.mxu0 %v573
  %2292 = vmatpush.msra.mxu0 %v570
  %2293 = vmatpush.msra.mxu0 %v567
  %2294 = vmatpush.msra.mxu0 %v564
  %2295 = vmatpush.msra.mxu0 %v561
  %2296 = vmatpush.msra.mxu0 %v558
  %2297 = vmatpush.msra.mxu0 %v555
  %2298 = vmatpush.msra.mxu0 %v552
  %2299 = vmatpush.msra.mxu0 %v549
  %2300 = vmatpush.msra.mxu0 %v546
  %2301 = vmatpush.msra.mxu0 %v543
  %2302 = vmatpush.msra.mxu0 %v540
  %2303 = vmatpush.msra.mxu0 %v537
  %2304 = vmatpush.msra.mxu0 %v534
  %2305 = vmatpush.msra.mxu0 %v531
  %2306 = vmatmul.f32.gmra.mxu0 %v2189
  %v2307 = vpop.f32.mrf.mxu0
  %v2308 = vadd.f32 %v2248, %v2307
  %2309 = vdwg.mxu0
  %v2310 = vadd.f32 %v2268, %v331
  %v2311 = vadd.f32 %v2288, %v332
  %v2312 = vadd.f32 %v2308, %v333
  %v2313 = vmul.f32 %v2310, 0.5
  %v2314 = vtanh.pop %v2313
  %v2315 = vmul.f32 %v2314, 0.5
  %v2316 = vadd.f32 %v2315, 0.5
  %v2317 = vtanh.pop %v2311
  %v2318 = vmul.f32 %v2312, 0.5
  %v2319 = vtanh.pop %v2318
  %v2320 = vmul.f32 %v2319, 0.5
  %v2321 = vadd.f32 %v2320, 0.5
  %v2322 = vmul.f32 %v2316, %v2317
  %v2323 = vtanh.pop %v2322
  %v2324 = vmul.f32 %v2321, %v2323
  %s2325 = scalar_lea.vmem [#allocation3], 24
  %2326 = vst [vmem:[%s2325] sm:$0xff] %v2324
  %s2327 = scalar_lea.vmem [#allocation2], 128
  %v2328 = vld [vmem:[%s2327] sm:$0xff]
  %v2329 = vld [vmem:[%s2327 + $0x8] sm:$0xff]
  %v2330 = vld [vmem:[%s2327 + $0x10] sm:$0xff]
  %v2331 = vld [vmem:[%s2327 + $0x18] sm:$0xff]
  %2332 = vmatpush.msra.mxu0 %v397
  %2333 = vmatpush.msra.mxu0 %v393
  %2334 = vmatpush.msra.mxu0 %v389
  %2335 = vmatpush.msra.mxu0 %v385
  %2336 = vmatpush.msra.mxu0 %v381
  %2337 = vmatpush.msra.mxu0 %v377
  %2338 = vmatpush.msra.mxu0 %v373
  %2339 = vmatpush.msra.mxu0 %v369
  %2340 = vmatpush.msra.mxu0 %v365
  %2341 = vmatpush.msra.mxu0 %v361
  %2342 = vmatpush.msra.mxu0 %v357
  %2343 = vmatpush.msra.mxu0 %v353
  %2344 = vmatpush.msra.mxu0 %v349
  %2345 = vmatpush.msra.mxu0 %v345
  %2346 = vmatpush.msra.mxu0 %v341
  %2347 = vmatpush.msra.mxu0 %v337
  %2348 = vmatmul.f32.gmra.mxu0 %v2007
  %v2349 = vpop.f32.mrf.mxu0
  %v2350 = vadd.f32 0.0, %v2349
  %2351 = vdwg.mxu0
  %2352 = vmatpush.msra.mxu0 %v398
  %2353 = vmatpush.msra.mxu0 %v394
  %2354 = vmatpush.msra.mxu0 %v390
  %2355 = vmatpush.msra.mxu0 %v386
  %2356 = vmatpush.msra.mxu0 %v382
  %2357 = vmatpush.msra.mxu0 %v378
  %2358 = vmatpush.msra.mxu0 %v374
  %2359 = vmatpush.msra.mxu0 %v370
  %2360 = vmatpush.msra.mxu0 %v366
  %2361 = vmatpush.msra.mxu0 %v362
  %2362 = vmatpush.msra.mxu0 %v358
  %2363 = vmatpush.msra.mxu0 %v354
  %2364 = vmatpush.msra.mxu0 %v350
  %2365 = vmatpush.msra.mxu0 %v346
  %2366 = vmatpush.msra.mxu0 %v342
  %2367 = vmatpush.msra.mxu0 %v338
  %2368 = vmatmul.f32.gmra.mxu0 %v2007
  %v2369 = vpop.f32.mrf.mxu0
  %v2370 = vadd.f32 0.0, %v2369
  %2371 = vdwg.mxu0
  %2372 = vmatpush.msra.mxu0 %v399
  %2373 = vmatpush.msra.mxu0 %v395
  %2374 = vmatpush.msra.mxu0 %v391
  %2375 = vmatpush.msra.mxu0 %v387
  %2376 = vmatpush.msra.mxu0 %v383
  %2377 = vmatpush.msra.mxu0 %v379
  %2378 = vmatpush.msra.mxu0 %v375
  %2379 = vmatpush.msra.mxu0 %v371
  %2380 = vmatpush.msra.mxu0 %v367
  %2381 = vmatpush.msra.mxu0 %v363
  %2382 = vmatpush.msra.mxu0 %v359
  %2383 = vmatpush.msra.mxu0 %v355
  %2384 = vmatpush.msra.mxu0 %v351
  %2385 = vmatpush.msra.mxu0 %v347
  %2386 = vmatpush.msra.mxu0 %v343
  %2387 = vmatpush.msra.mxu0 %v339
  %2388 = vmatmul.f32.gmra.mxu0 %v2007
  %v2389 = vpop.f32.mrf.mxu0
  %v2390 = vadd.f32 0.0, %v2389
  %2391 = vdwg.mxu0
  %2392 = vmatpush.msra.mxu0 %v400
  %2393 = vmatpush.msra.mxu0 %v396
  %2394 = vmatpush.msra.mxu0 %v392
  %2395 = vmatpush.msra.mxu0 %v388
  %2396 = vmatpush.msra.mxu0 %v384
  %2397 = vmatpush.msra.mxu0 %v380
  %2398 = vmatpush.msra.mxu0 %v376
  %2399 = vmatpush.msra.mxu0 %v372
  %2400 = vmatpush.msra.mxu0 %v368
  %2401 = vmatpush.msra.mxu0 %v364
  %2402 = vmatpush.msra.mxu0 %v360
  %2403 = vmatpush.msra.mxu0 %v356
  %2404 = vmatpush.msra.mxu0 %v352
  %2405 = vmatpush.msra.mxu0 %v348
  %2406 = vmatpush.msra.mxu0 %v344
  %2407 = vmatpush.msra.mxu0 %v340
  %2408 = vmatmul.f32.gmra.mxu0 %v2007
  %v2409 = vpop.f32.mrf.mxu0
  %v2410 = vadd.f32 0.0, %v2409
  %2411 = vdwg.mxu0
  %v2412 = vadd.f32 %v2328, %v2350
  %v2413 = vadd.f32 %v2329, %v2370
  %v2414 = vadd.f32 %v2330, %v2390
  %v2415 = vadd.f32 %v2331, %v2410
  %v2416 = vmul.f32 %v2412, 0.5
  %v2417 = vtanh.pop %v2416
  %v2418 = vmul.f32 %v2417, 0.5
  %v2419 = vadd.f32 %v2418, 0.5
  %v2420 = vmul.f32 %v2413, 0.5
  %v2421 = vtanh.pop %v2420
  %v2422 = vmul.f32 %v2421, 0.5
  %v2423 = vadd.f32 %v2422, 0.5
  %v2424 = vtanh.pop %v2414
  %v2425 = vmul.f32 %v2415, 0.5
  %v2426 = vtanh.pop %v2425
  %v2427 = vmul.f32 %v2426, 0.5
  %v2428 = vadd.f32 %v2427, 0.5
  %v2429 = vmul.f32 %v2423, %v2005
  %v2430 = vmul.f32 %v2419, %v2424
  %v2431 = vadd.f32 %v2429, %v2430
  %v2432 = vtanh.pop %v2431
  %v2433 = vmul.f32 %v2428, %v2432
  %2434 = vmatpush.msra.mxu0 %v525
  %2435 = vmatpush.msra.mxu0 %v521
  %2436 = vmatpush.msra.mxu0 %v517
  %2437 = vmatpush.msra.mxu0 %v513
  %2438 = vmatpush.msra.mxu0 %v509
  %2439 = vmatpush.msra.mxu0 %v505
  %2440 = vmatpush.msra.mxu0 %v501
  %2441 = vmatpush.msra.mxu0 %v497
  %2442 = vmatpush.msra.mxu0 %v493
  %2443 = vmatpush.msra.mxu0 %v489
  %2444 = vmatpush.msra.mxu0 %v485
  %2445 = vmatpush.msra.mxu0 %v481
  %2446 = vmatpush.msra.mxu0 %v477
  %2447 = vmatpush.msra.mxu0 %v473
  %2448 = vmatpush.msra.mxu0 %v469
  %2449 = vmatpush.msra.mxu0 %v465
  %2450 = vmatmul.f32.gmra.mxu0 %v2189
  %v2451 = vpop.f32.mrf.mxu0
  %v2452 = vadd.f32 0.0, %v2451
  %2453 = vdwg.mxu0
  %2454 = vmatpush.msra.mxu0 %v526
  %2455 = vmatpush.msra.mxu0 %v522
  %2456 = vmatpush.msra.mxu0 %v518
  %2457 = vmatpush.msra.mxu0 %v514
  %2458 = vmatpush.msra.mxu0 %v510
  %2459 = vmatpush.msra.mxu0 %v506
  %2460 = vmatpush.msra.mxu0 %v502
  %2461 = vmatpush.msra.mxu0 %v498
  %2462 = vmatpush.msra.mxu0 %v494
  %2463 = vmatpush.msra.mxu0 %v490
  %2464 = vmatpush.msra.mxu0 %v486
  %2465 = vmatpush.msra.mxu0 %v482
  %2466 = vmatpush.msra.mxu0 %v478
  %2467 = vmatpush.msra.mxu0 %v474
  %2468 = vmatpush.msra.mxu0 %v470
  %2469 = vmatpush.msra.mxu0 %v466
  %2470 = vmatmul.f32.gmra.mxu0 %v2189
  %v2471 = vpop.f32.mrf.mxu0
  %v2472 = vadd.f32 0.0, %v2471
  %2473 = vdwg.mxu0
  %2474 = vmatpush.msra.mxu0 %v527
  %2475 = vmatpush.msra.mxu0 %v523
  %2476 = vmatpush.msra.mxu0 %v519
  %2477 = vmatpush.msra.mxu0 %v515
  %2478 = vmatpush.msra.mxu0 %v511
  %2479 = vmatpush.msra.mxu0 %v507
  %2480 = vmatpush.msra.mxu0 %v503
  %2481 = vmatpush.msra.mxu0 %v499
  %2482 = vmatpush.msra.mxu0 %v495
  %2483 = vmatpush.msra.mxu0 %v491
  %2484 = vmatpush.msra.mxu0 %v487
  %2485 = vmatpush.msra.mxu0 %v483
  %2486 = vmatpush.msra.mxu0 %v479
  %2487 = vmatpush.msra.mxu0 %v475
  %2488 = vmatpush.msra.mxu0 %v471
  %2489 = vmatpush.msra.mxu0 %v467
  %2490 = vmatmul.f32.gmra.mxu0 %v2189
  %v2491 = vpop.f32.mrf.mxu0
  %v2492 = vadd.f32 0.0, %v2491
  %2493 = vdwg.mxu0
  %2494 = vmatpush.msra.mxu0 %v528
  %2495 = vmatpush.msra.mxu0 %v524
  %2496 = vmatpush.msra.mxu0 %v520
  %2497 = vmatpush.msra.mxu0 %v516
  %2498 = vmatpush.msra.mxu0 %v512
  %2499 = vmatpush.msra.mxu0 %v508
  %2500 = vmatpush.msra.mxu0 %v504
  %2501 = vmatpush.msra.mxu0 %v500
  %2502 = vmatpush.msra.mxu0 %v496
  %2503 = vmatpush.msra.mxu0 %v492
  %2504 = vmatpush.msra.mxu0 %v488
  %2505 = vmatpush.msra.mxu0 %v484
  %2506 = vmatpush.msra.mxu0 %v480
  %2507 = vmatpush.msra.mxu0 %v476
  %2508 = vmatpush.msra.mxu0 %v472
  %2509 = vmatpush.msra.mxu0 %v468
  %2510 = vmatmul.f32.gmra.mxu0 %v2189
  %v2511 = vpop.f32.mrf.mxu0
  %v2512 = vadd.f32 0.0, %v2511
  %2513 = vdwg.mxu0
  %2514 = vmatpush.msra.mxu0 %v461
  %2515 = vmatpush.msra.mxu0 %v457
  %2516 = vmatpush.msra.mxu0 %v453
  %2517 = vmatpush.msra.mxu0 %v449
  %2518 = vmatpush.msra.mxu0 %v445
  %2519 = vmatpush.msra.mxu0 %v441
  %2520 = vmatpush.msra.mxu0 %v437
  %2521 = vmatpush.msra.mxu0 %v433
  %2522 = vmatpush.msra.mxu0 %v429
  %2523 = vmatpush.msra.mxu0 %v425
  %2524 = vmatpush.msra.mxu0 %v421
  %2525 = vmatpush.msra.mxu0 %v417
  %2526 = vmatpush.msra.mxu0 %v413
  %2527 = vmatpush.msra.mxu0 %v409
  %2528 = vmatpush.msra.mxu0 %v405
  %2529 = vmatpush.msra.mxu0 %v401
  %2530 = vmatmul.f32.gmra.mxu0 %v2433
  %v2531 = vpop.f32.mrf.mxu0
  %v2532 = vadd.f32 %v2452, %v2531
  %2533 = vdwg.mxu0
  %2534 = vmatpush.msra.mxu0 %v462
  %2535 = vmatpush.msra.mxu0 %v458
  %2536 = vmatpush.msra.mxu0 %v454
  %2537 = vmatpush.msra.mxu0 %v450
  %2538 = vmatpush.msra.mxu0 %v446
  %2539 = vmatpush.msra.mxu0 %v442
  %2540 = vmatpush.msra.mxu0 %v438
  %2541 = vmatpush.msra.mxu0 %v434
  %2542 = vmatpush.msra.mxu0 %v430
  %2543 = vmatpush.msra.mxu0 %v426
  %2544 = vmatpush.msra.mxu0 %v422
  %2545 = vmatpush.msra.mxu0 %v418
  %2546 = vmatpush.msra.mxu0 %v414
  %2547 = vmatpush.msra.mxu0 %v410
  %2548 = vmatpush.msra.mxu0 %v406
  %2549 = vmatpush.msra.mxu0 %v402
  %2550 = vmatmul.f32.gmra.mxu0 %v2433
  %v2551 = vpop.f32.mrf.mxu0
  %v2552 = vadd.f32 %v2472, %v2551
  %2553 = vdwg.mxu0
  %2554 = vmatpush.msra.mxu0 %v463
  %2555 = vmatpush.msra.mxu0 %v459
  %2556 = vmatpush.msra.mxu0 %v455
  %2557 = vmatpush.msra.mxu0 %v451
  %2558 = vmatpush.msra.mxu0 %v447
  %2559 = vmatpush.msra.mxu0 %v443
  %2560 = vmatpush.msra.mxu0 %v439
  %2561 = vmatpush.msra.mxu0 %v435
  %2562 = vmatpush.msra.mxu0 %v431
  %2563 = vmatpush.msra.mxu0 %v427
  %2564 = vmatpush.msra.mxu0 %v423
  %2565 = vmatpush.msra.mxu0 %v419
  %2566 = vmatpush.msra.mxu0 %v415
  %2567 = vmatpush.msra.mxu0 %v411
  %2568 = vmatpush.msra.mxu0 %v407
  %2569 = vmatpush.msra.mxu0 %v403
  %2570 = vmatmul.f32.gmra.mxu0 %v2433
  %v2571 = vpop.f32.mrf.mxu0
  %v2572 = vadd.f32 %v2492, %v2571
  %2573 = vdwg.mxu0
  %2574 = vmatpush.msra.mxu0 %v464
  %2575 = vmatpush.msra.mxu0 %v460
  %2576 = vmatpush.msra.mxu0 %v456
  %2577 = vmatpush.msra.mxu0 %v452
  %2578 = vmatpush.msra.mxu0 %v448
  %2579 = vmatpush.msra.mxu0 %v444
  %2580 = vmatpush.msra.mxu0 %v440
  %2581 = vmatpush.msra.mxu0 %v436
  %2582 = vmatpush.msra.mxu0 %v432
  %2583 = vmatpush.msra.mxu0 %v428
  %2584 = vmatpush.msra.mxu0 %v424
  %2585 = vmatpush.msra.mxu0 %v420
  %2586 = vmatpush.msra.mxu0 %v416
  %2587 = vmatpush.msra.mxu0 %v412
  %2588 = vmatpush.msra.mxu0 %v408
  %2589 = vmatpush.msra.mxu0 %v404
  %2590 = vmatmul.f32.gmra.mxu0 %v2433
  %v2591 = vpop.f32.mrf.mxu0
  %v2592 = vadd.f32 %v2512, %v2591
  %2593 = vdwg.mxu0
  %v2594 = vadd.f32 %v2532, %v321
  %v2595 = vadd.f32 %v2552, %v322
  %v2596 = vadd.f32 %v2572, %v323
  %v2597 = vadd.f32 %v2592, %v324
  %v2598 = vmul.f32 %v2594, 0.5
  %v2599 = vtanh.pop %v2598
  %v2600 = vmul.f32 %v2599, 0.5
  %v2601 = vadd.f32 %v2600, 0.5
  %v2602 = vmul.f32 %v2595, 0.5
  %v2603 = vtanh.pop %v2602
  %v2604 = vmul.f32 %v2603, 0.5
  %v2605 = vadd.f32 %v2604, 0.5
  %v2606 = vtanh.pop %v2596
  %v2607 = vmul.f32 %v2597, 0.5
  %v2608 = vtanh.pop %v2607
  %v2609 = vmul.f32 %v2608, 0.5
  %v2610 = vadd.f32 %v2609, 0.5
  %v2611 = vmul.f32 %v2605, %v2322
  %v2612 = vmul.f32 %v2601, %v2606
  %v2613 = vadd.f32 %v2611, %v2612
  %v2614 = vtanh.pop %v2613
  %v2615 = vmul.f32 %v2610, %v2614
  %2616 = vmatpush.msra.mxu0 %v622
  %2617 = vmatpush.msra.mxu0 %v619
  %2618 = vmatpush.msra.mxu0 %v616
  %2619 = vmatpush.msra.mxu0 %v613
  %2620 = vmatpush.msra.mxu0 %v610
  %2621 = vmatpush.msra.mxu0 %v607
  %2622 = vmatpush.msra.mxu0 %v604
  %2623 = vmatpush.msra.mxu0 %v601
  %2624 = vmatpush.msra.mxu0 %v598
  %2625 = vmatpush.msra.mxu0 %v595
  %2626 = vmatpush.msra.mxu0 %v592
  %2627 = vmatpush.msra.mxu0 %v589
  %2628 = vmatpush.msra.mxu0 %v586
  %2629 = vmatpush.msra.mxu0 %v583
  %2630 = vmatpush.msra.mxu0 %v580
  %2631 = vmatpush.msra.mxu0 %v577
  %2632 = vmatmul.f32.gmra.mxu0 %v2324
  %v2633 = vpop.f32.mrf.mxu0
  %v2634 = vadd.f32 0.0, %v2633
  %2635 = vdwg.mxu0
  %2636 = vmatpush.msra.mxu0 %v623
  %2637 = vmatpush.msra.mxu0 %v620
  %2638 = vmatpush.msra.mxu0 %v617
  %2639 = vmatpush.msra.mxu0 %v614
  %2640 = vmatpush.msra.mxu0 %v611
  %2641 = vmatpush.msra.mxu0 %v608
  %2642 = vmatpush.msra.mxu0 %v605
  %2643 = vmatpush.msra.mxu0 %v602
  %2644 = vmatpush.msra.mxu0 %v599
  %2645 = vmatpush.msra.mxu0 %v596
  %2646 = vmatpush.msra.mxu0 %v593
  %2647 = vmatpush.msra.mxu0 %v590
  %2648 = vmatpush.msra.mxu0 %v587
  %2649 = vmatpush.msra.mxu0 %v584
  %2650 = vmatpush.msra.mxu0 %v581
  %2651 = vmatpush.msra.mxu0 %v578
  %2652 = vmatmul.f32.gmra.mxu0 %v2324
  %v2653 = vpop.f32.mrf.mxu0
  %v2654 = vadd.f32 0.0, %v2653
  %2655 = vdwg.mxu0
  %2656 = vmatpush.msra.mxu0 %v624
  %2657 = vmatpush.msra.mxu0 %v621
  %2658 = vmatpush.msra.mxu0 %v618
  %2659 = vmatpush.msra.mxu0 %v615
  %2660 = vmatpush.msra.mxu0 %v612
  %2661 = vmatpush.msra.mxu0 %v609
  %2662 = vmatpush.msra.mxu0 %v606
  %2663 = vmatpush.msra.mxu0 %v603
  %2664 = vmatpush.msra.mxu0 %v600
  %2665 = vmatpush.msra.mxu0 %v597
  %2666 = vmatpush.msra.mxu0 %v594
  %2667 = vmatpush.msra.mxu0 %v591
  %2668 = vmatpush.msra.mxu0 %v588
  %2669 = vmatpush.msra.mxu0 %v585
  %2670 = vmatpush.msra.mxu0 %v582
  %2671 = vmatpush.msra.mxu0 %v579
  %2672 = vmatmul.f32.gmra.mxu0 %v2324
  %v2673 = vpop.f32.mrf.mxu0
  %v2674 = vadd.f32 0.0, %v2673
  %2675 = vdwg.mxu0
  %2676 = vmatpush.msra.mxu0 %v574
  %2677 = vmatpush.msra.mxu0 %v571
  %2678 = vmatpush.msra.mxu0 %v568
  %2679 = vmatpush.msra.mxu0 %v565
  %2680 = vmatpush.msra.mxu0 %v562
  %2681 = vmatpush.msra.mxu0 %v559
  %2682 = vmatpush.msra.mxu0 %v556
  %2683 = vmatpush.msra.mxu0 %v553
  %2684 = vmatpush.msra.mxu0 %v550
  %2685 = vmatpush.msra.mxu0 %v547
  %2686 = vmatpush.msra.mxu0 %v544
  %2687 = vmatpush.msra.mxu0 %v541
  %2688 = vmatpush.msra.mxu0 %v538
  %2689 = vmatpush.msra.mxu0 %v535
  %2690 = vmatpush.msra.mxu0 %v532
  %2691 = vmatpush.msra.mxu0 %v529
  %2692 = vmatmul.f32.gmra.mxu0 %v2615
  %v2693 = vpop.f32.mrf.mxu0
  %v2694 = vadd.f32 %v2634, %v2693
  %2695 = vdwg.mxu0
  %2696 = vmatpush.msra.mxu0 %v575
  %2697 = vmatpush.msra.mxu0 %v572
  %2698 = vmatpush.msra.mxu0 %v569
  %2699 = vmatpush.msra.mxu0 %v566
  %2700 = vmatpush.msra.mxu0 %v563
  %2701 = vmatpush.msra.mxu0 %v560
  %2702 = vmatpush.msra.mxu0 %v557
  %2703 = vmatpush.msra.mxu0 %v554
  %2704 = vmatpush.msra.mxu0 %v551
  %2705 = vmatpush.msra.mxu0 %v548
  %2706 = vmatpush.msra.mxu0 %v545
  %2707 = vmatpush.msra.mxu0 %v542
  %2708 = vmatpush.msra.mxu0 %v539
  %2709 = vmatpush.msra.mxu0 %v536
  %2710 = vmatpush.msra.mxu0 %v533
  %2711 = vmatpush.msra.mxu0 %v530
  %2712 = vmatmul.f32.gmra.mxu0 %v2615
  %v2713 = vpop.f32.mrf.mxu0
  %v2714 = vadd.f32 %v2654, %v2713
  %2715 = vdwg.mxu0
  %2716 = vmatpush.msra.mxu0 %v576
  %2717 = vmatpush.msra.mxu0 %v573
  %2718 = vmatpush.msra.mxu0 %v570
  %2719 = vmatpush.msra.mxu0 %v567
  %2720 = vmatpush.msra.mxu0 %v564
  %2721 = vmatpush.msra.mxu0 %v561
  %2722 = vmatpush.msra.mxu0 %v558
  %2723 = vmatpush.msra.mxu0 %v555
  %2724 = vmatpush.msra.mxu0 %v552
  %2725 = vmatpush.msra.mxu0 %v549
  %2726 = vmatpush.msra.mxu0 %v546
  %2727 = vmatpush.msra.mxu0 %v543
  %2728 = vmatpush.msra.mxu0 %v540
  %2729 = vmatpush.msra.mxu0 %v537
  %2730 = vmatpush.msra.mxu0 %v534
  %2731 = vmatpush.msra.mxu0 %v531
  %2732 = vmatmul.f32.gmra.mxu0 %v2615
  %v2733 = vpop.f32.mrf.mxu0
  %v2734 = vadd.f32 %v2674, %v2733
  %2735 = vdwg.mxu0
  %v2736 = vadd.f32 %v2694, %v331
  %v2737 = vadd.f32 %v2714, %v332
  %v2738 = vadd.f32 %v2734, %v333
  %v2739 = vmul.f32 %v2736, 0.5
  %v2740 = vtanh.pop %v2739
  %v2741 = vmul.f32 %v2740, 0.5
  %v2742 = vadd.f32 %v2741, 0.5
  %v2743 = vtanh.pop %v2737
  %v2744 = vmul.f32 %v2738, 0.5
  %v2745 = vtanh.pop %v2744
  %v2746 = vmul.f32 %v2745, 0.5
  %v2747 = vadd.f32 %v2746, 0.5
  %v2748 = vmul.f32 %v2742, %v2743
  %v2749 = vtanh.pop %v2748
  %v2750 = vmul.f32 %v2747, %v2749
  %s2751 = scalar_lea.vmem [#allocation3], 32
  %2752 = vst [vmem:[%s2751] sm:$0xff] %v2750
  %s2753 = scalar_lea.vmem [#allocation2], 160
  %v2754 = vld [vmem:[%s2753] sm:$0xff]
  %v2755 = vld [vmem:[%s2753 + $0x8] sm:$0xff]
  %v2756 = vld [vmem:[%s2753 + $0x10] sm:$0xff]
  %v2757 = vld [vmem:[%s2753 + $0x18] sm:$0xff]
  %2758 = vmatpush.msra.mxu0 %v397
  %2759 = vmatpush.msra.mxu0 %v393
  %2760 = vmatpush.msra.mxu0 %v389
  %2761 = vmatpush.msra.mxu0 %v385
  %2762 = vmatpush.msra.mxu0 %v381
  %2763 = vmatpush.msra.mxu0 %v377
  %2764 = vmatpush.msra.mxu0 %v373
  %2765 = vmatpush.msra.mxu0 %v369
  %2766 = vmatpush.msra.mxu0 %v365
  %2767 = vmatpush.msra.mxu0 %v361
  %2768 = vmatpush.msra.mxu0 %v357
  %2769 = vmatpush.msra.mxu0 %v353
  %2770 = vmatpush.msra.mxu0 %v349
  %2771 = vmatpush.msra.mxu0 %v345
  %2772 = vmatpush.msra.mxu0 %v341
  %2773 = vmatpush.msra.mxu0 %v337
  %2774 = vmatmul.f32.gmra.mxu0 %v2433
  %v2775 = vpop.f32.mrf.mxu0
  %v2776 = vadd.f32 0.0, %v2775
  %2777 = vdwg.mxu0
  %2778 = vmatpush.msra.mxu0 %v398
  %2779 = vmatpush.msra.mxu0 %v394
  %2780 = vmatpush.msra.mxu0 %v390
  %2781 = vmatpush.msra.mxu0 %v386
  %2782 = vmatpush.msra.mxu0 %v382
  %2783 = vmatpush.msra.mxu0 %v378
  %2784 = vmatpush.msra.mxu0 %v374
  %2785 = vmatpush.msra.mxu0 %v370
  %2786 = vmatpush.msra.mxu0 %v366
  %2787 = vmatpush.msra.mxu0 %v362
  %2788 = vmatpush.msra.mxu0 %v358
  %2789 = vmatpush.msra.mxu0 %v354
  %2790 = vmatpush.msra.mxu0 %v350
  %2791 = vmatpush.msra.mxu0 %v346
  %2792 = vmatpush.msra.mxu0 %v342
  %2793 = vmatpush.msra.mxu0 %v338
  %2794 = vmatmul.f32.gmra.mxu0 %v2433
  %v2795 = vpop.f32.mrf.mxu0
  %v2796 = vadd.f32 0.0, %v2795
  %2797 = vdwg.mxu0
  %2798 = vmatpush.msra.mxu0 %v399
  %2799 = vmatpush.msra.mxu0 %v395
  %2800 = vmatpush.msra.mxu0 %v391
  %2801 = vmatpush.msra.mxu0 %v387
  %2802 = vmatpush.msra.mxu0 %v383
  %2803 = vmatpush.msra.mxu0 %v379
  %2804 = vmatpush.msra.mxu0 %v375
  %2805 = vmatpush.msra.mxu0 %v371
  %2806 = vmatpush.msra.mxu0 %v367
  %2807 = vmatpush.msra.mxu0 %v363
  %2808 = vmatpush.msra.mxu0 %v359
  %2809 = vmatpush.msra.mxu0 %v355
  %2810 = vmatpush.msra.mxu0 %v351
  %2811 = vmatpush.msra.mxu0 %v347
  %2812 = vmatpush.msra.mxu0 %v343
  %2813 = vmatpush.msra.mxu0 %v339
  %2814 = vmatmul.f32.gmra.mxu0 %v2433
  %v2815 = vpop.f32.mrf.mxu0
  %v2816 = vadd.f32 0.0, %v2815
  %2817 = vdwg.mxu0
  %2818 = vmatpush.msra.mxu0 %v400
  %2819 = vmatpush.msra.mxu0 %v396
  %2820 = vmatpush.msra.mxu0 %v392
  %2821 = vmatpush.msra.mxu0 %v388
  %2822 = vmatpush.msra.mxu0 %v384
  %2823 = vmatpush.msra.mxu0 %v380
  %2824 = vmatpush.msra.mxu0 %v376
  %2825 = vmatpush.msra.mxu0 %v372
  %2826 = vmatpush.msra.mxu0 %v368
  %2827 = vmatpush.msra.mxu0 %v364
  %2828 = vmatpush.msra.mxu0 %v360
  %2829 = vmatpush.msra.mxu0 %v356
  %2830 = vmatpush.msra.mxu0 %v352
  %2831 = vmatpush.msra.mxu0 %v348
  %2832 = vmatpush.msra.mxu0 %v344
  %2833 = vmatpush.msra.mxu0 %v340
  %2834 = vmatmul.f32.gmra.mxu0 %v2433
  %v2835 = vpop.f32.mrf.mxu0
  %v2836 = vadd.f32 0.0, %v2835
  %2837 = vdwg.mxu0
  %v2838 = vadd.f32 %v2754, %v2776
  %v2839 = vadd.f32 %v2755, %v2796
  %v2840 = vadd.f32 %v2756, %v2816
  %v2841 = vadd.f32 %v2757, %v2836
  %v2842 = vmul.f32 %v2838, 0.5
  %v2843 = vtanh.pop %v2842
  %v2844 = vmul.f32 %v2843, 0.5
  %v2845 = vadd.f32 %v2844, 0.5
  %v2846 = vmul.f32 %v2839, 0.5
  %v2847 = vtanh.pop %v2846
  %v2848 = vmul.f32 %v2847, 0.5
  %v2849 = vadd.f32 %v2848, 0.5
  %v2850 = vtanh.pop %v2840
  %v2851 = vmul.f32 %v2841, 0.5
  %v2852 = vtanh.pop %v2851
  %v2853 = vmul.f32 %v2852, 0.5
  %v2854 = vadd.f32 %v2853, 0.5
  %v2855 = vmul.f32 %v2849, %v2431
  %v2856 = vmul.f32 %v2845, %v2850
  %v2857 = vadd.f32 %v2855, %v2856
  %v2858 = vtanh.pop %v2857
  %v2859 = vmul.f32 %v2854, %v2858
  %2860 = vmatpush.msra.mxu0 %v525
  %2861 = vmatpush.msra.mxu0 %v521
  %2862 = vmatpush.msra.mxu0 %v517
  %2863 = vmatpush.msra.mxu0 %v513
  %2864 = vmatpush.msra.mxu0 %v509
  %2865 = vmatpush.msra.mxu0 %v505
  %2866 = vmatpush.msra.mxu0 %v501
  %2867 = vmatpush.msra.mxu0 %v497
  %2868 = vmatpush.msra.mxu0 %v493
  %2869 = vmatpush.msra.mxu0 %v489
  %2870 = vmatpush.msra.mxu0 %v485
  %2871 = vmatpush.msra.mxu0 %v481
  %2872 = vmatpush.msra.mxu0 %v477
  %2873 = vmatpush.msra.mxu0 %v473
  %2874 = vmatpush.msra.mxu0 %v469
  %2875 = vmatpush.msra.mxu0 %v465
  %2876 = vmatmul.f32.gmra.mxu0 %v2615
  %v2877 = vpop.f32.mrf.mxu0
  %v2878 = vadd.f32 0.0, %v2877
  %2879 = vdwg.mxu0
  %2880 = vmatpush.msra.mxu0 %v526
  %2881 = vmatpush.msra.mxu0 %v522
  %2882 = vmatpush.msra.mxu0 %v518
  %2883 = vmatpush.msra.mxu0 %v514
  %2884 = vmatpush.msra.mxu0 %v510
  %2885 = vmatpush.msra.mxu0 %v506
  %2886 = vmatpush.msra.mxu0 %v502
  %2887 = vmatpush.msra.mxu0 %v498
  %2888 = vmatpush.msra.mxu0 %v494
  %2889 = vmatpush.msra.mxu0 %v490
  %2890 = vmatpush.msra.mxu0 %v486
  %2891 = vmatpush.msra.mxu0 %v482
  %2892 = vmatpush.msra.mxu0 %v478
  %2893 = vmatpush.msra.mxu0 %v474
  %2894 = vmatpush.msra.mxu0 %v470
  %2895 = vmatpush.msra.mxu0 %v466
  %2896 = vmatmul.f32.gmra.mxu0 %v2615
  %v2897 = vpop.f32.mrf.mxu0
  %v2898 = vadd.f32 0.0, %v2897
  %2899 = vdwg.mxu0
  %2900 = vmatpush.msra.mxu0 %v527
  %2901 = vmatpush.msra.mxu0 %v523
  %2902 = vmatpush.msra.mxu0 %v519
  %2903 = vmatpush.msra.mxu0 %v515
  %2904 = vmatpush.msra.mxu0 %v511
  %2905 = vmatpush.msra.mxu0 %v507
  %2906 = vmatpush.msra.mxu0 %v503
  %2907 = vmatpush.msra.mxu0 %v499
  %2908 = vmatpush.msra.mxu0 %v495
  %2909 = vmatpush.msra.mxu0 %v491
  %2910 = vmatpush.msra.mxu0 %v487
  %2911 = vmatpush.msra.mxu0 %v483
  %2912 = vmatpush.msra.mxu0 %v479
  %2913 = vmatpush.msra.mxu0 %v475
  %2914 = vmatpush.msra.mxu0 %v471
  %2915 = vmatpush.msra.mxu0 %v467
  %2916 = vmatmul.f32.gmra.mxu0 %v2615
  %v2917 = vpop.f32.mrf.mxu0
  %v2918 = vadd.f32 0.0, %v2917
  %2919 = vdwg.mxu0
  %2920 = vmatpush.msra.mxu0 %v528
  %2921 = vmatpush.msra.mxu0 %v524
  %2922 = vmatpush.msra.mxu0 %v520
  %2923 = vmatpush.msra.mxu0 %v516
  %2924 = vmatpush.msra.mxu0 %v512
  %2925 = vmatpush.msra.mxu0 %v508
  %2926 = vmatpush.msra.mxu0 %v504
  %2927 = vmatpush.msra.mxu0 %v500
  %2928 = vmatpush.msra.mxu0 %v496
  %2929 = vmatpush.msra.mxu0 %v492
  %2930 = vmatpush.msra.mxu0 %v488
  %2931 = vmatpush.msra.mxu0 %v484
  %2932 = vmatpush.msra.mxu0 %v480
  %2933 = vmatpush.msra.mxu0 %v476
  %2934 = vmatpush.msra.mxu0 %v472
  %2935 = vmatpush.msra.mxu0 %v468
  %2936 = vmatmul.f32.gmra.mxu0 %v2615
  %v2937 = vpop.f32.mrf.mxu0
  %v2938 = vadd.f32 0.0, %v2937
  %2939 = vdwg.mxu0
  %2940 = vmatpush.msra.mxu0 %v461
  %2941 = vmatpush.msra.mxu0 %v457
  %2942 = vmatpush.msra.mxu0 %v453
  %2943 = vmatpush.msra.mxu0 %v449
  %2944 = vmatpush.msra.mxu0 %v445
  %2945 = vmatpush.msra.mxu0 %v441
  %2946 = vmatpush.msra.mxu0 %v437
  %2947 = vmatpush.msra.mxu0 %v433
  %2948 = vmatpush.msra.mxu0 %v429
  %2949 = vmatpush.msra.mxu0 %v425
  %2950 = vmatpush.msra.mxu0 %v421
  %2951 = vmatpush.msra.mxu0 %v417
  %2952 = vmatpush.msra.mxu0 %v413
  %2953 = vmatpush.msra.mxu0 %v409
  %2954 = vmatpush.msra.mxu0 %v405
  %2955 = vmatpush.msra.mxu0 %v401
  %2956 = vmatmul.f32.gmra.mxu0 %v2859
  %v2957 = vpop.f32.mrf.mxu0
  %v2958 = vadd.f32 %v2878, %v2957
  %2959 = vdwg.mxu0
  %2960 = vmatpush.msra.mxu0 %v462
  %2961 = vmatpush.msra.mxu0 %v458
  %2962 = vmatpush.msra.mxu0 %v454
  %2963 = vmatpush.msra.mxu0 %v450
  %2964 = vmatpush.msra.mxu0 %v446
  %2965 = vmatpush.msra.mxu0 %v442
  %2966 = vmatpush.msra.mxu0 %v438
  %2967 = vmatpush.msra.mxu0 %v434
  %2968 = vmatpush.msra.mxu0 %v430
  %2969 = vmatpush.msra.mxu0 %v426
  %2970 = vmatpush.msra.mxu0 %v422
  %2971 = vmatpush.msra.mxu0 %v418
  %2972 = vmatpush.msra.mxu0 %v414
  %2973 = vmatpush.msra.mxu0 %v410
  %2974 = vmatpush.msra.mxu0 %v406
  %2975 = vmatpush.msra.mxu0 %v402
  %2976 = vmatmul.f32.gmra.mxu0 %v2859
  %v2977 = vpop.f32.mrf.mxu0
  %v2978 = vadd.f32 %v2898, %v2977
  %2979 = vdwg.mxu0
  %2980 = vmatpush.msra.mxu0 %v463
  %2981 = vmatpush.msra.mxu0 %v459
  %2982 = vmatpush.msra.mxu0 %v455
  %2983 = vmatpush.msra.mxu0 %v451
  %2984 = vmatpush.msra.mxu0 %v447
  %2985 = vmatpush.msra.mxu0 %v443
  %2986 = vmatpush.msra.mxu0 %v439
  %2987 = vmatpush.msra.mxu0 %v435
  %2988 = vmatpush.msra.mxu0 %v431
  %2989 = vmatpush.msra.mxu0 %v427
  %2990 = vmatpush.msra.mxu0 %v423
  %2991 = vmatpush.msra.mxu0 %v419
  %2992 = vmatpush.msra.mxu0 %v415
  %2993 = vmatpush.msra.mxu0 %v411
  %2994 = vmatpush.msra.mxu0 %v407
  %2995 = vmatpush.msra.mxu0 %v403
  %2996 = vmatmul.f32.gmra.mxu0 %v2859
  %v2997 = vpop.f32.mrf.mxu0
  %v2998 = vadd.f32 %v2918, %v2997
  %2999 = vdwg.mxu0
  %3000 = vmatpush.msra.mxu0 %v464
  %3001 = vmatpush.msra.mxu0 %v460
  %3002 = vmatpush.msra.mxu0 %v456
  %3003 = vmatpush.msra.mxu0 %v452
  %3004 = vmatpush.msra.mxu0 %v448
  %3005 = vmatpush.msra.mxu0 %v444
  %3006 = vmatpush.msra.mxu0 %v440
  %3007 = vmatpush.msra.mxu0 %v436
  %3008 = vmatpush.msra.mxu0 %v432
  %3009 = vmatpush.msra.mxu0 %v428
  %3010 = vmatpush.msra.mxu0 %v424
  %3011 = vmatpush.msra.mxu0 %v420
  %3012 = vmatpush.msra.mxu0 %v416
  %3013 = vmatpush.msra.mxu0 %v412
  %3014 = vmatpush.msra.mxu0 %v408
  %3015 = vmatpush.msra.mxu0 %v404
  %3016 = vmatmul.f32.gmra.mxu0 %v2859
  %v3017 = vpop.f32.mrf.mxu0
  %v3018 = vadd.f32 %v2938, %v3017
  %3019 = vdwg.mxu0
  %v3020 = vadd.f32 %v2958, %v321
  %v3021 = vadd.f32 %v2978, %v322
  %v3022 = vadd.f32 %v2998, %v323
  %v3023 = vadd.f32 %v3018, %v324
  %v3024 = vmul.f32 %v3020, 0.5
  %v3025 = vtanh.pop %v3024
  %v3026 = vmul.f32 %v3025, 0.5
  %v3027 = vadd.f32 %v3026, 0.5
  %v3028 = vmul.f32 %v3021, 0.5
  %v3029 = vtanh.pop %v3028
  %v3030 = vmul.f32 %v3029, 0.5
  %v3031 = vadd.f32 %v3030, 0.5
  %v3032 = vtanh.pop %v3022
  %v3033 = vmul.f32 %v3023, 0.5
  %v3034 = vtanh.pop %v3033
  %v3035 = vmul.f32 %v3034, 0.5
  %v3036 = vadd.f32 %v3035, 0.5
  %v3037 = vmul.f32 %v3031, %v2748
  %v3038 = vmul.f32 %v3027, %v3032
  %v3039 = vadd.f32 %v3037, %v3038
  %v3040 = vtanh.pop %v3039
  %v3041 = vmul.f32 %v3036, %v3040
  %3042 = vmatpush.msra.mxu0 %v622
  %3043 = vmatpush.msra.mxu0 %v619
  %3044 = vmatpush.msra.mxu0 %v616
  %3045 = vmatpush.msra.mxu0 %v613
  %3046 = vmatpush.msra.mxu0 %v610
  %3047 = vmatpush.msra.mxu0 %v607
  %3048 = vmatpush.msra.mxu0 %v604
  %3049 = vmatpush.msra.mxu0 %v601
  %3050 = vmatpush.msra.mxu0 %v598
  %3051 = vmatpush.msra.mxu0 %v595
  %3052 = vmatpush.msra.mxu0 %v592
  %3053 = vmatpush.msra.mxu0 %v589
  %3054 = vmatpush.msra.mxu0 %v586
  %3055 = vmatpush.msra.mxu0 %v583
  %3056 = vmatpush.msra.mxu0 %v580
  %3057 = vmatpush.msra.mxu0 %v577
  %3058 = vmatmul.f32.gmra.mxu0 %v2750
  %v3059 = vpop.f32.mrf.mxu0
  %v3060 = vadd.f32 0.0, %v3059
  %3061 = vdwg.mxu0
  %3062 = vmatpush.msra.mxu0 %v623
  %3063 = vmatpush.msra.mxu0 %v620
  %3064 = vmatpush.msra.mxu0 %v617
  %3065 = vmatpush.msra.mxu0 %v614
  %3066 = vmatpush.msra.mxu0 %v611
  %3067 = vmatpush.msra.mxu0 %v608
  %3068 = vmatpush.msra.mxu0 %v605
  %3069 = vmatpush.msra.mxu0 %v602
  %3070 = vmatpush.msra.mxu0 %v599
  %3071 = vmatpush.msra.mxu0 %v596
  %3072 = vmatpush.msra.mxu0 %v593
  %3073 = vmatpush.msra.mxu0 %v590
  %3074 = vmatpush.msra.mxu0 %v587
  %3075 = vmatpush.msra.mxu0 %v584
  %3076 = vmatpush.msra.mxu0 %v581
  %3077 = vmatpush.msra.mxu0 %v578
  %3078 = vmatmul.f32.gmra.mxu0 %v2750
  %v3079 = vpop.f32.mrf.mxu0
  %v3080 = vadd.f32 0.0, %v3079
  %3081 = vdwg.mxu0
  %3082 = vmatpush.msra.mxu0 %v624
  %3083 = vmatpush.msra.mxu0 %v621
  %3084 = vmatpush.msra.mxu0 %v618
  %3085 = vmatpush.msra.mxu0 %v615
  %3086 = vmatpush.msra.mxu0 %v612
  %3087 = vmatpush.msra.mxu0 %v609
  %3088 = vmatpush.msra.mxu0 %v606
  %3089 = vmatpush.msra.mxu0 %v603
  %3090 = vmatpush.msra.mxu0 %v600
  %3091 = vmatpush.msra.mxu0 %v597
  %3092 = vmatpush.msra.mxu0 %v594
  %3093 = vmatpush.msra.mxu0 %v591
  %3094 = vmatpush.msra.mxu0 %v588
  %3095 = vmatpush.msra.mxu0 %v585
  %3096 = vmatpush.msra.mxu0 %v582
  %3097 = vmatpush.msra.mxu0 %v579
  %3098 = vmatmul.f32.gmra.mxu0 %v2750
  %v3099 = vpop.f32.mrf.mxu0
  %v3100 = vadd.f32 0.0, %v3099
  %3101 = vdwg.mxu0
  %3102 = vmatpush.msra.mxu0 %v574
  %3103 = vmatpush.msra.mxu0 %v571
  %3104 = vmatpush.msra.mxu0 %v568
  %3105 = vmatpush.msra.mxu0 %v565
  %3106 = vmatpush.msra.mxu0 %v562
  %3107 = vmatpush.msra.mxu0 %v559
  %3108 = vmatpush.msra.mxu0 %v556
  %3109 = vmatpush.msra.mxu0 %v553
  %3110 = vmatpush.msra.mxu0 %v550
  %3111 = vmatpush.msra.mxu0 %v547
  %3112 = vmatpush.msra.mxu0 %v544
  %3113 = vmatpush.msra.mxu0 %v541
  %3114 = vmatpush.msra.mxu0 %v538
  %3115 = vmatpush.msra.mxu0 %v535
  %3116 = vmatpush.msra.mxu0 %v532
  %3117 = vmatpush.msra.mxu0 %v529
  %3118 = vmatmul.f32.gmra.mxu0 %v3041
  %v3119 = vpop.f32.mrf.mxu0
  %v3120 = vadd.f32 %v3060, %v3119
  %3121 = vdwg.mxu0
  %3122 = vmatpush.msra.mxu0 %v575
  %3123 = vmatpush.msra.mxu0 %v572
  %3124 = vmatpush.msra.mxu0 %v569
  %3125 = vmatpush.msra.mxu0 %v566
  %3126 = vmatpush.msra.mxu0 %v563
  %3127 = vmatpush.msra.mxu0 %v560
  %3128 = vmatpush.msra.mxu0 %v557
  %3129 = vmatpush.msra.mxu0 %v554
  %3130 = vmatpush.msra.mxu0 %v551
  %3131 = vmatpush.msra.mxu0 %v548
  %3132 = vmatpush.msra.mxu0 %v545
  %3133 = vmatpush.msra.mxu0 %v542
  %3134 = vmatpush.msra.mxu0 %v539
  %3135 = vmatpush.msra.mxu0 %v536
  %3136 = vmatpush.msra.mxu0 %v533
  %3137 = vmatpush.msra.mxu0 %v530
  %3138 = vmatmul.f32.gmra.mxu0 %v3041
  %v3139 = vpop.f32.mrf.mxu0
  %v3140 = vadd.f32 %v3080, %v3139
  %3141 = vdwg.mxu0
  %3142 = vmatpush.msra.mxu0 %v576
  %3143 = vmatpush.msra.mxu0 %v573
  %3144 = vmatpush.msra.mxu0 %v570
  %3145 = vmatpush.msra.mxu0 %v567
  %3146 = vmatpush.msra.mxu0 %v564
  %3147 = vmatpush.msra.mxu0 %v561
  %3148 = vmatpush.msra.mxu0 %v558
  %3149 = vmatpush.msra.mxu0 %v555
  %3150 = vmatpush.msra.mxu0 %v552
  %3151 = vmatpush.msra.mxu0 %v549
  %3152 = vmatpush.msra.mxu0 %v546
  %3153 = vmatpush.msra.mxu0 %v543
  %3154 = vmatpush.msra.mxu0 %v540
  %3155 = vmatpush.msra.mxu0 %v537
  %3156 = vmatpush.msra.mxu0 %v534
  %3157 = vmatpush.msra.mxu0 %v531
  %3158 = vmatmul.f32.gmra.mxu0 %v3041
  %v3159 = vpop.f32.mrf.mxu0
  %v3160 = vadd.f32 %v3100, %v3159
  %3161 = vdwg.mxu0
  %v3162 = vadd.f32 %v3120, %v331
  %v3163 = vadd.f32 %v3140, %v332
  %v3164 = vadd.f32 %v3160, %v333
  %v3165 = vmul.f32 %v3162, 0.5
  %v3166 = vtanh.pop %v3165
  %v3167 = vmul.f32 %v3166, 0.5
  %v3168 = vadd.f32 %v3167, 0.5
  %v3169 = vtanh.pop %v3163
  %v3170 = vmul.f32 %v3164, 0.5
  %v3171 = vtanh.pop %v3170
  %v3172 = vmul.f32 %v3171, 0.5
  %v3173 = vadd.f32 %v3172, 0.5
  %v3174 = vmul.f32 %v3168, %v3169
  %v3175 = vtanh.pop %v3174
  %v3176 = vmul.f32 %v3173, %v3175
  %s3177 = scalar_lea.vmem [#allocation3], 40
  %3178 = vst [vmem:[%s3177] sm:$0xff] %v3176
  %s3179 = scalar_lea.vmem [#allocation2], 192
  %v3180 = vld [vmem:[%s3179] sm:$0xff]
  %v3181 = vld [vmem:[%s3179 + $0x8] sm:$0xff]
  %v3182 = vld [vmem:[%s3179 + $0x10] sm:$0xff]
  %v3183 = vld [vmem:[%s3179 + $0x18] sm:$0xff]
  %3184 = vmatpush.msra.mxu0 %v397
  %3185 = vmatpush.msra.mxu0 %v393
  %3186 = vmatpush.msra.mxu0 %v389
  %3187 = vmatpush.msra.mxu0 %v385
  %3188 = vmatpush.msra.mxu0 %v381
  %3189 = vmatpush.msra.mxu0 %v377
  %3190 = vmatpush.msra.mxu0 %v373
  %3191 = vmatpush.msra.mxu0 %v369
  %3192 = vmatpush.msra.mxu0 %v365
  %3193 = vmatpush.msra.mxu0 %v361
  %3194 = vmatpush.msra.mxu0 %v357
  %3195 = vmatpush.msra.mxu0 %v353
  %3196 = vmatpush.msra.mxu0 %v349
  %3197 = vmatpush.msra.mxu0 %v345
  %3198 = vmatpush.msra.mxu0 %v341
  %3199 = vmatpush.msra.mxu0 %v337
  %3200 = vmatmul.f32.gmra.mxu0 %v2859
  %v3201 = vpop.f32.mrf.mxu0
  %v3202 = vadd.f32 0.0, %v3201
  %3203 = vdwg.mxu0
  %3204 = vmatpush.msra.mxu0 %v398
  %3205 = vmatpush.msra.mxu0 %v394
  %3206 = vmatpush.msra.mxu0 %v390
  %3207 = vmatpush.msra.mxu0 %v386
  %3208 = vmatpush.msra.mxu0 %v382
  %3209 = vmatpush.msra.mxu0 %v378
  %3210 = vmatpush.msra.mxu0 %v374
  %3211 = vmatpush.msra.mxu0 %v370
  %3212 = vmatpush.msra.mxu0 %v366
  %3213 = vmatpush.msra.mxu0 %v362
  %3214 = vmatpush.msra.mxu0 %v358
  %3215 = vmatpush.msra.mxu0 %v354
  %3216 = vmatpush.msra.mxu0 %v350
  %3217 = vmatpush.msra.mxu0 %v346
  %3218 = vmatpush.msra.mxu0 %v342
  %3219 = vmatpush.msra.mxu0 %v338
  %3220 = vmatmul.f32.gmra.mxu0 %v2859
  %v3221 = vpop.f32.mrf.mxu0
  %v3222 = vadd.f32 0.0, %v3221
  %3223 = vdwg.mxu0
  %3224 = vmatpush.msra.mxu0 %v399
  %3225 = vmatpush.msra.mxu0 %v395
  %3226 = vmatpush.msra.mxu0 %v391
  %3227 = vmatpush.msra.mxu0 %v387
  %3228 = vmatpush.msra.mxu0 %v383
  %3229 = vmatpush.msra.mxu0 %v379
  %3230 = vmatpush.msra.mxu0 %v375
  %3231 = vmatpush.msra.mxu0 %v371
  %3232 = vmatpush.msra.mxu0 %v367
  %3233 = vmatpush.msra.mxu0 %v363
  %3234 = vmatpush.msra.mxu0 %v359
  %3235 = vmatpush.msra.mxu0 %v355
  %3236 = vmatpush.msra.mxu0 %v351
  %3237 = vmatpush.msra.mxu0 %v347
  %3238 = vmatpush.msra.mxu0 %v343
  %3239 = vmatpush.msra.mxu0 %v339
  %3240 = vmatmul.f32.gmra.mxu0 %v2859
  %v3241 = vpop.f32.mrf.mxu0
  %v3242 = vadd.f32 0.0, %v3241
  %3243 = vdwg.mxu0
  %3244 = vmatpush.msra.mxu0 %v400
  %3245 = vmatpush.msra.mxu0 %v396
  %3246 = vmatpush.msra.mxu0 %v392
  %3247 = vmatpush.msra.mxu0 %v388
  %3248 = vmatpush.msra.mxu0 %v384
  %3249 = vmatpush.msra.mxu0 %v380
  %3250 = vmatpush.msra.mxu0 %v376
  %3251 = vmatpush.msra.mxu0 %v372
  %3252 = vmatpush.msra.mxu0 %v368
  %3253 = vmatpush.msra.mxu0 %v364
  %3254 = vmatpush.msra.mxu0 %v360
  %3255 = vmatpush.msra.mxu0 %v356
  %3256 = vmatpush.msra.mxu0 %v352
  %3257 = vmatpush.msra.mxu0 %v348
  %3258 = vmatpush.msra.mxu0 %v344
  %3259 = vmatpush.msra.mxu0 %v340
  %3260 = vmatmul.f32.gmra.mxu0 %v2859
  %v3261 = vpop.f32.mrf.mxu0
  %v3262 = vadd.f32 0.0, %v3261
  %3263 = vdwg.mxu0
  %v3264 = vadd.f32 %v3180, %v3202
  %v3265 = vadd.f32 %v3181, %v3222
  %v3266 = vadd.f32 %v3182, %v3242
  %v3267 = vadd.f32 %v3183, %v3262
  %v3268 = vmul.f32 %v3264, 0.5
  %v3269 = vtanh.pop %v3268
  %v3270 = vmul.f32 %v3269, 0.5
  %v3271 = vadd.f32 %v3270, 0.5
  %v3272 = vmul.f32 %v3265, 0.5
  %v3273 = vtanh.pop %v3272
  %v3274 = vmul.f32 %v3273, 0.5
  %v3275 = vadd.f32 %v3274, 0.5
  %v3276 = vtanh.pop %v3266
  %v3277 = vmul.f32 %v3267, 0.5
  %v3278 = vtanh.pop %v3277
  %v3279 = vmul.f32 %v3278, 0.5
  %v3280 = vadd.f32 %v3279, 0.5
  %v3281 = vmul.f32 %v3275, %v2857
  %v3282 = vmul.f32 %v3271, %v3276
  %v3283 = vadd.f32 %v3281, %v3282
  %v3284 = vtanh.pop %v3283
  %v3285 = vmul.f32 %v3280, %v3284
  %3286 = vmatpush.msra.mxu0 %v525
  %3287 = vmatpush.msra.mxu0 %v521
  %3288 = vmatpush.msra.mxu0 %v517
  %3289 = vmatpush.msra.mxu0 %v513
  %3290 = vmatpush.msra.mxu0 %v509
  %3291 = vmatpush.msra.mxu0 %v505
  %3292 = vmatpush.msra.mxu0 %v501
  %3293 = vmatpush.msra.mxu0 %v497
  %3294 = vmatpush.msra.mxu0 %v493
  %3295 = vmatpush.msra.mxu0 %v489
  %3296 = vmatpush.msra.mxu0 %v485
  %3297 = vmatpush.msra.mxu0 %v481
  %3298 = vmatpush.msra.mxu0 %v477
  %3299 = vmatpush.msra.mxu0 %v473
  %3300 = vmatpush.msra.mxu0 %v469
  %3301 = vmatpush.msra.mxu0 %v465
  %3302 = vmatmul.f32.gmra.mxu0 %v3041
  %v3303 = vpop.f32.mrf.mxu0
  %v3304 = vadd.f32 0.0, %v3303
  %3305 = vdwg.mxu0
  %3306 = vmatpush.msra.mxu0 %v526
  %3307 = vmatpush.msra.mxu0 %v522
  %3308 = vmatpush.msra.mxu0 %v518
  %3309 = vmatpush.msra.mxu0 %v514
  %3310 = vmatpush.msra.mxu0 %v510
  %3311 = vmatpush.msra.mxu0 %v506
  %3312 = vmatpush.msra.mxu0 %v502
  %3313 = vmatpush.msra.mxu0 %v498
  %3314 = vmatpush.msra.mxu0 %v494
  %3315 = vmatpush.msra.mxu0 %v490
  %3316 = vmatpush.msra.mxu0 %v486
  %3317 = vmatpush.msra.mxu0 %v482
  %3318 = vmatpush.msra.mxu0 %v478
  %3319 = vmatpush.msra.mxu0 %v474
  %3320 = vmatpush.msra.mxu0 %v470
  %3321 = vmatpush.msra.mxu0 %v466
  %3322 = vmatmul.f32.gmra.mxu0 %v3041
  %v3323 = vpop.f32.mrf.mxu0
  %v3324 = vadd.f32 0.0, %v3323
  %3325 = vdwg.mxu0
  %3326 = vmatpush.msra.mxu0 %v527
  %3327 = vmatpush.msra.mxu0 %v523
  %3328 = vmatpush.msra.mxu0 %v519
  %3329 = vmatpush.msra.mxu0 %v515
  %3330 = vmatpush.msra.mxu0 %v511
  %3331 = vmatpush.msra.mxu0 %v507
  %3332 = vmatpush.msra.mxu0 %v503
  %3333 = vmatpush.msra.mxu0 %v499
  %3334 = vmatpush.msra.mxu0 %v495
  %3335 = vmatpush.msra.mxu0 %v491
  %3336 = vmatpush.msra.mxu0 %v487
  %3337 = vmatpush.msra.mxu0 %v483
  %3338 = vmatpush.msra.mxu0 %v479
  %3339 = vmatpush.msra.mxu0 %v475
  %3340 = vmatpush.msra.mxu0 %v471
  %3341 = vmatpush.msra.mxu0 %v467
  %3342 = vmatmul.f32.gmra.mxu0 %v3041
  %v3343 = vpop.f32.mrf.mxu0
  %v3344 = vadd.f32 0.0, %v3343
  %3345 = vdwg.mxu0
  %3346 = vmatpush.msra.mxu0 %v528
  %3347 = vmatpush.msra.mxu0 %v524
  %3348 = vmatpush.msra.mxu0 %v520
  %3349 = vmatpush.msra.mxu0 %v516
  %3350 = vmatpush.msra.mxu0 %v512
  %3351 = vmatpush.msra.mxu0 %v508
  %3352 = vmatpush.msra.mxu0 %v504
  %3353 = vmatpush.msra.mxu0 %v500
  %3354 = vmatpush.msra.mxu0 %v496
  %3355 = vmatpush.msra.mxu0 %v492
  %3356 = vmatpush.msra.mxu0 %v488
  %3357 = vmatpush.msra.mxu0 %v484
  %3358 = vmatpush.msra.mxu0 %v480
  %3359 = vmatpush.msra.mxu0 %v476
  %3360 = vmatpush.msra.mxu0 %v472
  %3361 = vmatpush.msra.mxu0 %v468
  %3362 = vmatmul.f32.gmra.mxu0 %v3041
  %v3363 = vpop.f32.mrf.mxu0
  %v3364 = vadd.f32 0.0, %v3363
  %3365 = vdwg.mxu0
  %3366 = vmatpush.msra.mxu0 %v461
  %3367 = vmatpush.msra.mxu0 %v457
  %3368 = vmatpush.msra.mxu0 %v453
  %3369 = vmatpush.msra.mxu0 %v449
  %3370 = vmatpush.msra.mxu0 %v445
  %3371 = vmatpush.msra.mxu0 %v441
  %3372 = vmatpush.msra.mxu0 %v437
  %3373 = vmatpush.msra.mxu0 %v433
  %3374 = vmatpush.msra.mxu0 %v429
  %3375 = vmatpush.msra.mxu0 %v425
  %3376 = vmatpush.msra.mxu0 %v421
  %3377 = vmatpush.msra.mxu0 %v417
  %3378 = vmatpush.msra.mxu0 %v413
  %3379 = vmatpush.msra.mxu0 %v409
  %3380 = vmatpush.msra.mxu0 %v405
  %3381 = vmatpush.msra.mxu0 %v401
  %3382 = vmatmul.f32.gmra.mxu0 %v3285
  %v3383 = vpop.f32.mrf.mxu0
  %v3384 = vadd.f32 %v3304, %v3383
  %3385 = vdwg.mxu0
  %3386 = vmatpush.msra.mxu0 %v462
  %3387 = vmatpush.msra.mxu0 %v458
  %3388 = vmatpush.msra.mxu0 %v454
  %3389 = vmatpush.msra.mxu0 %v450
  %3390 = vmatpush.msra.mxu0 %v446
  %3391 = vmatpush.msra.mxu0 %v442
  %3392 = vmatpush.msra.mxu0 %v438
  %3393 = vmatpush.msra.mxu0 %v434
  %3394 = vmatpush.msra.mxu0 %v430
  %3395 = vmatpush.msra.mxu0 %v426
  %3396 = vmatpush.msra.mxu0 %v422
  %3397 = vmatpush.msra.mxu0 %v418
  %3398 = vmatpush.msra.mxu0 %v414
  %3399 = vmatpush.msra.mxu0 %v410
  %3400 = vmatpush.msra.mxu0 %v406
  %3401 = vmatpush.msra.mxu0 %v402
  %3402 = vmatmul.f32.gmra.mxu0 %v3285
  %v3403 = vpop.f32.mrf.mxu0
  %v3404 = vadd.f32 %v3324, %v3403
  %3405 = vdwg.mxu0
  %3406 = vmatpush.msra.mxu0 %v463
  %3407 = vmatpush.msra.mxu0 %v459
  %3408 = vmatpush.msra.mxu0 %v455
  %3409 = vmatpush.msra.mxu0 %v451
  %3410 = vmatpush.msra.mxu0 %v447
  %3411 = vmatpush.msra.mxu0 %v443
  %3412 = vmatpush.msra.mxu0 %v439
  %3413 = vmatpush.msra.mxu0 %v435
  %3414 = vmatpush.msra.mxu0 %v431
  %3415 = vmatpush.msra.mxu0 %v427
  %3416 = vmatpush.msra.mxu0 %v423
  %3417 = vmatpush.msra.mxu0 %v419
  %3418 = vmatpush.msra.mxu0 %v415
  %3419 = vmatpush.msra.mxu0 %v411
  %3420 = vmatpush.msra.mxu0 %v407
  %3421 = vmatpush.msra.mxu0 %v403
  %3422 = vmatmul.f32.gmra.mxu0 %v3285
  %v3423 = vpop.f32.mrf.mxu0
  %v3424 = vadd.f32 %v3344, %v3423
  %3425 = vdwg.mxu0
  %3426 = vmatpush.msra.mxu0 %v464
  %3427 = vmatpush.msra.mxu0 %v460
  %3428 = vmatpush.msra.mxu0 %v456
  %3429 = vmatpush.msra.mxu0 %v452
  %3430 = vmatpush.msra.mxu0 %v448
  %3431 = vmatpush.msra.mxu0 %v444
  %3432 = vmatpush.msra.mxu0 %v440
  %3433 = vmatpush.msra.mxu0 %v436
  %3434 = vmatpush.msra.mxu0 %v432
  %3435 = vmatpush.msra.mxu0 %v428
  %3436 = vmatpush.msra.mxu0 %v424
  %3437 = vmatpush.msra.mxu0 %v420
  %3438 = vmatpush.msra.mxu0 %v416
  %3439 = vmatpush.msra.mxu0 %v412
  %3440 = vmatpush.msra.mxu0 %v408
  %3441 = vmatpush.msra.mxu0 %v404
  %3442 = vmatmul.f32.gmra.mxu0 %v3285
  %v3443 = vpop.f32.mrf.mxu0
  %v3444 = vadd.f32 %v3364, %v3443
  %3445 = vdwg.mxu0
  %v3446 = vadd.f32 %v3384, %v321
  %v3447 = vadd.f32 %v3404, %v322
  %v3448 = vadd.f32 %v3424, %v323
  %v3449 = vadd.f32 %v3444, %v324
  %v3450 = vmul.f32 %v3446, 0.5
  %v3451 = vtanh.pop %v3450
  %v3452 = vmul.f32 %v3451, 0.5
  %v3453 = vadd.f32 %v3452, 0.5
  %v3454 = vmul.f32 %v3447, 0.5
  %v3455 = vtanh.pop %v3454
  %v3456 = vmul.f32 %v3455, 0.5
  %v3457 = vadd.f32 %v3456, 0.5
  %v3458 = vtanh.pop %v3448
  %v3459 = vmul.f32 %v3449, 0.5
  %v3460 = vtanh.pop %v3459
  %v3461 = vmul.f32 %v3460, 0.5
  %v3462 = vadd.f32 %v3461, 0.5
  %v3463 = vmul.f32 %v3457, %v3174
  %v3464 = vmul.f32 %v3453, %v3458
  %v3465 = vadd.f32 %v3463, %v3464
  %v3466 = vtanh.pop %v3465
  %v3467 = vmul.f32 %v3462, %v3466
  %3468 = vmatpush.msra.mxu0 %v622
  %3469 = vmatpush.msra.mxu0 %v619
  %3470 = vmatpush.msra.mxu0 %v616
  %3471 = vmatpush.msra.mxu0 %v613
  %3472 = vmatpush.msra.mxu0 %v610
  %3473 = vmatpush.msra.mxu0 %v607
  %3474 = vmatpush.msra.mxu0 %v604
  %3475 = vmatpush.msra.mxu0 %v601
  %3476 = vmatpush.msra.mxu0 %v598
  %3477 = vmatpush.msra.mxu0 %v595
  %3478 = vmatpush.msra.mxu0 %v592
  %3479 = vmatpush.msra.mxu0 %v589
  %3480 = vmatpush.msra.mxu0 %v586
  %3481 = vmatpush.msra.mxu0 %v583
  %3482 = vmatpush.msra.mxu0 %v580
  %3483 = vmatpush.msra.mxu0 %v577
  %3484 = vmatmul.f32.gmra.mxu0 %v3176
  %v3485 = vpop.f32.mrf.mxu0
  %v3486 = vadd.f32 0.0, %v3485
  %3487 = vdwg.mxu0
  %3488 = vmatpush.msra.mxu0 %v623
  %3489 = vmatpush.msra.mxu0 %v620
  %3490 = vmatpush.msra.mxu0 %v617
  %3491 = vmatpush.msra.mxu0 %v614
  %3492 = vmatpush.msra.mxu0 %v611
  %3493 = vmatpush.msra.mxu0 %v608
  %3494 = vmatpush.msra.mxu0 %v605
  %3495 = vmatpush.msra.mxu0 %v602
  %3496 = vmatpush.msra.mxu0 %v599
  %3497 = vmatpush.msra.mxu0 %v596
  %3498 = vmatpush.msra.mxu0 %v593
  %3499 = vmatpush.msra.mxu0 %v590
  %3500 = vmatpush.msra.mxu0 %v587
  %3501 = vmatpush.msra.mxu0 %v584
  %3502 = vmatpush.msra.mxu0 %v581
  %3503 = vmatpush.msra.mxu0 %v578
  %3504 = vmatmul.f32.gmra.mxu0 %v3176
  %v3505 = vpop.f32.mrf.mxu0
  %v3506 = vadd.f32 0.0, %v3505
  %3507 = vdwg.mxu0
  %3508 = vmatpush.msra.mxu0 %v624
  %3509 = vmatpush.msra.mxu0 %v621
  %3510 = vmatpush.msra.mxu0 %v618
  %3511 = vmatpush.msra.mxu0 %v615
  %3512 = vmatpush.msra.mxu0 %v612
  %3513 = vmatpush.msra.mxu0 %v609
  %3514 = vmatpush.msra.mxu0 %v606
  %3515 = vmatpush.msra.mxu0 %v603
  %3516 = vmatpush.msra.mxu0 %v600
  %3517 = vmatpush.msra.mxu0 %v597
  %3518 = vmatpush.msra.mxu0 %v594
  %3519 = vmatpush.msra.mxu0 %v591
  %3520 = vmatpush.msra.mxu0 %v588
  %3521 = vmatpush.msra.mxu0 %v585
  %3522 = vmatpush.msra.mxu0 %v582
  %3523 = vmatpush.msra.mxu0 %v579
  %3524 = vmatmul.f32.gmra.mxu0 %v3176
  %v3525 = vpop.f32.mrf.mxu0
  %v3526 = vadd.f32 0.0, %v3525
  %3527 = vdwg.mxu0
  %3528 = vmatpush.msra.mxu0 %v574
  %3529 = vmatpush.msra.mxu0 %v571
  %3530 = vmatpush.msra.mxu0 %v568
  %3531 = vmatpush.msra.mxu0 %v565
  %3532 = vmatpush.msra.mxu0 %v562
  %3533 = vmatpush.msra.mxu0 %v559
  %3534 = vmatpush.msra.mxu0 %v556
  %3535 = vmatpush.msra.mxu0 %v553
  %3536 = vmatpush.msra.mxu0 %v550
  %3537 = vmatpush.msra.mxu0 %v547
  %3538 = vmatpush.msra.mxu0 %v544
  %3539 = vmatpush.msra.mxu0 %v541
  %3540 = vmatpush.msra.mxu0 %v538
  %3541 = vmatpush.msra.mxu0 %v535
  %3542 = vmatpush.msra.mxu0 %v532
  %3543 = vmatpush.msra.mxu0 %v529
  %3544 = vmatmul.f32.gmra.mxu0 %v3467
  %v3545 = vpop.f32.mrf.mxu0
  %v3546 = vadd.f32 %v3486, %v3545
  %3547 = vdwg.mxu0
  %3548 = vmatpush.msra.mxu0 %v575
  %3549 = vmatpush.msra.mxu0 %v572
  %3550 = vmatpush.msra.mxu0 %v569
  %3551 = vmatpush.msra.mxu0 %v566
  %3552 = vmatpush.msra.mxu0 %v563
  %3553 = vmatpush.msra.mxu0 %v560
  %3554 = vmatpush.msra.mxu0 %v557
  %3555 = vmatpush.msra.mxu0 %v554
  %3556 = vmatpush.msra.mxu0 %v551
  %3557 = vmatpush.msra.mxu0 %v548
  %3558 = vmatpush.msra.mxu0 %v545
  %3559 = vmatpush.msra.mxu0 %v542
  %3560 = vmatpush.msra.mxu0 %v539
  %3561 = vmatpush.msra.mxu0 %v536
  %3562 = vmatpush.msra.mxu0 %v533
  %3563 = vmatpush.msra.mxu0 %v530
  %3564 = vmatmul.f32.gmra.mxu0 %v3467
  %v3565 = vpop.f32.mrf.mxu0
  %v3566 = vadd.f32 %v3506, %v3565
  %3567 = vdwg.mxu0
  %3568 = vmatpush.msra.mxu0 %v576
  %3569 = vmatpush.msra.mxu0 %v573
  %3570 = vmatpush.msra.mxu0 %v570
  %3571 = vmatpush.msra.mxu0 %v567
  %3572 = vmatpush.msra.mxu0 %v564
  %3573 = vmatpush.msra.mxu0 %v561
  %3574 = vmatpush.msra.mxu0 %v558
  %3575 = vmatpush.msra.mxu0 %v555
  %3576 = vmatpush.msra.mxu0 %v552
  %3577 = vmatpush.msra.mxu0 %v549
  %3578 = vmatpush.msra.mxu0 %v546
  %3579 = vmatpush.msra.mxu0 %v543
  %3580 = vmatpush.msra.mxu0 %v540
  %3581 = vmatpush.msra.mxu0 %v537
  %3582 = vmatpush.msra.mxu0 %v534
  %3583 = vmatpush.msra.mxu0 %v531
  %3584 = vmatmul.f32.gmra.mxu0 %v3467
  %v3585 = vpop.f32.mrf.mxu0
  %v3586 = vadd.f32 %v3526, %v3585
  %3587 = vdwg.mxu0
  %v3588 = vadd.f32 %v3546, %v331
  %v3589 = vadd.f32 %v3566, %v332
  %v3590 = vadd.f32 %v3586, %v333
  %v3591 = vmul.f32 %v3588, 0.5
  %v3592 = vtanh.pop %v3591
  %v3593 = vmul.f32 %v3592, 0.5
  %v3594 = vadd.f32 %v3593, 0.5
  %v3595 = vtanh.pop %v3589
  %v3596 = vmul.f32 %v3590, 0.5
  %v3597 = vtanh.pop %v3596
  %v3598 = vmul.f32 %v3597, 0.5
  %v3599 = vadd.f32 %v3598, 0.5
  %v3600 = vmul.f32 %v3594, %v3595
  %v3601 = vtanh.pop %v3600
  %v3602 = vmul.f32 %v3599, %v3601
  %s3603 = scalar_lea.vmem [#allocation3], 48
  %3604 = vst [vmem:[%s3603] sm:$0xff] %v3602
  %s3605 = scalar_lea.vmem [#allocation2], 224
  %v3606 = vld [vmem:[%s3605] sm:$0xff]
  %v3607 = vld [vmem:[%s3605 + $0x8] sm:$0xff]
  %v3608 = vld [vmem:[%s3605 + $0x10] sm:$0xff]
  %v3609 = vld [vmem:[%s3605 + $0x18] sm:$0xff]
  %3610 = vmatpush.msra.mxu0 %v397
  %3611 = vmatpush.msra.mxu0 %v393
  %3612 = vmatpush.msra.mxu0 %v389
  %3613 = vmatpush.msra.mxu0 %v385
  %3614 = vmatpush.msra.mxu0 %v381
  %3615 = vmatpush.msra.mxu0 %v377
  %3616 = vmatpush.msra.mxu0 %v373
  %3617 = vmatpush.msra.mxu0 %v369
  %3618 = vmatpush.msra.mxu0 %v365
  %3619 = vmatpush.msra.mxu0 %v361
  %3620 = vmatpush.msra.mxu0 %v357
  %3621 = vmatpush.msra.mxu0 %v353
  %3622 = vmatpush.msra.mxu0 %v349
  %3623 = vmatpush.msra.mxu0 %v345
  %3624 = vmatpush.msra.mxu0 %v341
  %3625 = vmatpush.msra.mxu0 %v337
  %3626 = vmatmul.f32.gmra.mxu0 %v3285
  %v3627 = vpop.f32.mrf.mxu0
  %v3628 = vadd.f32 0.0, %v3627
  %3629 = vdwg.mxu0
  %3630 = vmatpush.msra.mxu0 %v398
  %3631 = vmatpush.msra.mxu0 %v394
  %3632 = vmatpush.msra.mxu0 %v390
  %3633 = vmatpush.msra.mxu0 %v386
  %3634 = vmatpush.msra.mxu0 %v382
  %3635 = vmatpush.msra.mxu0 %v378
  %3636 = vmatpush.msra.mxu0 %v374
  %3637 = vmatpush.msra.mxu0 %v370
  %3638 = vmatpush.msra.mxu0 %v366
  %3639 = vmatpush.msra.mxu0 %v362
  %3640 = vmatpush.msra.mxu0 %v358
  %3641 = vmatpush.msra.mxu0 %v354
  %3642 = vmatpush.msra.mxu0 %v350
  %3643 = vmatpush.msra.mxu0 %v346
  %3644 = vmatpush.msra.mxu0 %v342
  %3645 = vmatpush.msra.mxu0 %v338
  %3646 = vmatmul.f32.gmra.mxu0 %v3285
  %v3647 = vpop.f32.mrf.mxu0
  %v3648 = vadd.f32 0.0, %v3647
  %3649 = vdwg.mxu0
  %3650 = vmatpush.msra.mxu0 %v399
  %3651 = vmatpush.msra.mxu0 %v395
  %3652 = vmatpush.msra.mxu0 %v391
  %3653 = vmatpush.msra.mxu0 %v387
  %3654 = vmatpush.msra.mxu0 %v383
  %3655 = vmatpush.msra.mxu0 %v379
  %3656 = vmatpush.msra.mxu0 %v375
  %3657 = vmatpush.msra.mxu0 %v371
  %3658 = vmatpush.msra.mxu0 %v367
  %3659 = vmatpush.msra.mxu0 %v363
  %3660 = vmatpush.msra.mxu0 %v359
  %3661 = vmatpush.msra.mxu0 %v355
  %3662 = vmatpush.msra.mxu0 %v351
  %3663 = vmatpush.msra.mxu0 %v347
  %3664 = vmatpush.msra.mxu0 %v343
  %3665 = vmatpush.msra.mxu0 %v339
  %3666 = vmatmul.f32.gmra.mxu0 %v3285
  %v3667 = vpop.f32.mrf.mxu0
  %v3668 = vadd.f32 0.0, %v3667
  %3669 = vdwg.mxu0
  %3670 = vmatpush.msra.mxu0 %v400
  %3671 = vmatpush.msra.mxu0 %v396
  %3672 = vmatpush.msra.mxu0 %v392
  %3673 = vmatpush.msra.mxu0 %v388
  %3674 = vmatpush.msra.mxu0 %v384
  %3675 = vmatpush.msra.mxu0 %v380
  %3676 = vmatpush.msra.mxu0 %v376
  %3677 = vmatpush.msra.mxu0 %v372
  %3678 = vmatpush.msra.mxu0 %v368
  %3679 = vmatpush.msra.mxu0 %v364
  %3680 = vmatpush.msra.mxu0 %v360
  %3681 = vmatpush.msra.mxu0 %v356
  %3682 = vmatpush.msra.mxu0 %v352
  %3683 = vmatpush.msra.mxu0 %v348
  %3684 = vmatpush.msra.mxu0 %v344
  %3685 = vmatpush.msra.mxu0 %v340
  %3686 = vmatmul.f32.gmra.mxu0 %v3285
  %v3687 = vpop.f32.mrf.mxu0
  %v3688 = vadd.f32 0.0, %v3687
  %3689 = vdwg.mxu0
  %v3690 = vadd.f32 %v3606, %v3628
  %v3691 = vadd.f32 %v3607, %v3648
  %v3692 = vadd.f32 %v3608, %v3668
  %v3693 = vadd.f32 %v3609, %v3688
  %v3694 = vmul.f32 %v3690, 0.5
  %v3695 = vtanh.pop %v3694
  %v3696 = vmul.f32 %v3695, 0.5
  %v3697 = vadd.f32 %v3696, 0.5
  %v3698 = vmul.f32 %v3691, 0.5
  %v3699 = vtanh.pop %v3698
  %v3700 = vmul.f32 %v3699, 0.5
  %v3701 = vadd.f32 %v3700, 0.5
  %v3702 = vtanh.pop %v3692
  %v3703 = vmul.f32 %v3693, 0.5
  %v3704 = vtanh.pop %v3703
  %v3705 = vmul.f32 %v3704, 0.5
  %v3706 = vadd.f32 %v3705, 0.5
  %v3707 = vmul.f32 %v3701, %v3283
  %v3708 = vmul.f32 %v3697, %v3702
  %v3709 = vadd.f32 %v3707, %v3708
  %v3710 = vtanh.pop %v3709
  %v3711 = vmul.f32 %v3706, %v3710
  %3712 = vmatpush.msra.mxu0 %v525
  %3713 = vmatpush.msra.mxu0 %v521
  %3714 = vmatpush.msra.mxu0 %v517
  %3715 = vmatpush.msra.mxu0 %v513
  %3716 = vmatpush.msra.mxu0 %v509
  %3717 = vmatpush.msra.mxu0 %v505
  %3718 = vmatpush.msra.mxu0 %v501
  %3719 = vmatpush.msra.mxu0 %v497
  %3720 = vmatpush.msra.mxu0 %v493
  %3721 = vmatpush.msra.mxu0 %v489
  %3722 = vmatpush.msra.mxu0 %v485
  %3723 = vmatpush.msra.mxu0 %v481
  %3724 = vmatpush.msra.mxu0 %v477
  %3725 = vmatpush.msra.mxu0 %v473
  %3726 = vmatpush.msra.mxu0 %v469
  %3727 = vmatpush.msra.mxu0 %v465
  %3728 = vmatmul.f32.gmra.mxu0 %v3467
  %v3729 = vpop.f32.mrf.mxu0
  %v3730 = vadd.f32 0.0, %v3729
  %3731 = vdwg.mxu0
  %3732 = vmatpush.msra.mxu0 %v526
  %3733 = vmatpush.msra.mxu0 %v522
  %3734 = vmatpush.msra.mxu0 %v518
  %3735 = vmatpush.msra.mxu0 %v514
  %3736 = vmatpush.msra.mxu0 %v510
  %3737 = vmatpush.msra.mxu0 %v506
  %3738 = vmatpush.msra.mxu0 %v502
  %3739 = vmatpush.msra.mxu0 %v498
  %3740 = vmatpush.msra.mxu0 %v494
  %3741 = vmatpush.msra.mxu0 %v490
  %3742 = vmatpush.msra.mxu0 %v486
  %3743 = vmatpush.msra.mxu0 %v482
  %3744 = vmatpush.msra.mxu0 %v478
  %3745 = vmatpush.msra.mxu0 %v474
  %3746 = vmatpush.msra.mxu0 %v470
  %3747 = vmatpush.msra.mxu0 %v466
  %3748 = vmatmul.f32.gmra.mxu0 %v3467
  %v3749 = vpop.f32.mrf.mxu0
  %v3750 = vadd.f32 0.0, %v3749
  %3751 = vdwg.mxu0
  %3752 = vmatpush.msra.mxu0 %v527
  %3753 = vmatpush.msra.mxu0 %v523
  %3754 = vmatpush.msra.mxu0 %v519
  %3755 = vmatpush.msra.mxu0 %v515
  %3756 = vmatpush.msra.mxu0 %v511
  %3757 = vmatpush.msra.mxu0 %v507
  %3758 = vmatpush.msra.mxu0 %v503
  %3759 = vmatpush.msra.mxu0 %v499
  %3760 = vmatpush.msra.mxu0 %v495
  %3761 = vmatpush.msra.mxu0 %v491
  %3762 = vmatpush.msra.mxu0 %v487
  %3763 = vmatpush.msra.mxu0 %v483
  %3764 = vmatpush.msra.mxu0 %v479
  %3765 = vmatpush.msra.mxu0 %v475
  %3766 = vmatpush.msra.mxu0 %v471
  %3767 = vmatpush.msra.mxu0 %v467
  %3768 = vmatmul.f32.gmra.mxu0 %v3467
  %v3769 = vpop.f32.mrf.mxu0
  %v3770 = vadd.f32 0.0, %v3769
  %3771 = vdwg.mxu0
  %3772 = vmatpush.msra.mxu0 %v528
  %3773 = vmatpush.msra.mxu0 %v524
  %3774 = vmatpush.msra.mxu0 %v520
  %3775 = vmatpush.msra.mxu0 %v516
  %3776 = vmatpush.msra.mxu0 %v512
  %3777 = vmatpush.msra.mxu0 %v508
  %3778 = vmatpush.msra.mxu0 %v504
  %3779 = vmatpush.msra.mxu0 %v500
  %3780 = vmatpush.msra.mxu0 %v496
  %3781 = vmatpush.msra.mxu0 %v492
  %3782 = vmatpush.msra.mxu0 %v488
  %3783 = vmatpush.msra.mxu0 %v484
  %3784 = vmatpush.msra.mxu0 %v480
  %3785 = vmatpush.msra.mxu0 %v476
  %3786 = vmatpush.msra.mxu0 %v472
  %3787 = vmatpush.msra.mxu0 %v468
  %3788 = vmatmul.f32.gmra.mxu0 %v3467
  %v3789 = vpop.f32.mrf.mxu0
  %v3790 = vadd.f32 0.0, %v3789
  %3791 = vdwg.mxu0
  %3792 = vmatpush.msra.mxu0 %v461
  %3793 = vmatpush.msra.mxu0 %v457
  %3794 = vmatpush.msra.mxu0 %v453
  %3795 = vmatpush.msra.mxu0 %v449
  %3796 = vmatpush.msra.mxu0 %v445
  %3797 = vmatpush.msra.mxu0 %v441
  %3798 = vmatpush.msra.mxu0 %v437
  %3799 = vmatpush.msra.mxu0 %v433
  %3800 = vmatpush.msra.mxu0 %v429
  %3801 = vmatpush.msra.mxu0 %v425
  %3802 = vmatpush.msra.mxu0 %v421
  %3803 = vmatpush.msra.mxu0 %v417
  %3804 = vmatpush.msra.mxu0 %v413
  %3805 = vmatpush.msra.mxu0 %v409
  %3806 = vmatpush.msra.mxu0 %v405
  %3807 = vmatpush.msra.mxu0 %v401
  %3808 = vmatmul.f32.gmra.mxu0 %v3711
  %v3809 = vpop.f32.mrf.mxu0
  %v3810 = vadd.f32 %v3730, %v3809
  %3811 = vdwg.mxu0
  %3812 = vmatpush.msra.mxu0 %v462
  %3813 = vmatpush.msra.mxu0 %v458
  %3814 = vmatpush.msra.mxu0 %v454
  %3815 = vmatpush.msra.mxu0 %v450
  %3816 = vmatpush.msra.mxu0 %v446
  %3817 = vmatpush.msra.mxu0 %v442
  %3818 = vmatpush.msra.mxu0 %v438
  %3819 = vmatpush.msra.mxu0 %v434
  %3820 = vmatpush.msra.mxu0 %v430
  %3821 = vmatpush.msra.mxu0 %v426
  %3822 = vmatpush.msra.mxu0 %v422
  %3823 = vmatpush.msra.mxu0 %v418
  %3824 = vmatpush.msra.mxu0 %v414
  %3825 = vmatpush.msra.mxu0 %v410
  %3826 = vmatpush.msra.mxu0 %v406
  %3827 = vmatpush.msra.mxu0 %v402
  %3828 = vmatmul.f32.gmra.mxu0 %v3711
  %v3829 = vpop.f32.mrf.mxu0
  %v3830 = vadd.f32 %v3750, %v3829
  %3831 = vdwg.mxu0
  %3832 = vmatpush.msra.mxu0 %v463
  %3833 = vmatpush.msra.mxu0 %v459
  %3834 = vmatpush.msra.mxu0 %v455
  %3835 = vmatpush.msra.mxu0 %v451
  %3836 = vmatpush.msra.mxu0 %v447
  %3837 = vmatpush.msra.mxu0 %v443
  %3838 = vmatpush.msra.mxu0 %v439
  %3839 = vmatpush.msra.mxu0 %v435
  %3840 = vmatpush.msra.mxu0 %v431
  %3841 = vmatpush.msra.mxu0 %v427
  %3842 = vmatpush.msra.mxu0 %v423
  %3843 = vmatpush.msra.mxu0 %v419
  %3844 = vmatpush.msra.mxu0 %v415
  %3845 = vmatpush.msra.mxu0 %v411
  %3846 = vmatpush.msra.mxu0 %v407
  %3847 = vmatpush.msra.mxu0 %v403
  %3848 = vmatmul.f32.gmra.mxu0 %v3711
  %v3849 = vpop.f32.mrf.mxu0
  %v3850 = vadd.f32 %v3770, %v3849
  %3851 = vdwg.mxu0
  %3852 = vmatpush.msra.mxu0 %v464
  %3853 = vmatpush.msra.mxu0 %v460
  %3854 = vmatpush.msra.mxu0 %v456
  %3855 = vmatpush.msra.mxu0 %v452
  %3856 = vmatpush.msra.mxu0 %v448
  %3857 = vmatpush.msra.mxu0 %v444
  %3858 = vmatpush.msra.mxu0 %v440
  %3859 = vmatpush.msra.mxu0 %v436
  %3860 = vmatpush.msra.mxu0 %v432
  %3861 = vmatpush.msra.mxu0 %v428
  %3862 = vmatpush.msra.mxu0 %v424
  %3863 = vmatpush.msra.mxu0 %v420
  %3864 = vmatpush.msra.mxu0 %v416
  %3865 = vmatpush.msra.mxu0 %v412
  %3866 = vmatpush.msra.mxu0 %v408
  %3867 = vmatpush.msra.mxu0 %v404
  %3868 = vmatmul.f32.gmra.mxu0 %v3711
  %v3869 = vpop.f32.mrf.mxu0
  %v3870 = vadd.f32 %v3790, %v3869
  %3871 = vdwg.mxu0
  %v3872 = vadd.f32 %v3810, %v321
  %v3873 = vadd.f32 %v3830, %v322
  %v3874 = vadd.f32 %v3850, %v323
  %v3875 = vadd.f32 %v3870, %v324
  %v3876 = vmul.f32 %v3872, 0.5
  %v3877 = vtanh.pop %v3876
  %v3878 = vmul.f32 %v3877, 0.5
  %v3879 = vadd.f32 %v3878, 0.5
  %v3880 = vmul.f32 %v3873, 0.5
  %v3881 = vtanh.pop %v3880
  %v3882 = vmul.f32 %v3881, 0.5
  %v3883 = vadd.f32 %v3882, 0.5
  %v3884 = vtanh.pop %v3874
  %v3885 = vmul.f32 %v3875, 0.5
  %v3886 = vtanh.pop %v3885
  %v3887 = vmul.f32 %v3886, 0.5
  %v3888 = vadd.f32 %v3887, 0.5
  %v3889 = vmul.f32 %v3883, %v3600
  %v3890 = vmul.f32 %v3879, %v3884
  %v3891 = vadd.f32 %v3889, %v3890
  %v3892 = vtanh.pop %v3891
  %v3893 = vmul.f32 %v3888, %v3892
  %3894 = vmatpush.msra.mxu0 %v622
  %3895 = vmatpush.msra.mxu0 %v619
  %3896 = vmatpush.msra.mxu0 %v616
  %3897 = vmatpush.msra.mxu0 %v613
  %3898 = vmatpush.msra.mxu0 %v610
  %3899 = vmatpush.msra.mxu0 %v607
  %3900 = vmatpush.msra.mxu0 %v604
  %3901 = vmatpush.msra.mxu0 %v601
  %3902 = vmatpush.msra.mxu0 %v598
  %3903 = vmatpush.msra.mxu0 %v595
  %3904 = vmatpush.msra.mxu0 %v592
  %3905 = vmatpush.msra.mxu0 %v589
  %3906 = vmatpush.msra.mxu0 %v586
  %3907 = vmatpush.msra.mxu0 %v583
  %3908 = vmatpush.msra.mxu0 %v580
  %3909 = vmatpush.msra.mxu0 %v577
  %3910 = vmatmul.f32.gmra.mxu0 %v3602
  %v3911 = vpop.f32.mrf.mxu0
  %v3912 = vadd.f32 0.0, %v3911
  %3913 = vdwg.mxu0
  %3914 = vmatpush.msra.mxu0 %v623
  %3915 = vmatpush.msra.mxu0 %v620
  %3916 = vmatpush.msra.mxu0 %v617
  %3917 = vmatpush.msra.mxu0 %v614
  %3918 = vmatpush.msra.mxu0 %v611
  %3919 = vmatpush.msra.mxu0 %v608
  %3920 = vmatpush.msra.mxu0 %v605
  %3921 = vmatpush.msra.mxu0 %v602
  %3922 = vmatpush.msra.mxu0 %v599
  %3923 = vmatpush.msra.mxu0 %v596
  %3924 = vmatpush.msra.mxu0 %v593
  %3925 = vmatpush.msra.mxu0 %v590
  %3926 = vmatpush.msra.mxu0 %v587
  %3927 = vmatpush.msra.mxu0 %v584
  %3928 = vmatpush.msra.mxu0 %v581
  %3929 = vmatpush.msra.mxu0 %v578
  %3930 = vmatmul.f32.gmra.mxu0 %v3602
  %v3931 = vpop.f32.mrf.mxu0
  %v3932 = vadd.f32 0.0, %v3931
  %3933 = vdwg.mxu0
  %3934 = vmatpush.msra.mxu0 %v624
  %3935 = vmatpush.msra.mxu0 %v621
  %3936 = vmatpush.msra.mxu0 %v618
  %3937 = vmatpush.msra.mxu0 %v615
  %3938 = vmatpush.msra.mxu0 %v612
  %3939 = vmatpush.msra.mxu0 %v609
  %3940 = vmatpush.msra.mxu0 %v606
  %3941 = vmatpush.msra.mxu0 %v603
  %3942 = vmatpush.msra.mxu0 %v600
  %3943 = vmatpush.msra.mxu0 %v597
  %3944 = vmatpush.msra.mxu0 %v594
  %3945 = vmatpush.msra.mxu0 %v591
  %3946 = vmatpush.msra.mxu0 %v588
  %3947 = vmatpush.msra.mxu0 %v585
  %3948 = vmatpush.msra.mxu0 %v582
  %3949 = vmatpush.msra.mxu0 %v579
  %3950 = vmatmul.f32.gmra.mxu0 %v3602
  %v3951 = vpop.f32.mrf.mxu0
  %v3952 = vadd.f32 0.0, %v3951
  %3953 = vdwg.mxu0
  %3954 = vmatpush.msra.mxu0 %v574
  %3955 = vmatpush.msra.mxu0 %v571
  %3956 = vmatpush.msra.mxu0 %v568
  %3957 = vmatpush.msra.mxu0 %v565
  %3958 = vmatpush.msra.mxu0 %v562
  %3959 = vmatpush.msra.mxu0 %v559
  %3960 = vmatpush.msra.mxu0 %v556
  %3961 = vmatpush.msra.mxu0 %v553
  %3962 = vmatpush.msra.mxu0 %v550
  %3963 = vmatpush.msra.mxu0 %v547
  %3964 = vmatpush.msra.mxu0 %v544
  %3965 = vmatpush.msra.mxu0 %v541
  %3966 = vmatpush.msra.mxu0 %v538
  %3967 = vmatpush.msra.mxu0 %v535
  %3968 = vmatpush.msra.mxu0 %v532
  %3969 = vmatpush.msra.mxu0 %v529
  %3970 = vmatmul.f32.gmra.mxu0 %v3893
  %v3971 = vpop.f32.mrf.mxu0
  %v3972 = vadd.f32 %v3912, %v3971
  %3973 = vdwg.mxu0
  %3974 = vmatpush.msra.mxu0 %v575
  %3975 = vmatpush.msra.mxu0 %v572
  %3976 = vmatpush.msra.mxu0 %v569
  %3977 = vmatpush.msra.mxu0 %v566
  %3978 = vmatpush.msra.mxu0 %v563
  %3979 = vmatpush.msra.mxu0 %v560
  %3980 = vmatpush.msra.mxu0 %v557
  %3981 = vmatpush.msra.mxu0 %v554
  %3982 = vmatpush.msra.mxu0 %v551
  %3983 = vmatpush.msra.mxu0 %v548
  %3984 = vmatpush.msra.mxu0 %v545
  %3985 = vmatpush.msra.mxu0 %v542
  %3986 = vmatpush.msra.mxu0 %v539
  %3987 = vmatpush.msra.mxu0 %v536
  %3988 = vmatpush.msra.mxu0 %v533
  %3989 = vmatpush.msra.mxu0 %v530
  %3990 = vmatmul.f32.gmra.mxu0 %v3893
  %v3991 = vpop.f32.mrf.mxu0
  %v3992 = vadd.f32 %v3932, %v3991
  %3993 = vdwg.mxu0
  %3994 = vmatpush.msra.mxu0 %v576
  %3995 = vmatpush.msra.mxu0 %v573
  %3996 = vmatpush.msra.mxu0 %v570
  %3997 = vmatpush.msra.mxu0 %v567
  %3998 = vmatpush.msra.mxu0 %v564
  %3999 = vmatpush.msra.mxu0 %v561
  %4000 = vmatpush.msra.mxu0 %v558
  %4001 = vmatpush.msra.mxu0 %v555
  %4002 = vmatpush.msra.mxu0 %v552
  %4003 = vmatpush.msra.mxu0 %v549
  %4004 = vmatpush.msra.mxu0 %v546
  %4005 = vmatpush.msra.mxu0 %v543
  %4006 = vmatpush.msra.mxu0 %v540
  %4007 = vmatpush.msra.mxu0 %v537
  %4008 = vmatpush.msra.mxu0 %v534
  %4009 = vmatpush.msra.mxu0 %v531
  %4010 = vmatmul.f32.gmra.mxu0 %v3893
  %v4011 = vpop.f32.mrf.mxu0
  %v4012 = vadd.f32 %v3952, %v4011
  %4013 = vdwg.mxu0
  %v4014 = vadd.f32 %v3972, %v331
  %v4015 = vadd.f32 %v3992, %v332
  %v4016 = vadd.f32 %v4012, %v333
  %v4017 = vmul.f32 %v4014, 0.5
  %v4018 = vtanh.pop %v4017
  %v4019 = vmul.f32 %v4018, 0.5
  %v4020 = vadd.f32 %v4019, 0.5
  %v4021 = vtanh.pop %v4015
  %v4022 = vmul.f32 %v4016, 0.5
  %v4023 = vtanh.pop %v4022
  %v4024 = vmul.f32 %v4023, 0.5
  %v4025 = vadd.f32 %v4024, 0.5
  %v4026 = vmul.f32 %v4020, %v4021
  %v4027 = vtanh.pop %v4026
  %v4028 = vmul.f32 %v4025, %v4027
  %s4029 = scalar_lea.vmem [#allocation3], 56
  %4030 = vst [vmem:[%s4029] sm:$0xff] %v4028
  %v4031 = vld [vmem:[#allocation3] sm:$0xff]
  %v4032 = vld [vmem:[#allocation3 + $0x8] sm:$0xff]
  %v4033 = vld [vmem:[#allocation3 + $0x10] sm:$0xff]
  %v4034 = vld [vmem:[#allocation3 + $0x18] sm:$0xff]
  %v4035 = vld [vmem:[#allocation3 + $0x20] sm:$0xff]
  %v4036 = vld [vmem:[#allocation3 + $0x28] sm:$0xff]
  %v4037 = vld [vmem:[#allocation3 + $0x30] sm:$0xff]
  %v4038 = vld [vmem:[#allocation3 + $0x38] sm:$0xff]
  %v4039 = vld [vmem:[%s10] sm:$0xff]
  %v4040 = vld [vmem:[%s10 + $0x8] sm:$0xff]
  %v4041 = vld [vmem:[%s10 + $0x10] sm:$0xff]
  %v4042 = vld [vmem:[%s10 + $0x18] sm:$0xff]
  %v4043 = vld [vmem:[%s10 + $0x20] sm:$0xff]
  %v4044 = vld [vmem:[%s10 + $0x28] sm:$0xff]
  %v4045 = vld [vmem:[%s10 + $0x30] sm:$0xff]
  %v4046 = vld [vmem:[%s10 + $0x38] sm:$0xff]
  %v4047 = vld [vmem:[%s10 + $0x40] sm:$0xff]
  %v4048 = vld [vmem:[%s10 + $0x48] sm:$0xff]
  %v4049 = vld [vmem:[%s10 + $0x50] sm:$0xff]
  %v4050 = vld [vmem:[%s10 + $0x58] sm:$0xff]
  %v4051 = vld [vmem:[%s10 + $0x60] sm:$0xff]
  %v4052 = vld [vmem:[%s10 + $0x68] sm:$0xff]
  %v4053 = vld [vmem:[%s10 + $0x70] sm:$0xff]
  %v4054 = vld [vmem:[%s10 + $0x78] sm:$0xff]
  %v4055 = vld [vmem:[%s11] sm:$0x1]
  %v4057 = vperm.slane %v4055, 0
  %4059 = vmatpush.msra.mxu0 %v4054
  %4060 = vmatpush.msra.mxu0 %v4053
  %4061 = vmatpush.msra.mxu0 %v4052
  %4062 = vmatpush.msra.mxu0 %v4051
  %4063 = vmatpush.msra.mxu0 %v4050
  %4064 = vmatpush.msra.mxu0 %v4049
  %4065 = vmatpush.msra.mxu0 %v4048
  %4066 = vmatpush.msra.mxu0 %v4047
  %4067 = vmatpush.msra.mxu0 %v4046
  %4068 = vmatpush.msra.mxu0 %v4045
  %4069 = vmatpush.msra.mxu0 %v4044
  %4070 = vmatpush.msra.mxu0 %v4043
  %4071 = vmatpush.msra.mxu0 %v4042
  %4072 = vmatpush.msra.mxu0 %v4041
  %4073 = vmatpush.msra.mxu0 %v4040
  %4074 = vmatpush.msra.mxu0 %v4039
  %4075 = vmatmul.f32.gmra.mxu0 %v4031
  %v4076 = vpop.f32.mrf.mxu0
  %v4077 = vadd.f32 %v4057, %v4076
  %4078 = vmatmul.f32.gmra.mxu0 %v4032
  %v4079 = vpop.f32.mrf.mxu0
  %v4080 = vadd.f32 %v4057, %v4079
  %4081 = vmatmul.f32.gmra.mxu0 %v4033
  %v4082 = vpop.f32.mrf.mxu0
  %v4083 = vadd.f32 %v4057, %v4082
  %4084 = vmatmul.f32.gmra.mxu0 %v4034
  %v4085 = vpop.f32.mrf.mxu0
  %v4086 = vadd.f32 %v4057, %v4085
  %4087 = vmatmul.f32.gmra.mxu0 %v4035
  %v4088 = vpop.f32.mrf.mxu0
  %v4089 = vadd.f32 %v4057, %v4088
  %4090 = vmatmul.f32.gmra.mxu0 %v4036
  %v4091 = vpop.f32.mrf.mxu0
  %v4092 = vadd.f32 %v4057, %v4091
  %4093 = vmatmul.f32.gmra.mxu0 %v4037
  %v4094 = vpop.f32.mrf.mxu0
  %v4095 = vadd.f32 %v4057, %v4094
  %4096 = vmatmul.f32.gmra.mxu0 %v4038
  %v4097 = vpop.f32.mrf.mxu0
  %v4098 = vadd.f32 %v4057, %v4097
  %4099 = vdwg.mxu0
  %4100 = vst [vmem:[%s12] sm:$0xff] %v4077
  %4101 = vst [vmem:[%s12 + $0x8] sm:$0xff] %v4080
  %4102 = vst [vmem:[%s12 + $0x10] sm:$0xff] %v4083
  %4103 = vst [vmem:[%s12 + $0x18] sm:$0xff] %v4086
  %4104 = vst [vmem:[%s12 + $0x20] sm:$0xff] %v4089
  %4105 = vst [vmem:[%s12 + $0x28] sm:$0xff] %v4092
  %4106 = vst [vmem:[%s12 + $0x30] sm:$0xff] %v4095
  %4107 = vst [vmem:[%s12 + $0x38] sm:$0xff] %v4098
  // Predicated region
  $region50: #{net_forward.1} parent=0 // pred_check
    _
  $region51: #{net_forward.1} parent=0 // pred_check_branch
    %4109 = sbr.rel (0) target = $region53
  $region52: #{net_forward.1} parent=0 // pred_region
    _
  $region53: #{net_forward.1} parent=0 // pred_fallthru
    _
  // Predicated region
  $region54: #{net_forward.1} parent=0 // pred_check
    _
  $region55: #{net_forward.1} parent=0 // pred_check_branch
    %4111 = sbr.rel (0) target = $region57
  $region56: #{net_forward.1} parent=0 // pred_region
    _
  $region57: #{net_forward.1} parent=0 // pred_fallthru
    _

</llo_original>
